<compile_context>
chip_gen: v5e
topology: v5e:2x2
jax: 0.10.0
libtpu: 0.0.40
codegen_flags: <defaults>
</compile_context>

<pallas_src>
import functools
import math

import jax
import jax.numpy as jnp
from jax import lax
from jax.experimental import pallas as pl
from jax.experimental.pallas import tpu as pltpu


def _rga_kernel(x_ref, w_ref, b_ref, er_ref, o_ref, *, num_heads):
    # x_ref:  (1, L, D)   one batch row
    # w_ref:  (D, 3D)     fused [Wq^T | Wk^T | Wv^T]  (resident across grid)
    # b_ref:  (1, 3D)     fused [bq | bk | bv]
    # er_ref: (L, dh)     Er[max_len-L:], pre-rolled by +1 along rows (wrapper)
    # o_ref:  (1, L, D)   output directly in (B, L, D) layout
    x = x_ref[0]                                        # (L, D)
    L, D = x.shape
    dh = D // num_heads
    cdt = x.dtype                                       # MXU operand dtype
    scale = 1.0 / math.sqrt(dh)

    # Fused QKV projection: one wide matmul, f32 accumulation.
    qkv = jnp.dot(x, w_ref[...], preferred_element_type=jnp.float32) + b_ref[...]

    er = er_ref[...].astype(cdt)                        # (L, dh)

    row = lax.broadcasted_iota(jnp.int32, (L, L), 0)
    col = lax.broadcasted_iota(jnp.int32, (L, L), 1)
    causal = col <= row

    outs = []
    for h in range(num_heads):                          # static, small unroll
        q = (qkv[:, h * dh:(h + 1) * dh] * scale).astype(cdt)        # (L, dh)
        k = qkv[:, D + h * dh:D + (h + 1) * dh].astype(cdt)          # (L, dh)
        v = qkv[:, 2 * D + h * dh:2 * D + (h + 1) * dh].astype(cdt)  # (L, dh)

        # Stack [K ; Er]: QK^T and Q·Er^T in one (L, dh) x (2L, dh)^T matmul.
        kr = jnp.concatenate([k, er], axis=0)           # (2L, dh)
        s = lax.dot_general(q, kr, (((1,), (1,)), ((), ())),
                            preferred_element_type=jnp.float32)      # (L, 2L)
        qk = s[:, :L]
        qer = s[:, L:]

        # Skew: Srel[i, j] = q_i . Er_slice[L-1+j-i] (only j <= i survives the
        # mask).  With Er pre-rolled by +1 row, this is a per-row lane rotate
        # by exactly i (amounts 0..L-1), done on the otherwise-idle XLU.
        srel = pltpu.roll(qer, shift=0, axis=1, stride=1, stride_axis=0)

        attn = jnp.where(causal, qk + srel, -jnp.inf)
        attn = attn - jnp.max(attn, axis=-1, keepdims=True)
        p = jnp.exp(attn)
        denom = jnp.sum(p, axis=-1, keepdims=True)
        inv = pl.reciprocal(denom, approx=True)         # EUP slot
        inv = inv * (2.0 - denom * inv)                 # one Newton step -> f32 accuracy
        p = p * inv

        outs.append(jnp.dot(p.astype(cdt), v, preferred_element_type=jnp.float32))

    # Single lane-dense store, already in (B, L, D) layout.
    o_ref[0] = jnp.concatenate(outs, axis=-1).astype(o_ref.dtype)


def prepare_params(params, *, max_len, seq_len):
    """One-time layout prep (hoisted out of the per-forward path).

    torch Linear: y = x @ W.T + b with W of shape (D_out, D_in); head h owns
    output features [h*dh, (h+1)*dh).  Fused weight is (D, 3D) = [Wq^T|Wk^T|Wv^T].
    The Er slice is rolled by +1 row so the in-kernel skew becomes a single
    strided lane-rotate with all per-row amounts in [0, L).
    """
    assert seq_len <= max_len
    D = params["Wq"].shape[0]
    w_qkv = jnp.concatenate(
        [params["Wq"].T, params["Wk"].T, params["Wv"].T], axis=1)          # (D, 3D)
    b_qkv = jnp.concatenate(
        [params["bq"], params["bk"], params["bv"]]).reshape(1, 3 * D)      # (1, 3D)
    er_skew = jnp.roll(params["Er"][max_len - seq_len:, :], shift=1, axis=0)  # (L, dh)
    return w_qkv, b_qkv, er_skew


def relative_global_attention(x, w_qkv, b_qkv, er_skew, *, num_heads):
    """Forward pass matching the PyTorch module (dropout is identity at eval)."""
    B, L, D = x.shape
    dh = D // num_heads
    assert dh * num_heads == D
    assert w_qkv.shape == (D, 3 * D)
    assert er_skew.shape == (L, dh)

    kernel = functools.partial(_rga_kernel, num_heads=num_heads)

    out = pl.pallas_call(
        kernel,
        out_shape=jax.ShapeDtypeStruct((B, L, D), x.dtype),
        grid_spec=pltpu.PrefetchScalarGridSpec(
            num_scalar_prefetch=0,
            grid=(B,),
            in_specs=[
                pl.BlockSpec((1, L, D), lambda b: (b, 0, 0)),      # x row
                pl.BlockSpec((D, 3 * D), lambda b: (0, 0)),        # fused W (resident)
                pl.BlockSpec((1, 3 * D), lambda b: (0, 0)),        # fused bias
                pl.BlockSpec((L, dh), lambda b: (0, 0)),           # Er slice (pre-rolled)
            ],
            out_specs=pl.BlockSpec((1, L, D), lambda b: (b, 0, 0)),
        ),
        compiler_params=pltpu.CompilerParams(
            dimension_semantics=("parallel",)),
    )(x, w_qkv, b_qkv, er_skew)
    # TODO(synk): nn.Dropout(0.1) is identity at inference; not applied here.
    return out


def reference_forward(x, params, *, num_heads, max_len):
    """Pure-JAX mirror of the PyTorch forward (incl. the exact pad/reshape skew)."""
    B, L, D = x.shape
    dh = D // num_heads
    Wq, bq = params["Wq"], params["bq"]
    Wk, bk = params["Wk"], params["bk"]
    Wv, bv = params["Wv"], params["bv"]
    Er = params["Er"]

    k_t = (x @ Wk.T + bk).reshape(B, L, num_heads, dh).transpose(0, 2, 3, 1)
    v = (x @ Wv.T + bv).reshape(B, L, num_heads, dh).transpose(0, 2, 1, 3)
    q = (x @ Wq.T + bq).reshape(B, L, num_heads, dh).transpose(0, 2, 1, 3)

    Er_t = Er[max_len - L:, :].T                       # (dh, L)
    QEr = q @ Er_t                                     # (B, H, L, L)
    padded = jnp.pad(QEr, ((0, 0), (0, 0), (0, 0), (1, 0)))
    Srel = padded.reshape(B, num_heads, L + 1, L)[:, :, 1:, :]

    attn = (q @ k_t + Srel) / math.sqrt(dh)
    mask = jnp.tril(jnp.ones((L, L), x.dtype))[None, None]
    attn = jnp.where(mask == 0, -jnp.inf, attn)
    attn = jax.nn.softmax(attn, axis=-1)
    out = attn @ v
    return out.transpose(0, 2, 1, 3).reshape(B, L, D)


if __name__ == "__main__":
    B, L, d_model, num_heads, max_len = 2, 128, 128, 4, 256
    dh = d_model // num_heads

    key = jax.random.PRNGKey(0)
    ks = jax.random.split(key, 8)
    params = {
        "Wq": 0.1 * jax.random.normal(ks[0], (d_model, d_model), jnp.float32),
        "bq": 0.1 * jax.random.normal(ks[1], (d_model,), jnp.float32),
        "Wk": 0.1 * jax.random.normal(ks[2], (d_model, d_model), jnp.float32),
        "bk": 0.1 * jax.random.normal(ks[3], (d_model,), jnp.float32),
        "Wv": 0.1 * jax.random.normal(ks[4], (d_model, d_model), jnp.float32),
        "bv": 0.1 * jax.random.normal(ks[5], (d_model,), jnp.float32),
        "Er": jax.random.normal(ks[6], (max_len, dh), jnp.float32),
    }
    x = jax.random.normal(ks[7], (B, L, d_model), jnp.float32)

    # One-time layout prep (kept out of the per-call path).
    w_qkv, b_qkv, er_skew = prepare_params(params, max_len=max_len, seq_len=L)

    out = relative_global_attention(x, w_qkv, b_qkv, er_skew, num_heads=num_heads)
    out = jax.block_until_ready(out)

    ref = reference_forward(x, params, num_heads=num_heads, max_len=max_len)
    assert out.shape == (B, L, d_model)
    err = float(jnp.max(jnp.abs(out - ref)))
    # Tolerance covers the EUP approx-reciprocal (+Newton refinement) softmax
    # normalization and the folded 1/sqrt(dh) scaling order.
    assert jnp.allclose(out, ref, rtol=1e-3, atol=1e-3), f"max abs err {err}"

    print("KERNEL_OK")
</pallas_src>

<mosaic_0001>
module attributes {stable_mosaic.version = 11 : i64} {
  func.func @_rga_kernel(%arg0: i32, %arg1: memref<1x128x128xf32, #tpu.memory_space<vmem>>, %arg2: memref<128x384xf32, #tpu.memory_space<vmem>>, %arg3: memref<1x384xf32, #tpu.memory_space<vmem>>, %arg4: memref<128x32xf32, #tpu.memory_space<vmem>>, %arg5: memref<1x128x128xf32, #tpu.memory_space<vmem>>) attributes {dimension_semantics = [#tpu.dimension_semantics<parallel>], iteration_bounds = array<i64: 2>, scalar_prefetch = 0 : i64, scratch_operands = 0 : i64, tpu.core_type = #tpu.core_type<tc>, window_params = [{transform_indices = @transform_0, window_bounds = array<i64: 1, 128, 128>}, {pipeline_mode = #tpu.pipeline_mode<synchronous>, transform_indices = @transform_1, window_bounds = array<i64: 128, 384>}, {pipeline_mode = #tpu.pipeline_mode<synchronous>, transform_indices = @transform_2, window_bounds = array<i64: 1, 384>}, {pipeline_mode = #tpu.pipeline_mode<synchronous>, transform_indices = @transform_3, window_bounds = array<i64: 128, 32>}, {transform_indices = @transform_4, window_bounds = array<i64: 1, 128, 128>}]} {
    %c0 = arith.constant 0 : index
    %c0_0 = arith.constant 0 : index
    %c0_1 = arith.constant 0 : index
    %0 = vector.load %arg1[%c0, %c0_0, %c0_1] : memref<1x128x128xf32, #tpu.memory_space<vmem>>, vector<1x128x128xf32>
    %1 = vector.shape_cast %0 : vector<1x128x128xf32> to vector<128x128xf32>
    %c0_2 = arith.constant 0 : index
    %c0_3 = arith.constant 0 : index
    %2 = vector.load %arg2[%c0_2, %c0_3] : memref<128x384xf32, #tpu.memory_space<vmem>>, vector<128x384xf32>
    %cst = arith.constant dense<0.000000e+00> : vector<128x384xf32>
    %3 = tpu.matmul %1, %2, %cst {dimension_numbers = #tpu.dot_dimension_numbers<[1], [0], [0], [1], [0, 0, 1, 1], [], []>} : vector<128x128xf32>, vector<128x384xf32>, vector<128x384xf32> -> vector<128x384xf32>
    %c0_4 = arith.constant 0 : index
    %c0_5 = arith.constant 0 : index
    %4 = vector.load %arg3[%c0_4, %c0_5] : memref<1x384xf32, #tpu.memory_space<vmem>>, vector<1x384xf32>
    %5 = vector.broadcast %4 : vector<1x384xf32> to vector<128x384xf32>
    %6 = arith.addf %3, %5 : vector<128x384xf32>
    %c0_6 = arith.constant 0 : index
    %c0_7 = arith.constant 0 : index
    %7 = vector.load %arg4[%c0_6, %c0_7] : memref<128x32xf32, #tpu.memory_space<vmem>>, vector<128x32xf32>
    %8 = tpu.iota {dimensions = array<i32: 0>} : vector<128x128xi32>
    %9 = tpu.iota {dimensions = array<i32: 1>} : vector<128x128xi32>
    %10 = arith.cmpi sle, %9, %8 : vector<128x128xi32>
    %11 = vector.extract_strided_slice %6 {offsets = [0, 0], sizes = [128, 32], strides = [1, 1]} : vector<128x384xf32> to vector<128x32xf32>
    %cst_8 = arith.constant 0.176776692 : f32
    %12 = vector.broadcast %cst_8 : f32 to vector<128x32xf32>
    %13 = arith.mulf %11, %12 : vector<128x32xf32>
    %14 = vector.extract_strided_slice %6 {offsets = [0, 128], sizes = [128, 32], strides = [1, 1]} : vector<128x384xf32> to vector<128x32xf32>
    %15 = vector.extract_strided_slice %6 {offsets = [0, 256], sizes = [128, 32], strides = [1, 1]} : vector<128x384xf32> to vector<128x32xf32>
    %16 = tpu.concatenate %14, %7 in 0 : vector<128x32xf32>, vector<128x32xf32> -> vector<256x32xf32>
    %cst_9 = arith.constant dense<0.000000e+00> : vector<128x256xf32>
    %17 = tpu.matmul %13, %16, %cst_9 {dimension_numbers = #tpu.dot_dimension_numbers<[1], [1], [0], [0], [0, 0, 1, 0], [], []>} : vector<128x32xf32>, vector<256x32xf32>, vector<128x256xf32> -> vector<128x256xf32>
    %18 = vector.extract_strided_slice %17 {offsets = [0, 0], sizes = [128, 128], strides = [1, 1]} : vector<128x256xf32> to vector<128x128xf32>
    %19 = vector.extract_strided_slice %17 {offsets = [0, 128], sizes = [128, 128], strides = [1, 1]} : vector<128x256xf32> to vector<128x128xf32>
    %c0_i32 = arith.constant 0 : i32
    %20 = tpu.dynamic_rotate %19 by %c0_i32 dim 1 {stride = 1 : si32, stride_dimension = 0 : si32} : vector<128x128xf32>, i32 -> vector<128x128xf32>
    %21 = arith.addf %18, %20 : vector<128x128xf32>
    %cst_10 = arith.constant 0xFF800000 : f32
    %22 = vector.broadcast %cst_10 : f32 to vector<128x128xf32>
    %23 = arith.select %10, %21, %22 : vector<128x128xi1>, vector<128x128xf32>
    %cst_11 = arith.constant dense<0xFF800000> : vector<128xf32>
    %24 = vector.multi_reduction <maximumf>, %23, %cst_11 [1] : vector<128x128xf32> to vector<128xf32>
    %25 = vector.shape_cast %24 : vector<128xf32> to vector<128x1xf32>
    %26 = vector.broadcast %25 : vector<128x1xf32> to vector<128x128xf32>
    %27 = arith.subf %23, %26 : vector<128x128xf32>
    %28 = math.exp %27 : vector<128x128xf32>
    %cst_12 = arith.constant dense<0.000000e+00> : vector<128xf32>
    %29 = vector.multi_reduction <add>, %28, %cst_12 [1] : vector<128x128xf32> to vector<128xf32>
    %30 = vector.shape_cast %29 : vector<128xf32> to vector<128x1xf32>
    %31 = tpu.reciprocal %30 {approx = true} : vector<128x1xf32> -> vector<128x1xf32>
    %32 = arith.mulf %30, %31 : vector<128x1xf32>
    %cst_13 = arith.constant 2.000000e+00 : f32
    %33 = vector.broadcast %cst_13 : f32 to vector<128x1xf32>
    %34 = arith.subf %33, %32 : vector<128x1xf32>
    %35 = arith.mulf %31, %34 : vector<128x1xf32>
    %36 = vector.broadcast %35 : vector<128x1xf32> to vector<128x128xf32>
    %37 = arith.mulf %28, %36 : vector<128x128xf32>
    %cst_14 = arith.constant dense<0.000000e+00> : vector<128x32xf32>
    %38 = tpu.matmul %37, %15, %cst_14 {dimension_numbers = #tpu.dot_dimension_numbers<[1], [0], [0], [1], [0, 0, 1, 1], [], []>} : vector<128x128xf32>, vector<128x32xf32>, vector<128x32xf32> -> vector<128x32xf32>
    %39 = vector.extract_strided_slice %6 {offsets = [0, 32], sizes = [128, 32], strides = [1, 1]} : vector<128x384xf32> to vector<128x32xf32>
    %cst_15 = arith.constant 0.176776692 : f32
    %40 = vector.broadcast %cst_15 : f32 to vector<128x32xf32>
    %41 = arith.mulf %39, %40 : vector<128x32xf32>
    %42 = vector.extract_strided_slice %6 {offsets = [0, 160], sizes = [128, 32], strides = [1, 1]} : vector<128x384xf32> to vector<128x32xf32>
    %43 = vector.extract_strided_slice %6 {offsets = [0, 288], sizes = [128, 32], strides = [1, 1]} : vector<128x384xf32> to vector<128x32xf32>
    %44 = tpu.concatenate %42, %7 in 0 : vector<128x32xf32>, vector<128x32xf32> -> vector<256x32xf32>
    %cst_16 = arith.constant dense<0.000000e+00> : vector<128x256xf32>
    %45 = tpu.matmul %41, %44, %cst_16 {dimension_numbers = #tpu.dot_dimension_numbers<[1], [1], [0], [0], [0, 0, 1, 0], [], []>} : vector<128x32xf32>, vector<256x32xf32>, vector<128x256xf32> -> vector<128x256xf32>
    %46 = vector.extract_strided_slice %45 {offsets = [0, 0], sizes = [128, 128], strides = [1, 1]} : vector<128x256xf32> to vector<128x128xf32>
    %47 = vector.extract_strided_slice %45 {offsets = [0, 128], sizes = [128, 128], strides = [1, 1]} : vector<128x256xf32> to vector<128x128xf32>
    %c0_i32_17 = arith.constant 0 : i32
    %48 = tpu.dynamic_rotate %47 by %c0_i32_17 dim 1 {stride = 1 : si32, stride_dimension = 0 : si32} : vector<128x128xf32>, i32 -> vector<128x128xf32>
    %49 = arith.addf %46, %48 : vector<128x128xf32>
    %cst_18 = arith.constant 0xFF800000 : f32
    %50 = vector.broadcast %cst_18 : f32 to vector<128x128xf32>
    %51 = arith.select %10, %49, %50 : vector<128x128xi1>, vector<128x128xf32>
    %cst_19 = arith.constant dense<0xFF800000> : vector<128xf32>
    %52 = vector.multi_reduction <maximumf>, %51, %cst_19 [1] : vector<128x128xf32> to vector<128xf32>
    %53 = vector.shape_cast %52 : vector<128xf32> to vector<128x1xf32>
    %54 = vector.broadcast %53 : vector<128x1xf32> to vector<128x128xf32>
    %55 = arith.subf %51, %54 : vector<128x128xf32>
    %56 = math.exp %55 : vector<128x128xf32>
    %cst_20 = arith.constant dense<0.000000e+00> : vector<128xf32>
    %57 = vector.multi_reduction <add>, %56, %cst_20 [1] : vector<128x128xf32> to vector<128xf32>
    %58 = vector.shape_cast %57 : vector<128xf32> to vector<128x1xf32>
    %59 = tpu.reciprocal %58 {approx = true} : vector<128x1xf32> -> vector<128x1xf32>
    %60 = arith.mulf %58, %59 : vector<128x1xf32>
    %cst_21 = arith.constant 2.000000e+00 : f32
    %61 = vector.broadcast %cst_21 : f32 to vector<128x1xf32>
    %62 = arith.subf %61, %60 : vector<128x1xf32>
    %63 = arith.mulf %59, %62 : vector<128x1xf32>
    %64 = vector.broadcast %63 : vector<128x1xf32> to vector<128x128xf32>
    %65 = arith.mulf %56, %64 : vector<128x128xf32>
    %cst_22 = arith.constant dense<0.000000e+00> : vector<128x32xf32>
    %66 = tpu.matmul %65, %43, %cst_22 {dimension_numbers = #tpu.dot_dimension_numbers<[1], [0], [0], [1], [0, 0, 1, 1], [], []>} : vector<128x128xf32>, vector<128x32xf32>, vector<128x32xf32> -> vector<128x32xf32>
    %67 = vector.extract_strided_slice %6 {offsets = [0, 64], sizes = [128, 32], strides = [1, 1]} : vector<128x384xf32> to vector<128x32xf32>
    %cst_23 = arith.constant 0.176776692 : f32
    %68 = vector.broadcast %cst_23 : f32 to vector<128x32xf32>
    %69 = arith.mulf %67, %68 : vector<128x32xf32>
    %70 = vector.extract_strided_slice %6 {offsets = [0, 192], sizes = [128, 32], strides = [1, 1]} : vector<128x384xf32> to vector<128x32xf32>
    %71 = vector.extract_strided_slice %6 {offsets = [0, 320], sizes = [128, 32], strides = [1, 1]} : vector<128x384xf32> to vector<128x32xf32>
    %72 = tpu.concatenate %70, %7 in 0 : vector<128x32xf32>, vector<128x32xf32> -> vector<256x32xf32>
    %cst_24 = arith.constant dense<0.000000e+00> : vector<128x256xf32>
    %73 = tpu.matmul %69, %72, %cst_24 {dimension_numbers = #tpu.dot_dimension_numbers<[1], [1], [0], [0], [0, 0, 1, 0], [], []>} : vector<128x32xf32>, vector<256x32xf32>, vector<128x256xf32> -> vector<128x256xf32>
    %74 = vector.extract_strided_slice %73 {offsets = [0, 0], sizes = [128, 128], strides = [1, 1]} : vector<128x256xf32> to vector<128x128xf32>
    %75 = vector.extract_strided_slice %73 {offsets = [0, 128], sizes = [128, 128], strides = [1, 1]} : vector<128x256xf32> to vector<128x128xf32>
    %c0_i32_25 = arith.constant 0 : i32
    %76 = tpu.dynamic_rotate %75 by %c0_i32_25 dim 1 {stride = 1 : si32, stride_dimension = 0 : si32} : vector<128x128xf32>, i32 -> vector<128x128xf32>
    %77 = arith.addf %74, %76 : vector<128x128xf32>
    %cst_26 = arith.constant 0xFF800000 : f32
    %78 = vector.broadcast %cst_26 : f32 to vector<128x128xf32>
    %79 = arith.select %10, %77, %78 : vector<128x128xi1>, vector<128x128xf32>
    %cst_27 = arith.constant dense<0xFF800000> : vector<128xf32>
    %80 = vector.multi_reduction <maximumf>, %79, %cst_27 [1] : vector<128x128xf32> to vector<128xf32>
    %81 = vector.shape_cast %80 : vector<128xf32> to vector<128x1xf32>
    %82 = vector.broadcast %81 : vector<128x1xf32> to vector<128x128xf32>
    %83 = arith.subf %79, %82 : vector<128x128xf32>
    %84 = math.exp %83 : vector<128x128xf32>
    %cst_28 = arith.constant dense<0.000000e+00> : vector<128xf32>
    %85 = vector.multi_reduction <add>, %84, %cst_28 [1] : vector<128x128xf32> to vector<128xf32>
    %86 = vector.shape_cast %85 : vector<128xf32> to vector<128x1xf32>
    %87 = tpu.reciprocal %86 {approx = true} : vector<128x1xf32> -> vector<128x1xf32>
    %88 = arith.mulf %86, %87 : vector<128x1xf32>
    %cst_29 = arith.constant 2.000000e+00 : f32
    %89 = vector.broadcast %cst_29 : f32 to vector<128x1xf32>
    %90 = arith.subf %89, %88 : vector<128x1xf32>
    %91 = arith.mulf %87, %90 : vector<128x1xf32>
    %92 = vector.broadcast %91 : vector<128x1xf32> to vector<128x128xf32>
    %93 = arith.mulf %84, %92 : vector<128x128xf32>
    %cst_30 = arith.constant dense<0.000000e+00> : vector<128x32xf32>
    %94 = tpu.matmul %93, %71, %cst_30 {dimension_numbers = #tpu.dot_dimension_numbers<[1], [0], [0], [1], [0, 0, 1, 1], [], []>} : vector<128x128xf32>, vector<128x32xf32>, vector<128x32xf32> -> vector<128x32xf32>
    %95 = vector.extract_strided_slice %6 {offsets = [0, 96], sizes = [128, 32], strides = [1, 1]} : vector<128x384xf32> to vector<128x32xf32>
    %cst_31 = arith.constant 0.176776692 : f32
    %96 = vector.broadcast %cst_31 : f32 to vector<128x32xf32>
    %97 = arith.mulf %95, %96 : vector<128x32xf32>
    %98 = vector.extract_strided_slice %6 {offsets = [0, 224], sizes = [128, 32], strides = [1, 1]} : vector<128x384xf32> to vector<128x32xf32>
    %99 = vector.extract_strided_slice %6 {offsets = [0, 352], sizes = [128, 32], strides = [1, 1]} : vector<128x384xf32> to vector<128x32xf32>
    %100 = tpu.concatenate %98, %7 in 0 : vector<128x32xf32>, vector<128x32xf32> -> vector<256x32xf32>
    %cst_32 = arith.constant dense<0.000000e+00> : vector<128x256xf32>
    %101 = tpu.matmul %97, %100, %cst_32 {dimension_numbers = #tpu.dot_dimension_numbers<[1], [1], [0], [0], [0, 0, 1, 0], [], []>} : vector<128x32xf32>, vector<256x32xf32>, vector<128x256xf32> -> vector<128x256xf32>
    %102 = vector.extract_strided_slice %101 {offsets = [0, 0], sizes = [128, 128], strides = [1, 1]} : vector<128x256xf32> to vector<128x128xf32>
    %103 = vector.extract_strided_slice %101 {offsets = [0, 128], sizes = [128, 128], strides = [1, 1]} : vector<128x256xf32> to vector<128x128xf32>
    %c0_i32_33 = arith.constant 0 : i32
    %104 = tpu.dynamic_rotate %103 by %c0_i32_33 dim 1 {stride = 1 : si32, stride_dimension = 0 : si32} : vector<128x128xf32>, i32 -> vector<128x128xf32>
    %105 = arith.addf %102, %104 : vector<128x128xf32>
    %cst_34 = arith.constant 0xFF800000 : f32
    %106 = vector.broadcast %cst_34 : f32 to vector<128x128xf32>
    %107 = arith.select %10, %105, %106 : vector<128x128xi1>, vector<128x128xf32>
    %cst_35 = arith.constant dense<0xFF800000> : vector<128xf32>
    %108 = vector.multi_reduction <maximumf>, %107, %cst_35 [1] : vector<128x128xf32> to vector<128xf32>
    %109 = vector.shape_cast %108 : vector<128xf32> to vector<128x1xf32>
    %110 = vector.broadcast %109 : vector<128x1xf32> to vector<128x128xf32>
    %111 = arith.subf %107, %110 : vector<128x128xf32>
    %112 = math.exp %111 : vector<128x128xf32>
    %cst_36 = arith.constant dense<0.000000e+00> : vector<128xf32>
    %113 = vector.multi_reduction <add>, %112, %cst_36 [1] : vector<128x128xf32> to vector<128xf32>
    %114 = vector.shape_cast %113 : vector<128xf32> to vector<128x1xf32>
    %115 = tpu.reciprocal %114 {approx = true} : vector<128x1xf32> -> vector<128x1xf32>
    %116 = arith.mulf %114, %115 : vector<128x1xf32>
    %cst_37 = arith.constant 2.000000e+00 : f32
    %117 = vector.broadcast %cst_37 : f32 to vector<128x1xf32>
    %118 = arith.subf %117, %116 : vector<128x1xf32>
    %119 = arith.mulf %115, %118 : vector<128x1xf32>
    %120 = vector.broadcast %119 : vector<128x1xf32> to vector<128x128xf32>
    %121 = arith.mulf %112, %120 : vector<128x128xf32>
    %cst_38 = arith.constant dense<0.000000e+00> : vector<128x32xf32>
    %122 = tpu.matmul %121, %99, %cst_38 {dimension_numbers = #tpu.dot_dimension_numbers<[1], [0], [0], [1], [0, 0, 1, 1], [], []>} : vector<128x128xf32>, vector<128x32xf32>, vector<128x32xf32> -> vector<128x32xf32>
    %123 = tpu.concatenate %38, %66, %94, %122 in 1 : vector<128x32xf32>, vector<128x32xf32>, vector<128x32xf32>, vector<128x32xf32> -> vector<128x128xf32>
    %c0_39 = arith.constant 0 : index
    %c0_40 = arith.constant 0 : index
    %c0_41 = arith.constant 0 : index
    %124 = vector.load %arg5[%c0_39, %c0_40, %c0_41] : memref<1x128x128xf32, #tpu.memory_space<vmem>>, vector<1x128x128xf32>
    %125 = vector.shape_cast %124 : vector<1x128x128xf32> to vector<128x128xf32>
    %126 = vector.shape_cast %123 : vector<128x128xf32> to vector<1x128x128xf32>
    tpu.vector_store %arg5[%c0_39, %c0_40, %c0_41], %126 {strides = array<i32>} : memref<1x128x128xf32, #tpu.memory_space<vmem>>, vector<1x128x128xf32>,
    return
  }
  func.func @transform_0(%arg0: i32) -> (i32, i32, i32) {
    %c0_i32 = arith.constant 0 : i32
    %c0_i32_0 = arith.constant 0 : i32
    %c0_i32_1 = arith.constant 0 : i32
    return %arg0, %c0_i32, %c0_i32_0 : i32, i32, i32
  }
  func.func @transform_1(%arg0: i32) -> (i32, i32) {
    %c0_i32 = arith.constant 0 : i32
    %c0_i32_0 = arith.constant 0 : i32
    %c0_i32_1 = arith.constant 0 : i32
    return %c0_i32, %c0_i32_0 : i32, i32
  }
  func.func @transform_2(%arg0: i32) -> (i32, i32) {
    %c0_i32 = arith.constant 0 : i32
    %c0_i32_0 = arith.constant 0 : i32
    %c0_i32_1 = arith.constant 0 : i32
    return %c0_i32, %c0_i32_0 : i32, i32
  }
  func.func @transform_3(%arg0: i32) -> (i32, i32) {
    %c0_i32 = arith.constant 0 : i32
    %c0_i32_0 = arith.constant 0 : i32
    %c0_i32_1 = arith.constant 0 : i32
    return %c0_i32, %c0_i32_0 : i32, i32
  }
  func.func @transform_4(%arg0: i32) -> (i32, i32, i32) {
    %c0_i32 = arith.constant 0 : i32
    %c0_i32_0 = arith.constant 0 : i32
    %c0_i32_1 = arith.constant 0 : i32
    return %arg0, %c0_i32, %c0_i32_0 : i32, i32, i32
  }
}

</mosaic_0001>

<llo_original>
// kernel: tpu_custom_call.1
$region0: #{tpu_custom_call.1}
  #allocation0 [shape = 'u32[]', space=smem, size = 0x4, offset = 0x4, fixed_abs, tag = 'smem constant byte address 0x4 - core index']
  #allocation1 [shape = 'u32[72,128]{1,0:T(1,128)}', space=vmem, size = 0x9000, scoped, tag = 'internal scratch']
  %s0 = inlined_call_operand.hbm [shape: f32[2,128,128], index: 0, kind: input, shape index: {}]
  %s1 = inlined_call_operand.hbm [shape: f32[128,384], index: 1, kind: input, shape index: {}]
  %s2 = inlined_call_operand.vmem [shape: f32[1,384], index: 2, kind: input, shape index: {}]
  %s3 = inlined_call_operand.vmem [shape: f32[128,32], index: 3, kind: input, shape index: {}]
  %s4 = inlined_call_operand.hbm [shape: f32[2,128,128], index: 4, kind: output, shape index: {}]
  %s5 = sld [smem:[#allocation0]]
  $region57: #{tpu_custom_call.1} parent=0
    _
  %s7 = ssub.s32 1, %s5
  %s8 = scalar_select 0, %s7, %s5
  $region1: #{tpu_custom_call.1} parent=0
    #allocation2 [shape = 'u8[131072]{0}', space=vmem, size = 0x20000, scoped, tag = 'input window, operand 0']
    #allocation3 [shape = 's32[2]{0}', space=sflag, size = 0x8, scoped, tag = 'scoped memory for tpu_custom_call.1']
    #allocation4 [shape = 's32[2]{0}', space=sflag, size = 0x8, scoped, tag = 'scoped memory for tpu_custom_call.1']
    #allocation5 [shape = 'u8[196608]{0}', space=vmem, size = 0x30000, scoped, tag = 'input window, operand 1, single buffered']
    #allocation6 [shape = 's32[1]{0}', space=sflag, size = 0x4, scoped, tag = 'scoped memory for tpu_custom_call.1']
    #allocation7 [shape = 'u8[131072]{0}', space=vmem, size = 0x20000, scoped, tag = 'output window, operand 0']
    %9 = vsyncpa [#allocation3], 0
    %s10 = scalar_lea.sflag [#allocation3], 1
    %11 = vsyncpa %s10, 0
    %12 = vsyncpa [#allocation6], 0
    %13 = vsyncpa [#allocation4], 0
    %s14 = scalar_lea.sflag [#allocation4], 1
    %15 = vsyncpa %s14, 0
    loop: start=0, step=1, limit=4
    $region2: #{tpu_custom_call.1} parent=1 // loop_pre_header
      _
    $region3: #{tpu_custom_call.1} parent=1 // loop_header
      %s17 = sphi 0, %s21
      %p18 = scmp.ge.s32.totalorder %s17, 4
      %s27 = sphi 0, %s29
      %s30 = sphi 0, %s27
      %s31 = sphi 0, %s30
      %s47 = sphi 0, %s31
      %s51 = sphi 0, %s51
      %s53 = sphi 0, %s51
      %s54 = sphi 0, %s53
      %s68 = sphi 0, %s54
      %s72 = sphi 0, %s72
      %s74 = sphi 0, %s72
      %s75 = sphi 0, %s74
      %s89 = sphi 0, %s75
      %s93 = sphi 0, %s93
      %s95 = sphi 0, %s93
      %s96 = sphi 0, %s95
      %s110 = sphi 0, %s96
      %s116 = sphi 0, %s118
      %s119 = sphi 0, %s116
      %s120 = sphi 0, %s119
      %s136 = sphi 0, %s120
    $region4: #{tpu_custom_call.1} parent=1 // loop_header_branch
      %20 = sbr.rel (%p18) target = $region8
    $region5: #{tpu_custom_call.1} parent=1 // loop_body
      %s22 = ssub.s32 %s17, 1
      %s23 = ssub.s32 %s17, 2
      %s24 = sadd.s32 %s17, 1
      %s25 = ssub.s32 %s17, %s24
      %p26 = scmp.eq.s32.totalorder %s25, 0
      %s28 = sadd.s32 %s27, 1
      %s29 = scalar_select %p26, %s27, %s28
      %p32 = pneg %p26
      %p33 = scmp.eq.s32.totalorder %s17, 1
      %p34 = por %p32, %p33
      %p35 = scmp.ne.s32.totalorder %s27, %s30
      %p36 = scmp.eq.s32.totalorder %s17, 0
      %p37 = por %p35, %p36
      %p38 = scmp.ne.s32.totalorder %s27, %s30
      %p39 = scmp.eq.s32.totalorder %s22, 1
      %p40 = por %p38, %p39
      %p41 = scmp.ne.s32.totalorder %s30, %s31
      %p42 = scmp.eq.s32.totalorder %s22, 0
      %p43 = por %p41, %p42
      %p44 = scmp.ne.s32.totalorder %s30, %s31
      %p45 = scmp.eq.s32.totalorder %s23, 1
      %p46 = por %p44, %p45
      %p48 = scmp.ne.s32.totalorder %s31, %s47
      %p49 = scmp.eq.s32.totalorder %s23, 0
      %p50 = por %p48, %p49
      %s52 = sadd.s32 %s51, 1
      %p55 = scmp.eq.s32.totalorder %s17, 1
      %p56 = scmp.ne.s32.totalorder %s51, %s53
      %p57 = scmp.eq.s32.totalorder %s17, 0
      %p58 = por %p56, %p57
      %p59 = scmp.ne.s32.totalorder %s51, %s53
      %p60 = scmp.eq.s32.totalorder %s22, 1
      %p61 = por %p59, %p60
      %p62 = scmp.ne.s32.totalorder %s53, %s54
      %p63 = scmp.eq.s32.totalorder %s22, 0
      %p64 = por %p62, %p63
      %p65 = scmp.ne.s32.totalorder %s53, %s54
      %p66 = scmp.eq.s32.totalorder %s23, 1
      %p67 = por %p65, %p66
      %p69 = scmp.ne.s32.totalorder %s54, %s68
      %p70 = scmp.eq.s32.totalorder %s23, 0
      %p71 = por %p69, %p70
      %s73 = sadd.s32 %s72, 1
      %p76 = scmp.eq.s32.totalorder %s17, 1
      %p77 = scmp.ne.s32.totalorder %s72, %s74
      %p78 = scmp.eq.s32.totalorder %s17, 0
      %p79 = por %p77, %p78
      %p80 = scmp.ne.s32.totalorder %s72, %s74
      %p81 = scmp.eq.s32.totalorder %s22, 1
      %p82 = por %p80, %p81
      %p83 = scmp.ne.s32.totalorder %s74, %s75
      %p84 = scmp.eq.s32.totalorder %s22, 0
      %p85 = por %p83, %p84
      %p86 = scmp.ne.s32.totalorder %s74, %s75
      %p87 = scmp.eq.s32.totalorder %s23, 1
      %p88 = por %p86, %p87
      %p90 = scmp.ne.s32.totalorder %s75, %s89
      %p91 = scmp.eq.s32.totalorder %s23, 0
      %p92 = por %p90, %p91
      %s94 = sadd.s32 %s93, 1
      %p97 = scmp.eq.s32.totalorder %s17, 1
      %p98 = scmp.ne.s32.totalorder %s93, %s95
      %p99 = scmp.eq.s32.totalorder %s17, 0
      %p100 = por %p98, %p99
      %p101 = scmp.ne.s32.totalorder %s93, %s95
      %p102 = scmp.eq.s32.totalorder %s22, 1
      %p103 = por %p101, %p102
      %p104 = scmp.ne.s32.totalorder %s95, %s96
      %p105 = scmp.eq.s32.totalorder %s22, 0
      %p106 = por %p104, %p105
      %p107 = scmp.ne.s32.totalorder %s95, %s96
      %p108 = scmp.eq.s32.totalorder %s23, 1
      %p109 = por %p107, %p108
      %p111 = scmp.ne.s32.totalorder %s96, %s110
      %p112 = scmp.eq.s32.totalorder %s23, 0
      %p113 = por %p111, %p112
      %s114 = ssub.s32 %s17, %s24
      %p115 = scmp.eq.s32.totalorder %s114, 0
      %s117 = sadd.s32 %s116, 1
      %s118 = scalar_select %p115, %s116, %s117
      %p121 = pneg %p115
      %p122 = scmp.eq.s32.totalorder %s17, 1
      %p123 = por %p121, %p122
      %p124 = scmp.ne.s32.totalorder %s116, %s119
      %p125 = scmp.eq.s32.totalorder %s17, 0
      %p126 = por %p124, %p125
      %p127 = scmp.ne.s32.totalorder %s116, %s119
      %p128 = scmp.eq.s32.totalorder %s22, 1
      %p129 = por %p127, %p128
      %p130 = scmp.ne.s32.totalorder %s119, %s120
      %p131 = scmp.eq.s32.totalorder %s22, 0
      %p132 = por %p130, %p131
      %p133 = scmp.ne.s32.totalorder %s119, %s120
      %p134 = scmp.eq.s32.totalorder %s23, 1
      %p135 = por %p133, %p134
      %p137 = scmp.ne.s32.totalorder %s120, %s136
      %p138 = scmp.eq.s32.totalorder %s23, 0
      %p139 = por %p137, %p138
      %p140 = scmp.le.s32.totalorder 1, %s17
      %p141 = scmp.lt.s32.totalorder %s17, 3
      %p142 = pnand %p140, %p141
      %p143 = pneg %p142
      // Predicated region
      $region9: #{tpu_custom_call.1} parent=5 // pred_check
        _
      $region10: #{tpu_custom_call.1} parent=5 // pred_check_branch
        %145 = sbr.rel (%p142) target = $region12
      $region11: #{tpu_custom_call.1} parent=5 // pred_region
        %s146 = ssub.s32 %s17, 1
        // Predicated region
        $region13: #{tpu_custom_call.1} parent=11 // pred_check
          %p147 = pneg %p64
        $region14: #{tpu_custom_call.1} parent=11 // pred_check_branch
          %149 = sbr.rel (%p147) target = $region16
        $region15: #{tpu_custom_call.1} parent=11 // pred_region
          %151 = vsyncadd [#allocation6], 0
          %s152 = sshll.u32 %s1, 4
          %s153 = int_to_ptr.hbm [resolvable:$true] %s152
          %s154 = sshll.u32 [#allocation5], 4
          %s155 = int_to_ptr.vmem [resolvable:$true] %s154
          %160 = dma.hbm_to_vmem [thread:$0]  %s153, 6144, %s155, [#allocation6], 384, 384, 24
        $region16: #{tpu_custom_call.1} parent=11 // pred_fallthru
          _
        // Predicated region
        $region17: #{tpu_custom_call.1} parent=11 // pred_check
          %p161 = pneg %p85
        $region18: #{tpu_custom_call.1} parent=11 // pred_check_branch
          %163 = sbr.rel (%p161) target = $region20
        $region19: #{tpu_custom_call.1} parent=11 // pred_region
          _
        $region20: #{tpu_custom_call.1} parent=11 // pred_fallthru
          _
        // Predicated region
        $region21: #{tpu_custom_call.1} parent=11 // pred_check
          %p164 = pneg %p106
        $region22: #{tpu_custom_call.1} parent=11 // pred_check_branch
          %166 = sbr.rel (%p164) target = $region24
        $region23: #{tpu_custom_call.1} parent=11 // pred_region
          _
        $region24: #{tpu_custom_call.1} parent=11 // pred_fallthru
          _
      $region12: #{tpu_custom_call.1} parent=5 // pred_fallthru
        _
      %p167 = scmp.lt.s32.totalorder %s17, 2
      // Predicated region
      $region25: #{tpu_custom_call.1} parent=5 // pred_check
        %p168 = pneg %p167
      $region26: #{tpu_custom_call.1} parent=5 // pred_check_branch
        %170 = sbr.rel (%p168) target = $region28
      $region27: #{tpu_custom_call.1} parent=5 // pred_region
        // Predicated region
        $region29: #{tpu_custom_call.1} parent=27 // pred_check
          %p171 = pneg %p37
        $region30: #{tpu_custom_call.1} parent=27 // pred_check_branch
          %173 = sbr.rel (%p171) target = $region32
        $region31: #{tpu_custom_call.1} parent=27 // pred_region
          %s174 = sand.u32 %s27, 1
          %s175 = scalar_lea.sflag [#allocation3], %s174
          %s176 = sand.u32 %s27, 1
          %s177 = smul.addr %s176, 128
          %s178 = scalar_lea.vmem [#allocation2], %s177
          %180 = vsyncadd %s175, 0
          %s181 = smul.addr %s17, 16
          %s182 = smul.addr %s181, 8
          %s183 = scalar_lea.hbm %s0, %s182
          %s184 = sshll.u32 %s183, 4
          %s185 = int_to_ptr.hbm [resolvable:$true] %s184
          %s186 = sshll.u32 %s178, 4
          %s187 = int_to_ptr.vmem [resolvable:$true] %s186
          %192 = dma.hbm_to_vmem [thread:$0]  %s185, 2048, %s187, %s175, 128, 128, 8
        $region32: #{tpu_custom_call.1} parent=27 // pred_fallthru
          _
      $region28: #{tpu_custom_call.1} parent=5 // pred_fallthru
        _
      %p193 = scmp.le.s32.totalorder 1, %s17
      %p194 = scmp.lt.s32.totalorder %s17, 3
      %p195 = pnand %p193, %p194
      %p196 = pneg %p195
      // Predicated region
      $region33: #{tpu_custom_call.1} parent=5 // pred_check
        _
      $region34: #{tpu_custom_call.1} parent=5 // pred_check_branch
        %198 = sbr.rel (%p195) target = $region36
      $region35: #{tpu_custom_call.1} parent=5 // pred_region
        %s199 = ssub.s32 %s17, 1
        %s200 = sand.u32 %s30, 1
        %s201 = scalar_lea.sflag [#allocation3], %s200
        %s202 = sand.u32 %s30, 1
        %s203 = smul.addr %s202, 128
        %s204 = scalar_lea.vmem [#allocation2], %s203
        // Predicated region
        $region37: #{tpu_custom_call.1} parent=35 // pred_check
          %p205 = pneg %p43
        $region38: #{tpu_custom_call.1} parent=35 // pred_check_branch
          %207 = sbr.rel (%p205) target = $region40
        $region39: #{tpu_custom_call.1} parent=35 // pred_region
          %209 = dma.done %s201, 2048
        $region40: #{tpu_custom_call.1} parent=35 // pred_fallthru
          _
        // Predicated region
        $region41: #{tpu_custom_call.1} parent=35 // pred_check
          %p210 = pneg %p64
        $region42: #{tpu_custom_call.1} parent=35 // pred_check_branch
          %212 = sbr.rel (%p210) target = $region44
        $region43: #{tpu_custom_call.1} parent=35 // pred_region
          %214 = dma.done [#allocation6], 6144
        $region44: #{tpu_custom_call.1} parent=35 // pred_fallthru
          _
        %s215 = sand.u32 %s30, 1
        %s216 = scalar_lea.sflag [#allocation3], %s215
        %s217 = sand.u32 %s30, 1
        %s218 = smul.addr %s217, 128
        %s219 = scalar_lea.vmem [#allocation2], %s218
        %p220 = pneg %p43
        %p221 = pneg %p40
        %p222 = pneg %p64
        %p223 = pneg %p61
        %p224 = pneg %p85
        %p225 = pneg %p82
        %p226 = pneg %p106
        %p227 = pneg %p103
        %p228 = pneg %p132
        %p229 = pneg %p129
        %s230 = sand.u32 %s119, 1
        %s231 = scalar_lea.sflag [#allocation4], %s230
        %s232 = sand.u32 %s119, 1
        %s233 = smul.addr %s232, 128
        %s234 = scalar_lea.vmem [#allocation7], %s233
        %v235 = vld [vmem:[%s204] sm:$0xff]
        %v236 = vld [vmem:[%s204 + $0x8] sm:$0xff]
        %v237 = vld [vmem:[%s204 + $0x10] sm:$0xff]
        %v238 = vld [vmem:[%s204 + $0x18] sm:$0xff]
        %v239 = vld [vmem:[%s204 + $0x20] sm:$0xff]
        %v240 = vld [vmem:[%s204 + $0x28] sm:$0xff]
        %v241 = vld [vmem:[%s204 + $0x30] sm:$0xff]
        %v242 = vld [vmem:[%s204 + $0x38] sm:$0xff]
        %v243 = vld [vmem:[%s204 + $0x40] sm:$0xff]
        %v244 = vld [vmem:[%s204 + $0x48] sm:$0xff]
        %v245 = vld [vmem:[%s204 + $0x50] sm:$0xff]
        %v246 = vld [vmem:[%s204 + $0x58] sm:$0xff]
        %v247 = vld [vmem:[%s204 + $0x60] sm:$0xff]
        %v248 = vld [vmem:[%s204 + $0x68] sm:$0xff]
        %v249 = vld [vmem:[%s204 + $0x70] sm:$0xff]
        %v250 = vld [vmem:[%s204 + $0x78] sm:$0xff]
        %v251 = vld [vmem:[#allocation5] sm:$0xff]
        %v252 = vld [vmem:[#allocation5 + $0x8] sm:$0xff]
        %v253 = vld [vmem:[#allocation5 + $0x10] sm:$0xff]
        %v254 = vld [vmem:[#allocation5 + $0x18] sm:$0xff]
        %v255 = vld [vmem:[#allocation5 + $0x20] sm:$0xff]
        %v256 = vld [vmem:[#allocation5 + $0x28] sm:$0xff]
        %v257 = vld [vmem:[#allocation5 + $0x30] sm:$0xff]
        %v258 = vld [vmem:[#allocation5 + $0x38] sm:$0xff]
        %v259 = vld [vmem:[#allocation5 + $0x40] sm:$0xff]
        %v260 = vld [vmem:[#allocation5 + $0x48] sm:$0xff]
        %v261 = vld [vmem:[#allocation5 + $0x50] sm:$0xff]
        %v262 = vld [vmem:[#allocation5 + $0x58] sm:$0xff]
        %v263 = vld [vmem:[#allocation5 + $0x60] sm:$0xff]
        %v264 = vld [vmem:[#allocation5 + $0x68] sm:$0xff]
        %v265 = vld [vmem:[#allocation5 + $0x70] sm:$0xff]
        %v266 = vld [vmem:[#allocation5 + $0x78] sm:$0xff]
        %v267 = vld [vmem:[#allocation5 + $0x80] sm:$0xff]
        %v268 = vld [vmem:[#allocation5 + $0x88] sm:$0xff]
        %v269 = vld [vmem:[#allocation5 + $0x90] sm:$0xff]
        %v270 = vld [vmem:[#allocation5 + $0x98] sm:$0xff]
        %v271 = vld [vmem:[#allocation5 + $0xa0] sm:$0xff]
        %v272 = vld [vmem:[#allocation5 + $0xa8] sm:$0xff]
        %v273 = vld [vmem:[#allocation5 + $0xb0] sm:$0xff]
        %v274 = vld [vmem:[#allocation5 + $0xb8] sm:$0xff]
        %v275 = vld [vmem:[#allocation5 + $0xc0] sm:$0xff]
        %v276 = vld [vmem:[#allocation5 + $0xc8] sm:$0xff]
        %v277 = vld [vmem:[#allocation5 + $0xd0] sm:$0xff]
        %v278 = vld [vmem:[#allocation5 + $0xd8] sm:$0xff]
        %v279 = vld [vmem:[#allocation5 + $0xe0] sm:$0xff]
        %v280 = vld [vmem:[#allocation5 + $0xe8] sm:$0xff]
        %v281 = vld [vmem:[#allocation5 + $0xf0] sm:$0xff]
        %v282 = vld [vmem:[#allocation5 + $0xf8] sm:$0xff]
        %v283 = vld [vmem:[#allocation5 + $0x100] sm:$0xff]
        %v284 = vld [vmem:[#allocation5 + $0x108] sm:$0xff]
        %v285 = vld [vmem:[#allocation5 + $0x110] sm:$0xff]
        %v286 = vld [vmem:[#allocation5 + $0x118] sm:$0xff]
        %v287 = vld [vmem:[#allocation5 + $0x120] sm:$0xff]
        %v288 = vld [vmem:[#allocation5 + $0x128] sm:$0xff]
        %v289 = vld [vmem:[#allocation5 + $0x130] sm:$0xff]
        %v290 = vld [vmem:[#allocation5 + $0x138] sm:$0xff]
        %v291 = vld [vmem:[#allocation5 + $0x140] sm:$0xff]
        %v292 = vld [vmem:[#allocation5 + $0x148] sm:$0xff]
        %v293 = vld [vmem:[#allocation5 + $0x150] sm:$0xff]
        %v294 = vld [vmem:[#allocation5 + $0x158] sm:$0xff]
        %v295 = vld [vmem:[#allocation5 + $0x160] sm:$0xff]
        %v296 = vld [vmem:[#allocation5 + $0x168] sm:$0xff]
        %v297 = vld [vmem:[#allocation5 + $0x170] sm:$0xff]
        %v298 = vld [vmem:[#allocation5 + $0x178] sm:$0xff]
        %v299 = vld [vmem:[%s2] sm:$0x7]
        %v301 = vperm.slane %v299, 0
        %v302 = vperm.slane %v299, 1
        %v303 = vperm.slane %v299, 2
        %307 = vmatpush.msra.mxu0 %v296
        %308 = vmatpush.msra.mxu0 %v293
        %309 = vmatpush.msra.mxu0 %v290
        %310 = vmatpush.msra.mxu0 %v287
        %311 = vmatpush.msra.mxu0 %v284
        %312 = vmatpush.msra.mxu0 %v281
        %313 = vmatpush.msra.mxu0 %v278
        %314 = vmatpush.msra.mxu0 %v275
        %315 = vmatpush.msra.mxu0 %v272
        %316 = vmatpush.msra.mxu0 %v269
        %317 = vmatpush.msra.mxu0 %v266
        %318 = vmatpush.msra.mxu0 %v263
        %319 = vmatpush.msra.mxu0 %v260
        %320 = vmatpush.msra.mxu0 %v257
        %321 = vmatpush.msra.mxu0 %v254
        %322 = vmatpush.msra.mxu0 %v251
        %323 = vmatmul.f32.gmra.mxu0 %v235
        %v324 = vpop.f32.mrf.mxu0
        %v325 = vadd.f32 %v301, %v324
        %326 = vmatmul.f32.gmra.mxu0 %v236
        %v327 = vpop.f32.mrf.mxu0
        %v328 = vadd.f32 %v301, %v327
        %329 = vmatmul.f32.gmra.mxu0 %v237
        %v330 = vpop.f32.mrf.mxu0
        %v331 = vadd.f32 %v301, %v330
        %332 = vmatmul.f32.gmra.mxu0 %v238
        %v333 = vpop.f32.mrf.mxu0
        %v334 = vadd.f32 %v301, %v333
        %335 = vmatmul.f32.gmra.mxu0 %v239
        %v336 = vpop.f32.mrf.mxu0
        %v337 = vadd.f32 %v301, %v336
        %338 = vmatmul.f32.gmra.mxu0 %v240
        %v339 = vpop.f32.mrf.mxu0
        %v340 = vadd.f32 %v301, %v339
        %341 = vmatmul.f32.gmra.mxu0 %v241
        %v342 = vpop.f32.mrf.mxu0
        %v343 = vadd.f32 %v301, %v342
        %344 = vmatmul.f32.gmra.mxu0 %v242
        %v345 = vpop.f32.mrf.mxu0
        %v346 = vadd.f32 %v301, %v345
        %347 = vmatmul.f32.gmra.mxu0 %v243
        %v348 = vpop.f32.mrf.mxu0
        %v349 = vadd.f32 %v301, %v348
        %350 = vmatmul.f32.gmra.mxu0 %v244
        %v351 = vpop.f32.mrf.mxu0
        %v352 = vadd.f32 %v301, %v351
        %353 = vmatmul.f32.gmra.mxu0 %v245
        %v354 = vpop.f32.mrf.mxu0
        %v355 = vadd.f32 %v301, %v354
        %356 = vmatmul.f32.gmra.mxu0 %v246
        %v357 = vpop.f32.mrf.mxu0
        %v358 = vadd.f32 %v301, %v357
        %359 = vmatmul.f32.gmra.mxu0 %v247
        %v360 = vpop.f32.mrf.mxu0
        %v361 = vadd.f32 %v301, %v360
        %362 = vmatmul.f32.gmra.mxu0 %v248
        %v363 = vpop.f32.mrf.mxu0
        %v364 = vadd.f32 %v301, %v363
        %365 = vmatmul.f32.gmra.mxu0 %v249
        %v366 = vpop.f32.mrf.mxu0
        %v367 = vadd.f32 %v301, %v366
        %368 = vmatmul.f32.gmra.mxu0 %v250
        %v369 = vpop.f32.mrf.mxu0
        %v370 = vadd.f32 %v301, %v369
        %371 = vdwg.mxu0
        %372 = vmatpush.msra.mxu0 %v297
        %373 = vmatpush.msra.mxu0 %v294
        %374 = vmatpush.msra.mxu0 %v291
        %375 = vmatpush.msra.mxu0 %v288
        %376 = vmatpush.msra.mxu0 %v285
        %377 = vmatpush.msra.mxu0 %v282
        %378 = vmatpush.msra.mxu0 %v279
        %379 = vmatpush.msra.mxu0 %v276
        %380 = vmatpush.msra.mxu0 %v273
        %381 = vmatpush.msra.mxu0 %v270
        %382 = vmatpush.msra.mxu0 %v267
        %383 = vmatpush.msra.mxu0 %v264
        %384 = vmatpush.msra.mxu0 %v261
        %385 = vmatpush.msra.mxu0 %v258
        %386 = vmatpush.msra.mxu0 %v255
        %387 = vmatpush.msra.mxu0 %v252
        %388 = vmatmul.f32.gmra.mxu0 %v235
        %v389 = vpop.f32.mrf.mxu0
        %v390 = vadd.f32 %v302, %v389
        %391 = vmatmul.f32.gmra.mxu0 %v236
        %v392 = vpop.f32.mrf.mxu0
        %v393 = vadd.f32 %v302, %v392
        %394 = vmatmul.f32.gmra.mxu0 %v237
        %v395 = vpop.f32.mrf.mxu0
        %v396 = vadd.f32 %v302, %v395
        %397 = vmatmul.f32.gmra.mxu0 %v238
        %v398 = vpop.f32.mrf.mxu0
        %v399 = vadd.f32 %v302, %v398
        %400 = vmatmul.f32.gmra.mxu0 %v239
        %v401 = vpop.f32.mrf.mxu0
        %v402 = vadd.f32 %v302, %v401
        %403 = vmatmul.f32.gmra.mxu0 %v240
        %v404 = vpop.f32.mrf.mxu0
        %v405 = vadd.f32 %v302, %v404
        %406 = vmatmul.f32.gmra.mxu0 %v241
        %v407 = vpop.f32.mrf.mxu0
        %v408 = vadd.f32 %v302, %v407
        %409 = vmatmul.f32.gmra.mxu0 %v242
        %v410 = vpop.f32.mrf.mxu0
        %v411 = vadd.f32 %v302, %v410
        %412 = vmatmul.f32.gmra.mxu0 %v243
        %v413 = vpop.f32.mrf.mxu0
        %v414 = vadd.f32 %v302, %v413
        %415 = vmatmul.f32.gmra.mxu0 %v244
        %v416 = vpop.f32.mrf.mxu0
        %v417 = vadd.f32 %v302, %v416
        %418 = vmatmul.f32.gmra.mxu0 %v245
        %v419 = vpop.f32.mrf.mxu0
        %v420 = vadd.f32 %v302, %v419
        %421 = vmatmul.f32.gmra.mxu0 %v246
        %v422 = vpop.f32.mrf.mxu0
        %v423 = vadd.f32 %v302, %v422
        %424 = vmatmul.f32.gmra.mxu0 %v247
        %v425 = vpop.f32.mrf.mxu0
        %v426 = vadd.f32 %v302, %v425
        %427 = vmatmul.f32.gmra.mxu0 %v248
        %v428 = vpop.f32.mrf.mxu0
        %v429 = vadd.f32 %v302, %v428
        %430 = vmatmul.f32.gmra.mxu0 %v249
        %v431 = vpop.f32.mrf.mxu0
        %v432 = vadd.f32 %v302, %v431
        %433 = vmatmul.f32.gmra.mxu0 %v250
        %v434 = vpop.f32.mrf.mxu0
        %v435 = vadd.f32 %v302, %v434
        %436 = vdwg.mxu0
        %437 = vmatpush.msra.mxu0 %v298
        %438 = vmatpush.msra.mxu0 %v295
        %439 = vmatpush.msra.mxu0 %v292
        %440 = vmatpush.msra.mxu0 %v289
        %441 = vmatpush.msra.mxu0 %v286
        %442 = vmatpush.msra.mxu0 %v283
        %443 = vmatpush.msra.mxu0 %v280
        %444 = vmatpush.msra.mxu0 %v277
        %445 = vmatpush.msra.mxu0 %v274
        %446 = vmatpush.msra.mxu0 %v271
        %447 = vmatpush.msra.mxu0 %v268
        %448 = vmatpush.msra.mxu0 %v265
        %449 = vmatpush.msra.mxu0 %v262
        %450 = vmatpush.msra.mxu0 %v259
        %451 = vmatpush.msra.mxu0 %v256
        %452 = vmatpush.msra.mxu0 %v253
        %453 = vmatmul.f32.gmra.mxu0 %v235
        %v454 = vpop.f32.mrf.mxu0
        %v455 = vadd.f32 %v303, %v454
        %456 = vmatmul.f32.gmra.mxu0 %v236
        %v457 = vpop.f32.mrf.mxu0
        %v458 = vadd.f32 %v303, %v457
        %459 = vmatmul.f32.gmra.mxu0 %v237
        %v460 = vpop.f32.mrf.mxu0
        %v461 = vadd.f32 %v303, %v460
        %462 = vmatmul.f32.gmra.mxu0 %v238
        %v463 = vpop.f32.mrf.mxu0
        %v464 = vadd.f32 %v303, %v463
        %465 = vmatmul.f32.gmra.mxu0 %v239
        %v466 = vpop.f32.mrf.mxu0
        %v467 = vadd.f32 %v303, %v466
        %468 = vmatmul.f32.gmra.mxu0 %v240
        %v469 = vpop.f32.mrf.mxu0
        %v470 = vadd.f32 %v303, %v469
        %471 = vmatmul.f32.gmra.mxu0 %v241
        %v472 = vpop.f32.mrf.mxu0
        %v473 = vadd.f32 %v303, %v472
        %474 = vmatmul.f32.gmra.mxu0 %v242
        %v475 = vpop.f32.mrf.mxu0
        %v476 = vadd.f32 %v303, %v475
        %477 = vmatmul.f32.gmra.mxu0 %v243
        %v478 = vpop.f32.mrf.mxu0
        %v479 = vadd.f32 %v303, %v478
        %480 = vmatmul.f32.gmra.mxu0 %v244
        %v481 = vpop.f32.mrf.mxu0
        %v482 = vadd.f32 %v303, %v481
        %483 = vmatmul.f32.gmra.mxu0 %v245
        %v484 = vpop.f32.mrf.mxu0
        %v485 = vadd.f32 %v303, %v484
        %486 = vmatmul.f32.gmra.mxu0 %v246
        %v487 = vpop.f32.mrf.mxu0
        %v488 = vadd.f32 %v303, %v487
        %489 = vmatmul.f32.gmra.mxu0 %v247
        %v490 = vpop.f32.mrf.mxu0
        %v491 = vadd.f32 %v303, %v490
        %492 = vmatmul.f32.gmra.mxu0 %v248
        %v493 = vpop.f32.mrf.mxu0
        %v494 = vadd.f32 %v303, %v493
        %495 = vmatmul.f32.gmra.mxu0 %v249
        %v496 = vpop.f32.mrf.mxu0
        %v497 = vadd.f32 %v303, %v496
        %498 = vmatmul.f32.gmra.mxu0 %v250
        %v499 = vpop.f32.mrf.mxu0
        %v500 = vadd.f32 %v303, %v499
        %501 = vdwg.mxu0
        %v502 = vld [vmem:[%s3] sm:$0xff]
        %v503 = vld [vmem:[%s3 + $0x8] sm:$0xff]
        %v504 = vld [vmem:[%s3 + $0x10] sm:$0xff]
        %v505 = vld [vmem:[%s3 + $0x18] sm:$0xff]
        %v506 = vld [vmem:[%s3 + $0x20] sm:$0xff]
        %v507 = vld [vmem:[%s3 + $0x28] sm:$0xff]
        %v508 = vld [vmem:[%s3 + $0x30] sm:$0xff]
        %v509 = vld [vmem:[%s3 + $0x38] sm:$0xff]
        %v510 = vld [vmem:[%s3 + $0x40] sm:$0xff]
        %v511 = vld [vmem:[%s3 + $0x48] sm:$0xff]
        %v512 = vld [vmem:[%s3 + $0x50] sm:$0xff]
        %v513 = vld [vmem:[%s3 + $0x58] sm:$0xff]
        %v514 = vld [vmem:[%s3 + $0x60] sm:$0xff]
        %v515 = vld [vmem:[%s3 + $0x68] sm:$0xff]
        %v516 = vld [vmem:[%s3 + $0x70] sm:$0xff]
        %v517 = vld [vmem:[%s3 + $0x78] sm:$0xff]
        %v518 = vlaneseq
        %v519 = vshrl.u32 %v518, 7
        %v520 = vadd.s32 %v519, 8
        %v521 = vadd.s32 %v519, 16
        %v522 = vadd.s32 %v519, 24
        %v523 = vadd.s32 %v519, 32
        %v524 = vadd.s32 %v519, 40
        %v525 = vadd.s32 %v519, 48
        %v526 = vadd.s32 %v519, 56
        %v527 = vadd.s32 %v519, 64
        %v528 = vadd.s32 %v519, 72
        %v529 = vadd.s32 %v519, 80
        %v530 = vadd.s32 %v519, 88
        %v531 = vadd.s32 %v519, 96
        %v532 = vadd.s32 %v519, 104
        %v533 = vadd.s32 %v519, 112
        %v534 = vadd.s32 %v519, 120
        %v535 = vlaneseq
        %v536 = vand.u32 %v535, 127
        %vm537 = vcmp.le.s32.totalorder %v536, %v519
        %vm538 = vcmp.le.s32.totalorder %v536, %v520
        %vm539 = vcmp.le.s32.totalorder %v536, %v521
        %vm540 = vcmp.le.s32.totalorder %v536, %v522
        %vm541 = vcmp.le.s32.totalorder %v536, %v523
        %vm542 = vcmp.le.s32.totalorder %v536, %v524
        %vm543 = vcmp.le.s32.totalorder %v536, %v525
        %vm544 = vcmp.le.s32.totalorder %v536, %v526
        %vm545 = vcmp.le.s32.totalorder %v536, %v527
        %vm546 = vcmp.le.s32.totalorder %v536, %v528
        %vm547 = vcmp.le.s32.totalorder %v536, %v529
        %vm548 = vcmp.le.s32.totalorder %v536, %v530
        %vm549 = vcmp.le.s32.totalorder %v536, %v531
        %vm550 = vcmp.le.s32.totalorder %v536, %v532
        %vm551 = vcmp.le.s32.totalorder %v536, %v533
        %vm552 = vcmp.le.s32.totalorder %v536, %v534
        %v553 = vmul.f32 %v325, 0.17677669
        %v554 = vmul.f32 %v328, 0.17677669
        %v555 = vmul.f32 %v331, 0.17677669
        %v556 = vmul.f32 %v334, 0.17677669
        %v557 = vmul.f32 %v337, 0.17677669
        %v558 = vmul.f32 %v340, 0.17677669
        %v559 = vmul.f32 %v343, 0.17677669
        %v560 = vmul.f32 %v346, 0.17677669
        %v561 = vmul.f32 %v349, 0.17677669
        %v562 = vmul.f32 %v352, 0.17677669
        %v563 = vmul.f32 %v355, 0.17677669
        %v564 = vmul.f32 %v358, 0.17677669
        %v565 = vmul.f32 %v361, 0.17677669
        %v566 = vmul.f32 %v364, 0.17677669
        %v567 = vmul.f32 %v367, 0.17677669
        %v568 = vmul.f32 %v370, 0.17677669
        %vm569 = vcmask 261120
        %v571 = vsel %vm569, %v553, 0
        %v574 = vsel %vm569, %v554, 0
        %v577 = vsel %vm569, %v555, 0
        %v580 = vsel %vm569, %v556, 0
        %v583 = vsel %vm569, %v557, 0
        %v586 = vsel %vm569, %v558, 0
        %v589 = vsel %vm569, %v559, 0
        %v592 = vsel %vm569, %v560, 0
        %v595 = vsel %vm569, %v561, 0
        %v598 = vsel %vm569, %v562, 0
        %v601 = vsel %vm569, %v563, 0
        %v604 = vsel %vm569, %v564, 0
        %v607 = vsel %vm569, %v565, 0
        %v610 = vsel %vm569, %v566, 0
        %v613 = vsel %vm569, %v567, 0
        %v616 = vsel %vm569, %v568, 0
        %v619 = vsel %vm569, %v390, 0
        %v622 = vsel %vm569, %v393, 0
        %v625 = vsel %vm569, %v396, 0
        %v628 = vsel %vm569, %v399, 0
        %v631 = vsel %vm569, %v402, 0
        %v634 = vsel %vm569, %v405, 0
        %v637 = vsel %vm569, %v408, 0
        %v640 = vsel %vm569, %v411, 0
        %v643 = vsel %vm569, %v414, 0
        %v646 = vsel %vm569, %v417, 0
        %v649 = vsel %vm569, %v420, 0
        %v652 = vsel %vm569, %v423, 0
        %v655 = vsel %vm569, %v426, 0
        %v658 = vsel %vm569, %v429, 0
        %v661 = vsel %vm569, %v432, 0
        %v664 = vsel %vm569, %v435, 0
        %v667 = vsel %vm569, %v502, 0
        %v670 = vsel %vm569, %v503, 0
        %v673 = vsel %vm569, %v504, 0
        %v676 = vsel %vm569, %v505, 0
        %v679 = vsel %vm569, %v506, 0
        %v682 = vsel %vm569, %v507, 0
        %v685 = vsel %vm569, %v508, 0
        %v688 = vsel %vm569, %v509, 0
        %v691 = vsel %vm569, %v510, 0
        %v694 = vsel %vm569, %v511, 0
        %v697 = vsel %vm569, %v512, 0
        %v700 = vsel %vm569, %v513, 0
        %v703 = vsel %vm569, %v514, 0
        %v706 = vsel %vm569, %v515, 0
        %v709 = vsel %vm569, %v516, 0
        %v712 = vsel %vm569, %v517, 0
        %714 = vmatpush.xpose.msra.mxu0 %v664
        %715 = vmatpush.xpose.msra.mxu0 %v661
        %716 = vmatpush.xpose.msra.mxu0 %v658
        %717 = vmatpush.xpose.msra.mxu0 %v655
        %718 = vmatpush.xpose.msra.mxu0 %v652
        %719 = vmatpush.xpose.msra.mxu0 %v649
        %720 = vmatpush.xpose.msra.mxu0 %v646
        %721 = vmatpush.xpose.msra.mxu0 %v643
        %722 = vmatpush.xpose.msra.mxu0 %v640
        %723 = vmatpush.xpose.msra.mxu0 %v637
        %724 = vmatpush.xpose.msra.mxu0 %v634
        %725 = vmatpush.xpose.msra.mxu0 %v631
        %726 = vmatpush.xpose.msra.mxu0 %v628
        %727 = vmatpush.xpose.msra.mxu0 %v625
        %728 = vmatpush.xpose.msra.mxu0 %v622
        %729 = vmatpush.xpose.msra.mxu0 %v619
        %730 = vmatmul.f32.gmra.mxu0 %v571
        %v731 = vpop.f32.mrf.mxu0
        %v732 = vadd.f32 0.0, %v731
        %733 = vmatmul.f32.gmra.mxu0 %v574
        %v734 = vpop.f32.mrf.mxu0
        %v735 = vadd.f32 0.0, %v734
        %736 = vmatmul.f32.gmra.mxu0 %v577
        %v737 = vpop.f32.mrf.mxu0
        %v738 = vadd.f32 0.0, %v737
        %739 = vmatmul.f32.gmra.mxu0 %v580
        %v740 = vpop.f32.mrf.mxu0
        %v741 = vadd.f32 0.0, %v740
        %742 = vmatmul.f32.gmra.mxu0 %v583
        %v743 = vpop.f32.mrf.mxu0
        %v744 = vadd.f32 0.0, %v743
        %745 = vmatmul.f32.gmra.mxu0 %v586
        %v746 = vpop.f32.mrf.mxu0
        %v747 = vadd.f32 0.0, %v746
        %748 = vmatmul.f32.gmra.mxu0 %v589
        %v749 = vpop.f32.mrf.mxu0
        %v750 = vadd.f32 0.0, %v749
        %751 = vmatmul.f32.gmra.mxu0 %v592
        %v752 = vpop.f32.mrf.mxu0
        %v753 = vadd.f32 0.0, %v752
        %754 = vmatmul.f32.gmra.mxu0 %v595
        %v755 = vpop.f32.mrf.mxu0
        %v756 = vadd.f32 0.0, %v755
        %757 = vmatmul.f32.gmra.mxu0 %v598
        %v758 = vpop.f32.mrf.mxu0
        %v759 = vadd.f32 0.0, %v758
        %760 = vmatmul.f32.gmra.mxu0 %v601
        %v761 = vpop.f32.mrf.mxu0
        %v762 = vadd.f32 0.0, %v761
        %763 = vmatmul.f32.gmra.mxu0 %v604
        %v764 = vpop.f32.mrf.mxu0
        %v765 = vadd.f32 0.0, %v764
        %766 = vmatmul.f32.gmra.mxu0 %v607
        %v767 = vpop.f32.mrf.mxu0
        %v768 = vadd.f32 0.0, %v767
        %769 = vmatmul.f32.gmra.mxu0 %v610
        %v770 = vpop.f32.mrf.mxu0
        %v771 = vadd.f32 0.0, %v770
        %772 = vmatmul.f32.gmra.mxu0 %v613
        %v773 = vpop.f32.mrf.mxu0
        %v774 = vadd.f32 0.0, %v773
        %775 = vmatmul.f32.gmra.mxu0 %v616
        %v776 = vpop.f32.mrf.mxu0
        %v777 = vadd.f32 0.0, %v776
        %778 = vdwg.mxu0
        %779 = vmatpush.xpose.msra.mxu0 %v712
        %780 = vmatpush.xpose.msra.mxu0 %v709
        %781 = vmatpush.xpose.msra.mxu0 %v706
        %782 = vmatpush.xpose.msra.mxu0 %v703
        %783 = vmatpush.xpose.msra.mxu0 %v700
        %784 = vmatpush.xpose.msra.mxu0 %v697
        %785 = vmatpush.xpose.msra.mxu0 %v694
        %786 = vmatpush.xpose.msra.mxu0 %v691
        %787 = vmatpush.xpose.msra.mxu0 %v688
        %788 = vmatpush.xpose.msra.mxu0 %v685
        %789 = vmatpush.xpose.msra.mxu0 %v682
        %790 = vmatpush.xpose.msra.mxu0 %v679
        %791 = vmatpush.xpose.msra.mxu0 %v676
        %792 = vmatpush.xpose.msra.mxu0 %v673
        %793 = vmatpush.xpose.msra.mxu0 %v670
        %794 = vmatpush.xpose.msra.mxu0 %v667
        %795 = vmatmul.f32.gmra.mxu0 %v571
        %v796 = vpop.f32.mrf.mxu0
        %v797 = vadd.f32 0.0, %v796
        %798 = vmatmul.f32.gmra.mxu0 %v574
        %v799 = vpop.f32.mrf.mxu0
        %v800 = vadd.f32 0.0, %v799
        %801 = vmatmul.f32.gmra.mxu0 %v577
        %v802 = vpop.f32.mrf.mxu0
        %v803 = vadd.f32 0.0, %v802
        %804 = vmatmul.f32.gmra.mxu0 %v580
        %v805 = vpop.f32.mrf.mxu0
        %v806 = vadd.f32 0.0, %v805
        %807 = vmatmul.f32.gmra.mxu0 %v583
        %v808 = vpop.f32.mrf.mxu0
        %v809 = vadd.f32 0.0, %v808
        %810 = vmatmul.f32.gmra.mxu0 %v586
        %v811 = vpop.f32.mrf.mxu0
        %v812 = vadd.f32 0.0, %v811
        %813 = vmatmul.f32.gmra.mxu0 %v589
        %v814 = vpop.f32.mrf.mxu0
        %v815 = vadd.f32 0.0, %v814
        %816 = vmatmul.f32.gmra.mxu0 %v592
        %v817 = vpop.f32.mrf.mxu0
        %v818 = vadd.f32 0.0, %v817
        %819 = vmatmul.f32.gmra.mxu0 %v595
        %v820 = vpop.f32.mrf.mxu0
        %v821 = vadd.f32 0.0, %v820
        %822 = vmatmul.f32.gmra.mxu0 %v598
        %v823 = vpop.f32.mrf.mxu0
        %v824 = vadd.f32 0.0, %v823
        %825 = vmatmul.f32.gmra.mxu0 %v601
        %v826 = vpop.f32.mrf.mxu0
        %v827 = vadd.f32 0.0, %v826
        %828 = vmatmul.f32.gmra.mxu0 %v604
        %v829 = vpop.f32.mrf.mxu0
        %v830 = vadd.f32 0.0, %v829
        %831 = vmatmul.f32.gmra.mxu0 %v607
        %v832 = vpop.f32.mrf.mxu0
        %v833 = vadd.f32 0.0, %v832
        %834 = vmatmul.f32.gmra.mxu0 %v610
        %v835 = vpop.f32.mrf.mxu0
        %v836 = vadd.f32 0.0, %v835
        %837 = vmatmul.f32.gmra.mxu0 %v613
        %v838 = vpop.f32.mrf.mxu0
        %v839 = vadd.f32 0.0, %v838
        %840 = vmatmul.f32.gmra.mxu0 %v616
        %v841 = vpop.f32.mrf.mxu0
        %v842 = vadd.f32 0.0, %v841
        %843 = vdwg.mxu0
        %845 = vrot.lane.b32.xlu0 %v797, 256
        %v846 = vpop.permute.xlu0 %845
        %s848 = sor.u32 256, 8
        %849 = vrot.lane.b32.xlu0 %v800, %s848
        %v850 = vpop.permute.xlu0 %849
        %s852 = sor.u32 256, 16
        %853 = vrot.lane.b32.xlu0 %v803, %s852
        %v854 = vpop.permute.xlu0 %853
        %s856 = sor.u32 256, 24
        %857 = vrot.lane.b32.xlu0 %v806, %s856
        %v858 = vpop.permute.xlu0 %857
        %s860 = sor.u32 256, 32
        %861 = vrot.lane.b32.xlu0 %v809, %s860
        %v862 = vpop.permute.xlu0 %861
        %s864 = sor.u32 256, 40
        %865 = vrot.lane.b32.xlu0 %v812, %s864
        %v866 = vpop.permute.xlu0 %865
        %s868 = sor.u32 256, 48
        %869 = vrot.lane.b32.xlu0 %v815, %s868
        %v870 = vpop.permute.xlu0 %869
        %s872 = sor.u32 256, 56
        %873 = vrot.lane.b32.xlu0 %v818, %s872
        %v874 = vpop.permute.xlu0 %873
        %s876 = sor.u32 256, 64
        %877 = vrot.lane.b32.xlu0 %v821, %s876
        %v878 = vpop.permute.xlu0 %877
        %s880 = sor.u32 256, 72
        %881 = vrot.lane.b32.xlu0 %v824, %s880
        %v882 = vpop.permute.xlu0 %881
        %s884 = sor.u32 256, 80
        %885 = vrot.lane.b32.xlu0 %v827, %s884
        %v886 = vpop.permute.xlu0 %885
        %s888 = sor.u32 256, 88
        %889 = vrot.lane.b32.xlu0 %v830, %s888
        %v890 = vpop.permute.xlu0 %889
        %s892 = sor.u32 256, 96
        %893 = vrot.lane.b32.xlu0 %v833, %s892
        %v894 = vpop.permute.xlu0 %893
        %s896 = sor.u32 256, 104
        %897 = vrot.lane.b32.xlu0 %v836, %s896
        %v898 = vpop.permute.xlu0 %897
        %s900 = sor.u32 256, 112
        %901 = vrot.lane.b32.xlu0 %v839, %s900
        %v902 = vpop.permute.xlu0 %901
        %s904 = sor.u32 256, 120
        %905 = vrot.lane.b32.xlu0 %v842, %s904
        %v906 = vpop.permute.xlu0 %905
        %v907 = vadd.f32 %v732, %v846
        %v908 = vadd.f32 %v735, %v850
        %v909 = vadd.f32 %v738, %v854
        %v910 = vadd.f32 %v741, %v858
        %v911 = vadd.f32 %v744, %v862
        %v912 = vadd.f32 %v747, %v866
        %v913 = vadd.f32 %v750, %v870
        %v914 = vadd.f32 %v753, %v874
        %v915 = vadd.f32 %v756, %v878
        %v916 = vadd.f32 %v759, %v882
        %v917 = vadd.f32 %v762, %v886
        %v918 = vadd.f32 %v765, %v890
        %v919 = vadd.f32 %v768, %v894
        %v920 = vadd.f32 %v771, %v898
        %v921 = vadd.f32 %v774, %v902
        %v922 = vadd.f32 %v777, %v906
        %v923 = vsel %vm537, %v907, -inf
        %v924 = vsel %vm538, %v908, -inf
        %v925 = vsel %vm539, %v909, -inf
        %v926 = vsel %vm540, %v910, -inf
        %v927 = vsel %vm541, %v911, -inf
        %v928 = vsel %vm542, %v912, -inf
        %v929 = vsel %vm543, %v913, -inf
        %v930 = vsel %vm544, %v914, -inf
        %v931 = vsel %vm545, %v915, -inf
        %v932 = vsel %vm546, %v916, -inf
        %v933 = vsel %vm547, %v917, -inf
        %v934 = vsel %vm548, %v918, -inf
        %v935 = vsel %vm549, %v919, -inf
        %v936 = vsel %vm550, %v920, -inf
        %v937 = vsel %vm551, %v921, -inf
        %v938 = vsel %vm552, %v922, -inf
        %939 = vmax.xlane.f32.xlu0 %v923
        %v940 = vpop.xlane.xlu0 %939
        %941 = vmax.xlane.f32.xlu0 %v924
        %v942 = vpop.xlane.xlu0 %941
        %943 = vmax.xlane.f32.xlu0 %v925
        %v944 = vpop.xlane.xlu0 %943
        %945 = vmax.xlane.f32.xlu0 %v926
        %v946 = vpop.xlane.xlu0 %945
        %947 = vmax.xlane.f32.xlu0 %v927
        %v948 = vpop.xlane.xlu0 %947
        %949 = vmax.xlane.f32.xlu0 %v928
        %v950 = vpop.xlane.xlu0 %949
        %951 = vmax.xlane.f32.xlu0 %v929
        %v952 = vpop.xlane.xlu0 %951
        %953 = vmax.xlane.f32.xlu0 %v930
        %v954 = vpop.xlane.xlu0 %953
        %955 = vmax.xlane.f32.xlu0 %v931
        %v956 = vpop.xlane.xlu0 %955
        %957 = vmax.xlane.f32.xlu0 %v932
        %v958 = vpop.xlane.xlu0 %957
        %959 = vmax.xlane.f32.xlu0 %v933
        %v960 = vpop.xlane.xlu0 %959
        %961 = vmax.xlane.f32.xlu0 %v934
        %v962 = vpop.xlane.xlu0 %961
        %963 = vmax.xlane.f32.xlu0 %v935
        %v964 = vpop.xlane.xlu0 %963
        %965 = vmax.xlane.f32.xlu0 %v936
        %v966 = vpop.xlane.xlu0 %965
        %967 = vmax.xlane.f32.xlu0 %v937
        %v968 = vpop.xlane.xlu0 %967
        %969 = vmax.xlane.f32.xlu0 %v938
        %v970 = vpop.xlane.xlu0 %969
        %v971 = vsub.f32 %v923, %v940
        %v972 = vsub.f32 %v924, %v942
        %v973 = vsub.f32 %v925, %v944
        %v974 = vsub.f32 %v926, %v946
        %v975 = vsub.f32 %v927, %v948
        %v976 = vsub.f32 %v928, %v950
        %v977 = vsub.f32 %v929, %v952
        %v978 = vsub.f32 %v930, %v954
        %v979 = vsub.f32 %v931, %v956
        %v980 = vsub.f32 %v932, %v958
        %v981 = vsub.f32 %v933, %v960
        %v982 = vsub.f32 %v934, %v962
        %v983 = vsub.f32 %v935, %v964
        %v984 = vsub.f32 %v936, %v966
        %v985 = vsub.f32 %v937, %v968
        %v986 = vsub.f32 %v938, %v970
        %v987 = vmul.f32 %v971, 1.442695
        %v988 = vpow.pop %v987
        %v989 = vmul.f32 %v972, 1.442695
        %v990 = vpow.pop %v989
        %v991 = vmul.f32 %v973, 1.442695
        %v992 = vpow.pop %v991
        %v993 = vmul.f32 %v974, 1.442695
        %v994 = vpow.pop %v993
        %v995 = vmul.f32 %v975, 1.442695
        %v996 = vpow.pop %v995
        %v997 = vmul.f32 %v976, 1.442695
        %v998 = vpow.pop %v997
        %v999 = vmul.f32 %v977, 1.442695
        %v1000 = vpow.pop %v999
        %v1001 = vmul.f32 %v978, 1.442695
        %v1002 = vpow.pop %v1001
        %v1003 = vmul.f32 %v979, 1.442695
        %v1004 = vpow.pop %v1003
        %v1005 = vmul.f32 %v980, 1.442695
        %v1006 = vpow.pop %v1005
        %v1007 = vmul.f32 %v981, 1.442695
        %v1008 = vpow.pop %v1007
        %v1009 = vmul.f32 %v982, 1.442695
        %v1010 = vpow.pop %v1009
        %v1011 = vmul.f32 %v983, 1.442695
        %v1012 = vpow.pop %v1011
        %v1013 = vmul.f32 %v984, 1.442695
        %v1014 = vpow.pop %v1013
        %v1015 = vmul.f32 %v985, 1.442695
        %v1016 = vpow.pop %v1015
        %v1017 = vmul.f32 %v986, 1.442695
        %v1018 = vpow.pop %v1017
        %1019 = vadd.xlane.f32.xlu0 %v988
        %v1020 = vpop.xlane.xlu0 %1019
        %1021 = vadd.xlane.f32.xlu0 %v990
        %v1022 = vpop.xlane.xlu0 %1021
        %1023 = vadd.xlane.f32.xlu0 %v992
        %v1024 = vpop.xlane.xlu0 %1023
        %1025 = vadd.xlane.f32.xlu0 %v994
        %v1026 = vpop.xlane.xlu0 %1025
        %1027 = vadd.xlane.f32.xlu0 %v996
        %v1028 = vpop.xlane.xlu0 %1027
        %1029 = vadd.xlane.f32.xlu0 %v998
        %v1030 = vpop.xlane.xlu0 %1029
        %1031 = vadd.xlane.f32.xlu0 %v1000
        %v1032 = vpop.xlane.xlu0 %1031
        %1033 = vadd.xlane.f32.xlu0 %v1002
        %v1034 = vpop.xlane.xlu0 %1033
        %1035 = vadd.xlane.f32.xlu0 %v1004
        %v1036 = vpop.xlane.xlu0 %1035
        %1037 = vadd.xlane.f32.xlu0 %v1006
        %v1038 = vpop.xlane.xlu0 %1037
        %1039 = vadd.xlane.f32.xlu0 %v1008
        %v1040 = vpop.xlane.xlu0 %1039
        %1041 = vadd.xlane.f32.xlu0 %v1010
        %v1042 = vpop.xlane.xlu0 %1041
        %1043 = vadd.xlane.f32.xlu0 %v1012
        %v1044 = vpop.xlane.xlu0 %1043
        %1045 = vadd.xlane.f32.xlu0 %v1014
        %v1046 = vpop.xlane.xlu0 %1045
        %1047 = vadd.xlane.f32.xlu0 %v1016
        %v1048 = vpop.xlane.xlu0 %1047
        %1049 = vadd.xlane.f32.xlu0 %v1018
        %v1050 = vpop.xlane.xlu0 %1049
        %v1051 = vrcp.pop %v1020
        %v1052 = vrcp.pop %v1022
        %v1053 = vrcp.pop %v1024
        %v1054 = vrcp.pop %v1026
        %v1055 = vrcp.pop %v1028
        %v1056 = vrcp.pop %v1030
        %v1057 = vrcp.pop %v1032
        %v1058 = vrcp.pop %v1034
        %v1059 = vrcp.pop %v1036
        %v1060 = vrcp.pop %v1038
        %v1061 = vrcp.pop %v1040
        %v1062 = vrcp.pop %v1042
        %v1063 = vrcp.pop %v1044
        %v1064 = vrcp.pop %v1046
        %v1065 = vrcp.pop %v1048
        %v1066 = vrcp.pop %v1050
        %v1067 = vmul.f32 %v1020, %v1051
        %v1068 = vmul.f32 %v1022, %v1052
        %v1069 = vmul.f32 %v1024, %v1053
        %v1070 = vmul.f32 %v1026, %v1054
        %v1071 = vmul.f32 %v1028, %v1055
        %v1072 = vmul.f32 %v1030, %v1056
        %v1073 = vmul.f32 %v1032, %v1057
        %v1074 = vmul.f32 %v1034, %v1058
        %v1075 = vmul.f32 %v1036, %v1059
        %v1076 = vmul.f32 %v1038, %v1060
        %v1077 = vmul.f32 %v1040, %v1061
        %v1078 = vmul.f32 %v1042, %v1062
        %v1079 = vmul.f32 %v1044, %v1063
        %v1080 = vmul.f32 %v1046, %v1064
        %v1081 = vmul.f32 %v1048, %v1065
        %v1082 = vmul.f32 %v1050, %v1066
        %v1083 = vsub.f32 2.0, %v1067
        %v1084 = vsub.f32 2.0, %v1068
        %v1085 = vsub.f32 2.0, %v1069
        %v1086 = vsub.f32 2.0, %v1070
        %v1087 = vsub.f32 2.0, %v1071
        %v1088 = vsub.f32 2.0, %v1072
        %v1089 = vsub.f32 2.0, %v1073
        %v1090 = vsub.f32 2.0, %v1074
        %v1091 = vsub.f32 2.0, %v1075
        %v1092 = vsub.f32 2.0, %v1076
        %v1093 = vsub.f32 2.0, %v1077
        %v1094 = vsub.f32 2.0, %v1078
        %v1095 = vsub.f32 2.0, %v1079
        %v1096 = vsub.f32 2.0, %v1080
        %v1097 = vsub.f32 2.0, %v1081
        %v1098 = vsub.f32 2.0, %v1082
        %v1099 = vmul.f32 %v1051, %v1083
        %v1100 = vmul.f32 %v1052, %v1084
        %v1101 = vmul.f32 %v1053, %v1085
        %v1102 = vmul.f32 %v1054, %v1086
        %v1103 = vmul.f32 %v1055, %v1087
        %v1104 = vmul.f32 %v1056, %v1088
        %v1105 = vmul.f32 %v1057, %v1089
        %v1106 = vmul.f32 %v1058, %v1090
        %v1107 = vmul.f32 %v1059, %v1091
        %v1108 = vmul.f32 %v1060, %v1092
        %v1109 = vmul.f32 %v1061, %v1093
        %v1110 = vmul.f32 %v1062, %v1094
        %v1111 = vmul.f32 %v1063, %v1095
        %v1112 = vmul.f32 %v1064, %v1096
        %v1113 = vmul.f32 %v1065, %v1097
        %v1114 = vmul.f32 %v1066, %v1098
        %v1115 = vmul.f32 %v988, %v1099
        %v1116 = vmul.f32 %v990, %v1100
        %v1117 = vmul.f32 %v992, %v1101
        %v1118 = vmul.f32 %v994, %v1102
        %v1119 = vmul.f32 %v996, %v1103
        %v1120 = vmul.f32 %v998, %v1104
        %v1121 = vmul.f32 %v1000, %v1105
        %v1122 = vmul.f32 %v1002, %v1106
        %v1123 = vmul.f32 %v1004, %v1107
        %v1124 = vmul.f32 %v1006, %v1108
        %v1125 = vmul.f32 %v1008, %v1109
        %v1126 = vmul.f32 %v1010, %v1110
        %v1127 = vmul.f32 %v1012, %v1111
        %v1128 = vmul.f32 %v1014, %v1112
        %v1129 = vmul.f32 %v1016, %v1113
        %v1130 = vmul.f32 %v1018, %v1114
        %1131 = vmatpush.msra.mxu0 %v500
        %1132 = vmatpush.msra.mxu0 %v497
        %1133 = vmatpush.msra.mxu0 %v494
        %1134 = vmatpush.msra.mxu0 %v491
        %1135 = vmatpush.msra.mxu0 %v488
        %1136 = vmatpush.msra.mxu0 %v485
        %1137 = vmatpush.msra.mxu0 %v482
        %1138 = vmatpush.msra.mxu0 %v479
        %1139 = vmatpush.msra.mxu0 %v476
        %1140 = vmatpush.msra.mxu0 %v473
        %1141 = vmatpush.msra.mxu0 %v470
        %1142 = vmatpush.msra.mxu0 %v467
        %1143 = vmatpush.msra.mxu0 %v464
        %1144 = vmatpush.msra.mxu0 %v461
        %1145 = vmatpush.msra.mxu0 %v458
        %1146 = vmatpush.msra.mxu0 %v455
        %1147 = vmatmul.f32.gmra.mxu0 %v1115
        %v1148 = vpop.f32.mrf.mxu0
        %v1149 = vadd.f32 0.0, %v1148
        %1150 = vmatmul.f32.gmra.mxu0 %v1116
        %v1151 = vpop.f32.mrf.mxu0
        %v1152 = vadd.f32 0.0, %v1151
        %1153 = vmatmul.f32.gmra.mxu0 %v1117
        %v1154 = vpop.f32.mrf.mxu0
        %v1155 = vadd.f32 0.0, %v1154
        %1156 = vmatmul.f32.gmra.mxu0 %v1118
        %v1157 = vpop.f32.mrf.mxu0
        %v1158 = vadd.f32 0.0, %v1157
        %1159 = vmatmul.f32.gmra.mxu0 %v1119
        %v1160 = vpop.f32.mrf.mxu0
        %v1161 = vadd.f32 0.0, %v1160
        %1162 = vmatmul.f32.gmra.mxu0 %v1120
        %v1163 = vpop.f32.mrf.mxu0
        %v1164 = vadd.f32 0.0, %v1163
        %1165 = vmatmul.f32.gmra.mxu0 %v1121
        %v1166 = vpop.f32.mrf.mxu0
        %v1167 = vadd.f32 0.0, %v1166
        %1168 = vmatmul.f32.gmra.mxu0 %v1122
        %v1169 = vpop.f32.mrf.mxu0
        %v1170 = vadd.f32 0.0, %v1169
        %1171 = vmatmul.f32.gmra.mxu0 %v1123
        %v1172 = vpop.f32.mrf.mxu0
        %v1173 = vadd.f32 0.0, %v1172
        %1174 = vmatmul.f32.gmra.mxu0 %v1124
        %v1175 = vpop.f32.mrf.mxu0
        %v1176 = vadd.f32 0.0, %v1175
        %1177 = vmatmul.f32.gmra.mxu0 %v1125
        %v1178 = vpop.f32.mrf.mxu0
        %v1179 = vadd.f32 0.0, %v1178
        %1180 = vmatmul.f32.gmra.mxu0 %v1126
        %v1181 = vpop.f32.mrf.mxu0
        %v1182 = vadd.f32 0.0, %v1181
        %1183 = vmatmul.f32.gmra.mxu0 %v1127
        %v1184 = vpop.f32.mrf.mxu0
        %v1185 = vadd.f32 0.0, %v1184
        %1186 = vmatmul.f32.gmra.mxu0 %v1128
        %v1187 = vpop.f32.mrf.mxu0
        %v1188 = vadd.f32 0.0, %v1187
        %1189 = vmatmul.f32.gmra.mxu0 %v1129
        %v1190 = vpop.f32.mrf.mxu0
        %v1191 = vadd.f32 0.0, %v1190
        %1192 = vmatmul.f32.gmra.mxu0 %v1130
        %v1193 = vpop.f32.mrf.mxu0
        %v1194 = vadd.f32 0.0, %v1193
        %1195 = vdwg.mxu0
        %1196 = vrot.lane.b32.xlu0 %v502, 32
        %v1197 = vpop.permute.xlu0 %1196
        %1198 = vrot.lane.b32.xlu0 %v503, 32
        %v1199 = vpop.permute.xlu0 %1198
        %1200 = vrot.lane.b32.xlu0 %v504, 32
        %v1201 = vpop.permute.xlu0 %1200
        %1202 = vrot.lane.b32.xlu0 %v505, 32
        %v1203 = vpop.permute.xlu0 %1202
        %1204 = vrot.lane.b32.xlu0 %v506, 32
        %v1205 = vpop.permute.xlu0 %1204
        %1206 = vrot.lane.b32.xlu0 %v507, 32
        %v1207 = vpop.permute.xlu0 %1206
        %1208 = vrot.lane.b32.xlu0 %v508, 32
        %v1209 = vpop.permute.xlu0 %1208
        %1210 = vrot.lane.b32.xlu0 %v509, 32
        %v1211 = vpop.permute.xlu0 %1210
        %1212 = vrot.lane.b32.xlu0 %v510, 32
        %v1213 = vpop.permute.xlu0 %1212
        %1214 = vrot.lane.b32.xlu0 %v511, 32
        %v1215 = vpop.permute.xlu0 %1214
        %1216 = vrot.lane.b32.xlu0 %v512, 32
        %v1217 = vpop.permute.xlu0 %1216
        %1218 = vrot.lane.b32.xlu0 %v513, 32
        %v1219 = vpop.permute.xlu0 %1218
        %1220 = vrot.lane.b32.xlu0 %v514, 32
        %v1221 = vpop.permute.xlu0 %1220
        %1222 = vrot.lane.b32.xlu0 %v515, 32
        %v1223 = vpop.permute.xlu0 %1222
        %1224 = vrot.lane.b32.xlu0 %v516, 32
        %v1225 = vpop.permute.xlu0 %1224
        %1226 = vrot.lane.b32.xlu0 %v517, 32
        %v1227 = vpop.permute.xlu0 %1226
        %1228 = vrot.lane.b32.xlu0 %v553, 96
        %v1229 = vpop.permute.xlu0 %1228
        %1230 = vrot.lane.b32.xlu0 %v554, 96
        %v1231 = vpop.permute.xlu0 %1230
        %1232 = vrot.lane.b32.xlu0 %v555, 96
        %v1233 = vpop.permute.xlu0 %1232
        %1234 = vrot.lane.b32.xlu0 %v556, 96
        %v1235 = vpop.permute.xlu0 %1234
        %1236 = vrot.lane.b32.xlu0 %v557, 96
        %v1237 = vpop.permute.xlu0 %1236
        %1238 = vrot.lane.b32.xlu0 %v558, 96
        %v1239 = vpop.permute.xlu0 %1238
        %1240 = vrot.lane.b32.xlu0 %v559, 96
        %v1241 = vpop.permute.xlu0 %1240
        %1242 = vrot.lane.b32.xlu0 %v560, 96
        %v1243 = vpop.permute.xlu0 %1242
        %1244 = vrot.lane.b32.xlu0 %v561, 96
        %v1245 = vpop.permute.xlu0 %1244
        %1246 = vrot.lane.b32.xlu0 %v562, 96
        %v1247 = vpop.permute.xlu0 %1246
        %1248 = vrot.lane.b32.xlu0 %v563, 96
        %v1249 = vpop.permute.xlu0 %1248
        %1250 = vrot.lane.b32.xlu0 %v564, 96
        %v1251 = vpop.permute.xlu0 %1250
        %1252 = vrot.lane.b32.xlu0 %v565, 96
        %v1253 = vpop.permute.xlu0 %1252
        %1254 = vrot.lane.b32.xlu0 %v566, 96
        %v1255 = vpop.permute.xlu0 %1254
        %1256 = vrot.lane.b32.xlu0 %v567, 96
        %v1257 = vpop.permute.xlu0 %1256
        %1258 = vrot.lane.b32.xlu0 %v568, 96
        %v1259 = vpop.permute.xlu0 %1258
        %1260 = vrot.lane.b32.xlu0 %v390, 96
        %v1261 = vpop.permute.xlu0 %1260
        %1262 = vrot.lane.b32.xlu0 %v393, 96
        %v1263 = vpop.permute.xlu0 %1262
        %1264 = vrot.lane.b32.xlu0 %v396, 96
        %v1265 = vpop.permute.xlu0 %1264
        %1266 = vrot.lane.b32.xlu0 %v399, 96
        %v1267 = vpop.permute.xlu0 %1266
        %1268 = vrot.lane.b32.xlu0 %v402, 96
        %v1269 = vpop.permute.xlu0 %1268
        %1270 = vrot.lane.b32.xlu0 %v405, 96
        %v1271 = vpop.permute.xlu0 %1270
        %1272 = vrot.lane.b32.xlu0 %v408, 96
        %v1273 = vpop.permute.xlu0 %1272
        %1274 = vrot.lane.b32.xlu0 %v411, 96
        %v1275 = vpop.permute.xlu0 %1274
        %1276 = vrot.lane.b32.xlu0 %v414, 96
        %v1277 = vpop.permute.xlu0 %1276
        %1278 = vrot.lane.b32.xlu0 %v417, 96
        %v1279 = vpop.permute.xlu0 %1278
        %1280 = vrot.lane.b32.xlu0 %v420, 96
        %v1281 = vpop.permute.xlu0 %1280
        %1282 = vrot.lane.b32.xlu0 %v423, 96
        %v1283 = vpop.permute.xlu0 %1282
        %1284 = vrot.lane.b32.xlu0 %v426, 96
        %v1285 = vpop.permute.xlu0 %1284
        %1286 = vrot.lane.b32.xlu0 %v429, 96
        %v1287 = vpop.permute.xlu0 %1286
        %1288 = vrot.lane.b32.xlu0 %v432, 96
        %v1289 = vpop.permute.xlu0 %1288
        %1290 = vrot.lane.b32.xlu0 %v435, 96
        %v1291 = vpop.permute.xlu0 %1290
        %1292 = vrot.lane.b32.xlu0 %v1197, 96
        %v1293 = vpop.permute.xlu0 %1292
        %1294 = vrot.lane.b32.xlu0 %v1199, 96
        %v1295 = vpop.permute.xlu0 %1294
        %1296 = vrot.lane.b32.xlu0 %v1201, 96
        %v1297 = vpop.permute.xlu0 %1296
        %1298 = vrot.lane.b32.xlu0 %v1203, 96
        %v1299 = vpop.permute.xlu0 %1298
        %1300 = vrot.lane.b32.xlu0 %v1205, 96
        %v1301 = vpop.permute.xlu0 %1300
        %1302 = vrot.lane.b32.xlu0 %v1207, 96
        %v1303 = vpop.permute.xlu0 %1302
        %1304 = vrot.lane.b32.xlu0 %v1209, 96
        %v1305 = vpop.permute.xlu0 %1304
        %1306 = vrot.lane.b32.xlu0 %v1211, 96
        %v1307 = vpop.permute.xlu0 %1306
        %1308 = vrot.lane.b32.xlu0 %v1213, 96
        %v1309 = vpop.permute.xlu0 %1308
        %1310 = vrot.lane.b32.xlu0 %v1215, 96
        %v1311 = vpop.permute.xlu0 %1310
        %1312 = vrot.lane.b32.xlu0 %v1217, 96
        %v1313 = vpop.permute.xlu0 %1312
        %1314 = vrot.lane.b32.xlu0 %v1219, 96
        %v1315 = vpop.permute.xlu0 %1314
        %1316 = vrot.lane.b32.xlu0 %v1221, 96
        %v1317 = vpop.permute.xlu0 %1316
        %1318 = vrot.lane.b32.xlu0 %v1223, 96
        %v1319 = vpop.permute.xlu0 %1318
        %1320 = vrot.lane.b32.xlu0 %v1225, 96
        %v1321 = vpop.permute.xlu0 %1320
        %1322 = vrot.lane.b32.xlu0 %v1227, 96
        %v1323 = vpop.permute.xlu0 %1322
        %v1324 = vsel %vm569, %v1229, 0
        %v1326 = vsel %vm569, %v1231, 0
        %v1328 = vsel %vm569, %v1233, 0
        %v1330 = vsel %vm569, %v1235, 0
        %v1332 = vsel %vm569, %v1237, 0
        %v1334 = vsel %vm569, %v1239, 0
        %v1336 = vsel %vm569, %v1241, 0
        %v1338 = vsel %vm569, %v1243, 0
        %v1340 = vsel %vm569, %v1245, 0
        %v1342 = vsel %vm569, %v1247, 0
        %v1344 = vsel %vm569, %v1249, 0
        %v1346 = vsel %vm569, %v1251, 0
        %v1348 = vsel %vm569, %v1253, 0
        %v1350 = vsel %vm569, %v1255, 0
        %v1352 = vsel %vm569, %v1257, 0
        %v1354 = vsel %vm569, %v1259, 0
        %v1356 = vsel %vm569, %v1261, 0
        %v1358 = vsel %vm569, %v1263, 0
        %v1360 = vsel %vm569, %v1265, 0
        %v1362 = vsel %vm569, %v1267, 0
        %v1364 = vsel %vm569, %v1269, 0
        %v1366 = vsel %vm569, %v1271, 0
        %v1368 = vsel %vm569, %v1273, 0
        %v1370 = vsel %vm569, %v1275, 0
        %v1372 = vsel %vm569, %v1277, 0
        %v1374 = vsel %vm569, %v1279, 0
        %v1376 = vsel %vm569, %v1281, 0
        %v1378 = vsel %vm569, %v1283, 0
        %v1380 = vsel %vm569, %v1285, 0
        %v1382 = vsel %vm569, %v1287, 0
        %v1384 = vsel %vm569, %v1289, 0
        %v1386 = vsel %vm569, %v1291, 0
        %v1388 = vsel %vm569, %v1293, 0
        %v1390 = vsel %vm569, %v1295, 0
        %v1392 = vsel %vm569, %v1297, 0
        %v1394 = vsel %vm569, %v1299, 0
        %v1396 = vsel %vm569, %v1301, 0
        %v1398 = vsel %vm569, %v1303, 0
        %v1400 = vsel %vm569, %v1305, 0
        %v1402 = vsel %vm569, %v1307, 0
        %v1404 = vsel %vm569, %v1309, 0
        %v1406 = vsel %vm569, %v1311, 0
        %v1408 = vsel %vm569, %v1313, 0
        %v1410 = vsel %vm569, %v1315, 0
        %v1412 = vsel %vm569, %v1317, 0
        %v1414 = vsel %vm569, %v1319, 0
        %v1416 = vsel %vm569, %v1321, 0
        %v1418 = vsel %vm569, %v1323, 0
        %1420 = vmatpush.xpose.msra.mxu0 %v1386
        %1421 = vmatpush.xpose.msra.mxu0 %v1384
        %1422 = vmatpush.xpose.msra.mxu0 %v1382
        %1423 = vmatpush.xpose.msra.mxu0 %v1380
        %1424 = vmatpush.xpose.msra.mxu0 %v1378
        %1425 = vmatpush.xpose.msra.mxu0 %v1376
        %1426 = vmatpush.xpose.msra.mxu0 %v1374
        %1427 = vmatpush.xpose.msra.mxu0 %v1372
        %1428 = vmatpush.xpose.msra.mxu0 %v1370
        %1429 = vmatpush.xpose.msra.mxu0 %v1368
        %1430 = vmatpush.xpose.msra.mxu0 %v1366
        %1431 = vmatpush.xpose.msra.mxu0 %v1364
        %1432 = vmatpush.xpose.msra.mxu0 %v1362
        %1433 = vmatpush.xpose.msra.mxu0 %v1360
        %1434 = vmatpush.xpose.msra.mxu0 %v1358
        %1435 = vmatpush.xpose.msra.mxu0 %v1356
        %1436 = vmatmul.f32.gmra.mxu0 %v1324
        %v1437 = vpop.f32.mrf.mxu0
        %v1438 = vadd.f32 0.0, %v1437
        %1439 = vmatmul.f32.gmra.mxu0 %v1326
        %v1440 = vpop.f32.mrf.mxu0
        %v1441 = vadd.f32 0.0, %v1440
        %1442 = vmatmul.f32.gmra.mxu0 %v1328
        %v1443 = vpop.f32.mrf.mxu0
        %v1444 = vadd.f32 0.0, %v1443
        %1445 = vmatmul.f32.gmra.mxu0 %v1330
        %v1446 = vpop.f32.mrf.mxu0
        %v1447 = vadd.f32 0.0, %v1446
        %1448 = vmatmul.f32.gmra.mxu0 %v1332
        %v1449 = vpop.f32.mrf.mxu0
        %v1450 = vadd.f32 0.0, %v1449
        %1451 = vmatmul.f32.gmra.mxu0 %v1334
        %v1452 = vpop.f32.mrf.mxu0
        %v1453 = vadd.f32 0.0, %v1452
        %1454 = vmatmul.f32.gmra.mxu0 %v1336
        %v1455 = vpop.f32.mrf.mxu0
        %v1456 = vadd.f32 0.0, %v1455
        %1457 = vmatmul.f32.gmra.mxu0 %v1338
        %v1458 = vpop.f32.mrf.mxu0
        %v1459 = vadd.f32 0.0, %v1458
        %1460 = vmatmul.f32.gmra.mxu0 %v1340
        %v1461 = vpop.f32.mrf.mxu0
        %v1462 = vadd.f32 0.0, %v1461
        %1463 = vmatmul.f32.gmra.mxu0 %v1342
        %v1464 = vpop.f32.mrf.mxu0
        %v1465 = vadd.f32 0.0, %v1464
        %1466 = vmatmul.f32.gmra.mxu0 %v1344
        %v1467 = vpop.f32.mrf.mxu0
        %v1468 = vadd.f32 0.0, %v1467
        %1469 = vmatmul.f32.gmra.mxu0 %v1346
        %v1470 = vpop.f32.mrf.mxu0
        %v1471 = vadd.f32 0.0, %v1470
        %1472 = vmatmul.f32.gmra.mxu0 %v1348
        %v1473 = vpop.f32.mrf.mxu0
        %v1474 = vadd.f32 0.0, %v1473
        %1475 = vmatmul.f32.gmra.mxu0 %v1350
        %v1476 = vpop.f32.mrf.mxu0
        %v1477 = vadd.f32 0.0, %v1476
        %1478 = vmatmul.f32.gmra.mxu0 %v1352
        %v1479 = vpop.f32.mrf.mxu0
        %v1480 = vadd.f32 0.0, %v1479
        %1481 = vmatmul.f32.gmra.mxu0 %v1354
        %v1482 = vpop.f32.mrf.mxu0
        %v1483 = vadd.f32 0.0, %v1482
        %1484 = vdwg.mxu0
        %1485 = vmatpush.xpose.msra.mxu0 %v1418
        %1486 = vmatpush.xpose.msra.mxu0 %v1416
        %1487 = vmatpush.xpose.msra.mxu0 %v1414
        %1488 = vmatpush.xpose.msra.mxu0 %v1412
        %1489 = vmatpush.xpose.msra.mxu0 %v1410
        %1490 = vmatpush.xpose.msra.mxu0 %v1408
        %1491 = vmatpush.xpose.msra.mxu0 %v1406
        %1492 = vmatpush.xpose.msra.mxu0 %v1404
        %1493 = vmatpush.xpose.msra.mxu0 %v1402
        %1494 = vmatpush.xpose.msra.mxu0 %v1400
        %1495 = vmatpush.xpose.msra.mxu0 %v1398
        %1496 = vmatpush.xpose.msra.mxu0 %v1396
        %1497 = vmatpush.xpose.msra.mxu0 %v1394
        %1498 = vmatpush.xpose.msra.mxu0 %v1392
        %1499 = vmatpush.xpose.msra.mxu0 %v1390
        %1500 = vmatpush.xpose.msra.mxu0 %v1388
        %1501 = vmatmul.f32.gmra.mxu0 %v1324
        %v1502 = vpop.f32.mrf.mxu0
        %v1503 = vadd.f32 0.0, %v1502
        %1504 = vmatmul.f32.gmra.mxu0 %v1326
        %v1505 = vpop.f32.mrf.mxu0
        %v1506 = vadd.f32 0.0, %v1505
        %1507 = vmatmul.f32.gmra.mxu0 %v1328
        %v1508 = vpop.f32.mrf.mxu0
        %v1509 = vadd.f32 0.0, %v1508
        %1510 = vmatmul.f32.gmra.mxu0 %v1330
        %v1511 = vpop.f32.mrf.mxu0
        %v1512 = vadd.f32 0.0, %v1511
        %1513 = vmatmul.f32.gmra.mxu0 %v1332
        %v1514 = vpop.f32.mrf.mxu0
        %v1515 = vadd.f32 0.0, %v1514
        %1516 = vmatmul.f32.gmra.mxu0 %v1334
        %v1517 = vpop.f32.mrf.mxu0
        %v1518 = vadd.f32 0.0, %v1517
        %1519 = vmatmul.f32.gmra.mxu0 %v1336
        %v1520 = vpop.f32.mrf.mxu0
        %v1521 = vadd.f32 0.0, %v1520
        %1522 = vmatmul.f32.gmra.mxu0 %v1338
        %v1523 = vpop.f32.mrf.mxu0
        %v1524 = vadd.f32 0.0, %v1523
        %1525 = vmatmul.f32.gmra.mxu0 %v1340
        %v1526 = vpop.f32.mrf.mxu0
        %v1527 = vadd.f32 0.0, %v1526
        %1528 = vmatmul.f32.gmra.mxu0 %v1342
        %v1529 = vpop.f32.mrf.mxu0
        %v1530 = vadd.f32 0.0, %v1529
        %1531 = vmatmul.f32.gmra.mxu0 %v1344
        %v1532 = vpop.f32.mrf.mxu0
        %v1533 = vadd.f32 0.0, %v1532
        %1534 = vmatmul.f32.gmra.mxu0 %v1346
        %v1535 = vpop.f32.mrf.mxu0
        %v1536 = vadd.f32 0.0, %v1535
        %1537 = vmatmul.f32.gmra.mxu0 %v1348
        %v1538 = vpop.f32.mrf.mxu0
        %v1539 = vadd.f32 0.0, %v1538
        %1540 = vmatmul.f32.gmra.mxu0 %v1350
        %v1541 = vpop.f32.mrf.mxu0
        %v1542 = vadd.f32 0.0, %v1541
        %1543 = vmatmul.f32.gmra.mxu0 %v1352
        %v1544 = vpop.f32.mrf.mxu0
        %v1545 = vadd.f32 0.0, %v1544
        %1546 = vmatmul.f32.gmra.mxu0 %v1354
        %v1547 = vpop.f32.mrf.mxu0
        %v1548 = vadd.f32 0.0, %v1547
        %1549 = vdwg.mxu0
        %1551 = vrot.lane.b32.xlu0 %v1503, 256
        %v1552 = vpop.permute.xlu0 %1551
        %s1554 = sor.u32 256, 8
        %1555 = vrot.lane.b32.xlu0 %v1506, %s1554
        %v1556 = vpop.permute.xlu0 %1555
        %s1558 = sor.u32 256, 16
        %1559 = vrot.lane.b32.xlu0 %v1509, %s1558
        %v1560 = vpop.permute.xlu0 %1559
        %s1562 = sor.u32 256, 24
        %1563 = vrot.lane.b32.xlu0 %v1512, %s1562
        %v1564 = vpop.permute.xlu0 %1563
        %s1566 = sor.u32 256, 32
        %1567 = vrot.lane.b32.xlu0 %v1515, %s1566
        %v1568 = vpop.permute.xlu0 %1567
        %s1570 = sor.u32 256, 40
        %1571 = vrot.lane.b32.xlu0 %v1518, %s1570
        %v1572 = vpop.permute.xlu0 %1571
        %s1574 = sor.u32 256, 48
        %1575 = vrot.lane.b32.xlu0 %v1521, %s1574
        %v1576 = vpop.permute.xlu0 %1575
        %s1578 = sor.u32 256, 56
        %1579 = vrot.lane.b32.xlu0 %v1524, %s1578
        %v1580 = vpop.permute.xlu0 %1579
        %s1582 = sor.u32 256, 64
        %1583 = vrot.lane.b32.xlu0 %v1527, %s1582
        %v1584 = vpop.permute.xlu0 %1583
        %s1586 = sor.u32 256, 72
        %1587 = vrot.lane.b32.xlu0 %v1530, %s1586
        %v1588 = vpop.permute.xlu0 %1587
        %s1590 = sor.u32 256, 80
        %1591 = vrot.lane.b32.xlu0 %v1533, %s1590
        %v1592 = vpop.permute.xlu0 %1591
        %s1594 = sor.u32 256, 88
        %1595 = vrot.lane.b32.xlu0 %v1536, %s1594
        %v1596 = vpop.permute.xlu0 %1595
        %s1598 = sor.u32 256, 96
        %1599 = vrot.lane.b32.xlu0 %v1539, %s1598
        %v1600 = vpop.permute.xlu0 %1599
        %s1602 = sor.u32 256, 104
        %1603 = vrot.lane.b32.xlu0 %v1542, %s1602
        %v1604 = vpop.permute.xlu0 %1603
        %s1606 = sor.u32 256, 112
        %1607 = vrot.lane.b32.xlu0 %v1545, %s1606
        %v1608 = vpop.permute.xlu0 %1607
        %s1610 = sor.u32 256, 120
        %1611 = vrot.lane.b32.xlu0 %v1548, %s1610
        %v1612 = vpop.permute.xlu0 %1611
        %v1613 = vadd.f32 %v1438, %v1552
        %v1614 = vadd.f32 %v1441, %v1556
        %v1615 = vadd.f32 %v1444, %v1560
        %v1616 = vadd.f32 %v1447, %v1564
        %v1617 = vadd.f32 %v1450, %v1568
        %v1618 = vadd.f32 %v1453, %v1572
        %v1619 = vadd.f32 %v1456, %v1576
        %v1620 = vadd.f32 %v1459, %v1580
        %v1621 = vadd.f32 %v1462, %v1584
        %v1622 = vadd.f32 %v1465, %v1588
        %v1623 = vadd.f32 %v1468, %v1592
        %v1624 = vadd.f32 %v1471, %v1596
        %v1625 = vadd.f32 %v1474, %v1600
        %v1626 = vadd.f32 %v1477, %v1604
        %v1627 = vadd.f32 %v1480, %v1608
        %v1628 = vadd.f32 %v1483, %v1612
        %v1629 = vsel %vm537, %v1613, -inf
        %v1630 = vsel %vm538, %v1614, -inf
        %v1631 = vsel %vm539, %v1615, -inf
        %v1632 = vsel %vm540, %v1616, -inf
        %v1633 = vsel %vm541, %v1617, -inf
        %v1634 = vsel %vm542, %v1618, -inf
        %v1635 = vsel %vm543, %v1619, -inf
        %v1636 = vsel %vm544, %v1620, -inf
        %v1637 = vsel %vm545, %v1621, -inf
        %v1638 = vsel %vm546, %v1622, -inf
        %v1639 = vsel %vm547, %v1623, -inf
        %v1640 = vsel %vm548, %v1624, -inf
        %v1641 = vsel %vm549, %v1625, -inf
        %v1642 = vsel %vm550, %v1626, -inf
        %v1643 = vsel %vm551, %v1627, -inf
        %v1644 = vsel %vm552, %v1628, -inf
        %1645 = vmax.xlane.f32.xlu0 %v1629
        %v1646 = vpop.xlane.xlu0 %1645
        %1647 = vmax.xlane.f32.xlu0 %v1630
        %v1648 = vpop.xlane.xlu0 %1647
        %1649 = vmax.xlane.f32.xlu0 %v1631
        %v1650 = vpop.xlane.xlu0 %1649
        %1651 = vmax.xlane.f32.xlu0 %v1632
        %v1652 = vpop.xlane.xlu0 %1651
        %1653 = vmax.xlane.f32.xlu0 %v1633
        %v1654 = vpop.xlane.xlu0 %1653
        %1655 = vmax.xlane.f32.xlu0 %v1634
        %v1656 = vpop.xlane.xlu0 %1655
        %1657 = vmax.xlane.f32.xlu0 %v1635
        %v1658 = vpop.xlane.xlu0 %1657
        %1659 = vmax.xlane.f32.xlu0 %v1636
        %v1660 = vpop.xlane.xlu0 %1659
        %1661 = vmax.xlane.f32.xlu0 %v1637
        %v1662 = vpop.xlane.xlu0 %1661
        %1663 = vmax.xlane.f32.xlu0 %v1638
        %v1664 = vpop.xlane.xlu0 %1663
        %1665 = vmax.xlane.f32.xlu0 %v1639
        %v1666 = vpop.xlane.xlu0 %1665
        %1667 = vmax.xlane.f32.xlu0 %v1640
        %v1668 = vpop.xlane.xlu0 %1667
        %1669 = vmax.xlane.f32.xlu0 %v1641
        %v1670 = vpop.xlane.xlu0 %1669
        %1671 = vmax.xlane.f32.xlu0 %v1642
        %v1672 = vpop.xlane.xlu0 %1671
        %1673 = vmax.xlane.f32.xlu0 %v1643
        %v1674 = vpop.xlane.xlu0 %1673
        %1675 = vmax.xlane.f32.xlu0 %v1644
        %v1676 = vpop.xlane.xlu0 %1675
        %v1677 = vsub.f32 %v1629, %v1646
        %v1678 = vsub.f32 %v1630, %v1648
        %v1679 = vsub.f32 %v1631, %v1650
        %v1680 = vsub.f32 %v1632, %v1652
        %v1681 = vsub.f32 %v1633, %v1654
        %v1682 = vsub.f32 %v1634, %v1656
        %v1683 = vsub.f32 %v1635, %v1658
        %v1684 = vsub.f32 %v1636, %v1660
        %v1685 = vsub.f32 %v1637, %v1662
        %v1686 = vsub.f32 %v1638, %v1664
        %v1687 = vsub.f32 %v1639, %v1666
        %v1688 = vsub.f32 %v1640, %v1668
        %v1689 = vsub.f32 %v1641, %v1670
        %v1690 = vsub.f32 %v1642, %v1672
        %v1691 = vsub.f32 %v1643, %v1674
        %v1692 = vsub.f32 %v1644, %v1676
        %v1693 = vmul.f32 %v1677, 1.442695
        %v1694 = vpow.pop %v1693
        %v1695 = vmul.f32 %v1678, 1.442695
        %v1696 = vpow.pop %v1695
        %v1697 = vmul.f32 %v1679, 1.442695
        %v1698 = vpow.pop %v1697
        %v1699 = vmul.f32 %v1680, 1.442695
        %v1700 = vpow.pop %v1699
        %v1701 = vmul.f32 %v1681, 1.442695
        %v1702 = vpow.pop %v1701
        %v1703 = vmul.f32 %v1682, 1.442695
        %v1704 = vpow.pop %v1703
        %v1705 = vmul.f32 %v1683, 1.442695
        %v1706 = vpow.pop %v1705
        %v1707 = vmul.f32 %v1684, 1.442695
        %v1708 = vpow.pop %v1707
        %v1709 = vmul.f32 %v1685, 1.442695
        %v1710 = vpow.pop %v1709
        %v1711 = vmul.f32 %v1686, 1.442695
        %v1712 = vpow.pop %v1711
        %v1713 = vmul.f32 %v1687, 1.442695
        %v1714 = vpow.pop %v1713
        %v1715 = vmul.f32 %v1688, 1.442695
        %v1716 = vpow.pop %v1715
        %v1717 = vmul.f32 %v1689, 1.442695
        %v1718 = vpow.pop %v1717
        %v1719 = vmul.f32 %v1690, 1.442695
        %v1720 = vpow.pop %v1719
        %v1721 = vmul.f32 %v1691, 1.442695
        %v1722 = vpow.pop %v1721
        %v1723 = vmul.f32 %v1692, 1.442695
        %v1724 = vpow.pop %v1723
        %1725 = vadd.xlane.f32.xlu0 %v1694
        %v1726 = vpop.xlane.xlu0 %1725
        %1727 = vadd.xlane.f32.xlu0 %v1696
        %v1728 = vpop.xlane.xlu0 %1727
        %1729 = vadd.xlane.f32.xlu0 %v1698
        %v1730 = vpop.xlane.xlu0 %1729
        %1731 = vadd.xlane.f32.xlu0 %v1700
        %v1732 = vpop.xlane.xlu0 %1731
        %1733 = vadd.xlane.f32.xlu0 %v1702
        %v1734 = vpop.xlane.xlu0 %1733
        %1735 = vadd.xlane.f32.xlu0 %v1704
        %v1736 = vpop.xlane.xlu0 %1735
        %1737 = vadd.xlane.f32.xlu0 %v1706
        %v1738 = vpop.xlane.xlu0 %1737
        %1739 = vadd.xlane.f32.xlu0 %v1708
        %v1740 = vpop.xlane.xlu0 %1739
        %1741 = vadd.xlane.f32.xlu0 %v1710
        %v1742 = vpop.xlane.xlu0 %1741
        %1743 = vadd.xlane.f32.xlu0 %v1712
        %v1744 = vpop.xlane.xlu0 %1743
        %1745 = vadd.xlane.f32.xlu0 %v1714
        %v1746 = vpop.xlane.xlu0 %1745
        %1747 = vadd.xlane.f32.xlu0 %v1716
        %v1748 = vpop.xlane.xlu0 %1747
        %1749 = vadd.xlane.f32.xlu0 %v1718
        %v1750 = vpop.xlane.xlu0 %1749
        %1751 = vadd.xlane.f32.xlu0 %v1720
        %v1752 = vpop.xlane.xlu0 %1751
        %1753 = vadd.xlane.f32.xlu0 %v1722
        %v1754 = vpop.xlane.xlu0 %1753
        %1755 = vadd.xlane.f32.xlu0 %v1724
        %v1756 = vpop.xlane.xlu0 %1755
        %v1757 = vrcp.pop %v1726
        %v1758 = vrcp.pop %v1728
        %v1759 = vrcp.pop %v1730
        %v1760 = vrcp.pop %v1732
        %v1761 = vrcp.pop %v1734
        %v1762 = vrcp.pop %v1736
        %v1763 = vrcp.pop %v1738
        %v1764 = vrcp.pop %v1740
        %v1765 = vrcp.pop %v1742
        %v1766 = vrcp.pop %v1744
        %v1767 = vrcp.pop %v1746
        %v1768 = vrcp.pop %v1748
        %v1769 = vrcp.pop %v1750
        %v1770 = vrcp.pop %v1752
        %v1771 = vrcp.pop %v1754
        %v1772 = vrcp.pop %v1756
        %v1773 = vmul.f32 %v1726, %v1757
        %v1774 = vmul.f32 %v1728, %v1758
        %v1775 = vmul.f32 %v1730, %v1759
        %v1776 = vmul.f32 %v1732, %v1760
        %v1777 = vmul.f32 %v1734, %v1761
        %v1778 = vmul.f32 %v1736, %v1762
        %v1779 = vmul.f32 %v1738, %v1763
        %v1780 = vmul.f32 %v1740, %v1764
        %v1781 = vmul.f32 %v1742, %v1765
        %v1782 = vmul.f32 %v1744, %v1766
        %v1783 = vmul.f32 %v1746, %v1767
        %v1784 = vmul.f32 %v1748, %v1768
        %v1785 = vmul.f32 %v1750, %v1769
        %v1786 = vmul.f32 %v1752, %v1770
        %v1787 = vmul.f32 %v1754, %v1771
        %v1788 = vmul.f32 %v1756, %v1772
        %v1789 = vsub.f32 2.0, %v1773
        %v1790 = vsub.f32 2.0, %v1774
        %v1791 = vsub.f32 2.0, %v1775
        %v1792 = vsub.f32 2.0, %v1776
        %v1793 = vsub.f32 2.0, %v1777
        %v1794 = vsub.f32 2.0, %v1778
        %v1795 = vsub.f32 2.0, %v1779
        %v1796 = vsub.f32 2.0, %v1780
        %v1797 = vsub.f32 2.0, %v1781
        %v1798 = vsub.f32 2.0, %v1782
        %v1799 = vsub.f32 2.0, %v1783
        %v1800 = vsub.f32 2.0, %v1784
        %v1801 = vsub.f32 2.0, %v1785
        %v1802 = vsub.f32 2.0, %v1786
        %v1803 = vsub.f32 2.0, %v1787
        %v1804 = vsub.f32 2.0, %v1788
        %v1805 = vmul.f32 %v1757, %v1789
        %v1806 = vmul.f32 %v1758, %v1790
        %v1807 = vmul.f32 %v1759, %v1791
        %v1808 = vmul.f32 %v1760, %v1792
        %v1809 = vmul.f32 %v1761, %v1793
        %v1810 = vmul.f32 %v1762, %v1794
        %v1811 = vmul.f32 %v1763, %v1795
        %v1812 = vmul.f32 %v1764, %v1796
        %v1813 = vmul.f32 %v1765, %v1797
        %v1814 = vmul.f32 %v1766, %v1798
        %v1815 = vmul.f32 %v1767, %v1799
        %v1816 = vmul.f32 %v1768, %v1800
        %v1817 = vmul.f32 %v1769, %v1801
        %v1818 = vmul.f32 %v1770, %v1802
        %v1819 = vmul.f32 %v1771, %v1803
        %v1820 = vmul.f32 %v1772, %v1804
        %v1821 = vmul.f32 %v1694, %v1805
        %v1822 = vmul.f32 %v1696, %v1806
        %v1823 = vmul.f32 %v1698, %v1807
        %v1824 = vmul.f32 %v1700, %v1808
        %v1825 = vmul.f32 %v1702, %v1809
        %v1826 = vmul.f32 %v1704, %v1810
        %v1827 = vmul.f32 %v1706, %v1811
        %v1828 = vmul.f32 %v1708, %v1812
        %v1829 = vmul.f32 %v1710, %v1813
        %v1830 = vmul.f32 %v1712, %v1814
        %v1831 = vmul.f32 %v1714, %v1815
        %v1832 = vmul.f32 %v1716, %v1816
        %v1833 = vmul.f32 %v1718, %v1817
        %v1834 = vmul.f32 %v1720, %v1818
        %v1835 = vmul.f32 %v1722, %v1819
        %v1836 = vmul.f32 %v1724, %v1820
        %1853 = vrot.lane.b32.xlu0 %v455, 96
        %v1854 = vpop.permute.xlu0 %1853
        %1855 = vrot.lane.b32.xlu0 %v458, 96
        %v1856 = vpop.permute.xlu0 %1855
        %1857 = vrot.lane.b32.xlu0 %v461, 96
        %v1858 = vpop.permute.xlu0 %1857
        %1859 = vrot.lane.b32.xlu0 %v464, 96
        %v1860 = vpop.permute.xlu0 %1859
        %1861 = vrot.lane.b32.xlu0 %v467, 96
        %v1862 = vpop.permute.xlu0 %1861
        %1863 = vrot.lane.b32.xlu0 %v470, 96
        %v1864 = vpop.permute.xlu0 %1863
        %1865 = vrot.lane.b32.xlu0 %v473, 96
        %v1866 = vpop.permute.xlu0 %1865
        %1867 = vrot.lane.b32.xlu0 %v476, 96
        %v1868 = vpop.permute.xlu0 %1867
        %1869 = vrot.lane.b32.xlu0 %v479, 96
        %v1870 = vpop.permute.xlu0 %1869
        %1871 = vrot.lane.b32.xlu0 %v482, 96
        %v1872 = vpop.permute.xlu0 %1871
        %1873 = vrot.lane.b32.xlu0 %v485, 96
        %v1874 = vpop.permute.xlu0 %1873
        %1875 = vrot.lane.b32.xlu0 %v488, 96
        %v1876 = vpop.permute.xlu0 %1875
        %1877 = vrot.lane.b32.xlu0 %v491, 96
        %v1878 = vpop.permute.xlu0 %1877
        %1879 = vrot.lane.b32.xlu0 %v494, 96
        %v1880 = vpop.permute.xlu0 %1879
        %1881 = vrot.lane.b32.xlu0 %v497, 96
        %v1882 = vpop.permute.xlu0 %1881
        %1883 = vrot.lane.b32.xlu0 %v500, 96
        %v1884 = vpop.permute.xlu0 %1883
        %1901 = vmatpush.msra.mxu0 %v1884
        %1902 = vmatpush.msra.mxu0 %v1882
        %1903 = vmatpush.msra.mxu0 %v1880
        %1904 = vmatpush.msra.mxu0 %v1878
        %1905 = vmatpush.msra.mxu0 %v1876
        %1906 = vmatpush.msra.mxu0 %v1874
        %1907 = vmatpush.msra.mxu0 %v1872
        %1908 = vmatpush.msra.mxu0 %v1870
        %1909 = vmatpush.msra.mxu0 %v1868
        %1910 = vmatpush.msra.mxu0 %v1866
        %1911 = vmatpush.msra.mxu0 %v1864
        %1912 = vmatpush.msra.mxu0 %v1862
        %1913 = vmatpush.msra.mxu0 %v1860
        %1914 = vmatpush.msra.mxu0 %v1858
        %1915 = vmatpush.msra.mxu0 %v1856
        %1916 = vmatpush.msra.mxu0 %v1854
        %1917 = vmatmul.f32.gmra.mxu0 %v1821
        %v1918 = vpop.f32.mrf.mxu0
        %v1919 = vadd.f32 0.0, %v1918
        %1920 = vmatmul.f32.gmra.mxu0 %v1822
        %v1921 = vpop.f32.mrf.mxu0
        %v1922 = vadd.f32 0.0, %v1921
        %1923 = vmatmul.f32.gmra.mxu0 %v1823
        %v1924 = vpop.f32.mrf.mxu0
        %v1925 = vadd.f32 0.0, %v1924
        %1926 = vmatmul.f32.gmra.mxu0 %v1824
        %v1927 = vpop.f32.mrf.mxu0
        %v1928 = vadd.f32 0.0, %v1927
        %1929 = vmatmul.f32.gmra.mxu0 %v1825
        %v1930 = vpop.f32.mrf.mxu0
        %v1931 = vadd.f32 0.0, %v1930
        %1932 = vmatmul.f32.gmra.mxu0 %v1826
        %v1933 = vpop.f32.mrf.mxu0
        %v1934 = vadd.f32 0.0, %v1933
        %1935 = vmatmul.f32.gmra.mxu0 %v1827
        %v1936 = vpop.f32.mrf.mxu0
        %v1937 = vadd.f32 0.0, %v1936
        %1938 = vmatmul.f32.gmra.mxu0 %v1828
        %v1939 = vpop.f32.mrf.mxu0
        %v1940 = vadd.f32 0.0, %v1939
        %1941 = vmatmul.f32.gmra.mxu0 %v1829
        %v1942 = vpop.f32.mrf.mxu0
        %v1943 = vadd.f32 0.0, %v1942
        %1944 = vmatmul.f32.gmra.mxu0 %v1830
        %v1945 = vpop.f32.mrf.mxu0
        %v1946 = vadd.f32 0.0, %v1945
        %1947 = vmatmul.f32.gmra.mxu0 %v1831
        %v1948 = vpop.f32.mrf.mxu0
        %v1949 = vadd.f32 0.0, %v1948
        %1950 = vmatmul.f32.gmra.mxu0 %v1832
        %v1951 = vpop.f32.mrf.mxu0
        %v1952 = vadd.f32 0.0, %v1951
        %1953 = vmatmul.f32.gmra.mxu0 %v1833
        %v1954 = vpop.f32.mrf.mxu0
        %v1955 = vadd.f32 0.0, %v1954
        %1956 = vmatmul.f32.gmra.mxu0 %v1834
        %v1957 = vpop.f32.mrf.mxu0
        %v1958 = vadd.f32 0.0, %v1957
        %1959 = vmatmul.f32.gmra.mxu0 %v1835
        %v1960 = vpop.f32.mrf.mxu0
        %v1961 = vadd.f32 0.0, %v1960
        %1962 = vmatmul.f32.gmra.mxu0 %v1836
        %v1963 = vpop.f32.mrf.mxu0
        %v1964 = vadd.f32 0.0, %v1963
        %1965 = vdwg.mxu0
        %1966 = vrot.lane.b32.xlu0 %v502, 64
        %v1967 = vpop.permute.xlu0 %1966
        %1968 = vrot.lane.b32.xlu0 %v503, 64
        %v1969 = vpop.permute.xlu0 %1968
        %1970 = vrot.lane.b32.xlu0 %v504, 64
        %v1971 = vpop.permute.xlu0 %1970
        %1972 = vrot.lane.b32.xlu0 %v505, 64
        %v1973 = vpop.permute.xlu0 %1972
        %1974 = vrot.lane.b32.xlu0 %v506, 64
        %v1975 = vpop.permute.xlu0 %1974
        %1976 = vrot.lane.b32.xlu0 %v507, 64
        %v1977 = vpop.permute.xlu0 %1976
        %1978 = vrot.lane.b32.xlu0 %v508, 64
        %v1979 = vpop.permute.xlu0 %1978
        %1980 = vrot.lane.b32.xlu0 %v509, 64
        %v1981 = vpop.permute.xlu0 %1980
        %1982 = vrot.lane.b32.xlu0 %v510, 64
        %v1983 = vpop.permute.xlu0 %1982
        %1984 = vrot.lane.b32.xlu0 %v511, 64
        %v1985 = vpop.permute.xlu0 %1984
        %1986 = vrot.lane.b32.xlu0 %v512, 64
        %v1987 = vpop.permute.xlu0 %1986
        %1988 = vrot.lane.b32.xlu0 %v513, 64
        %v1989 = vpop.permute.xlu0 %1988
        %1990 = vrot.lane.b32.xlu0 %v514, 64
        %v1991 = vpop.permute.xlu0 %1990
        %1992 = vrot.lane.b32.xlu0 %v515, 64
        %v1993 = vpop.permute.xlu0 %1992
        %1994 = vrot.lane.b32.xlu0 %v516, 64
        %v1995 = vpop.permute.xlu0 %1994
        %1996 = vrot.lane.b32.xlu0 %v517, 64
        %v1997 = vpop.permute.xlu0 %1996
        %1998 = vrot.lane.b32.xlu0 %v553, 64
        %v1999 = vpop.permute.xlu0 %1998
        %2000 = vrot.lane.b32.xlu0 %v554, 64
        %v2001 = vpop.permute.xlu0 %2000
        %2002 = vrot.lane.b32.xlu0 %v555, 64
        %v2003 = vpop.permute.xlu0 %2002
        %2004 = vrot.lane.b32.xlu0 %v556, 64
        %v2005 = vpop.permute.xlu0 %2004
        %2006 = vrot.lane.b32.xlu0 %v557, 64
        %v2007 = vpop.permute.xlu0 %2006
        %2008 = vrot.lane.b32.xlu0 %v558, 64
        %v2009 = vpop.permute.xlu0 %2008
        %2010 = vrot.lane.b32.xlu0 %v559, 64
        %v2011 = vpop.permute.xlu0 %2010
        %2012 = vrot.lane.b32.xlu0 %v560, 64
        %v2013 = vpop.permute.xlu0 %2012
        %2014 = vrot.lane.b32.xlu0 %v561, 64
        %v2015 = vpop.permute.xlu0 %2014
        %2016 = vrot.lane.b32.xlu0 %v562, 64
        %v2017 = vpop.permute.xlu0 %2016
        %2018 = vrot.lane.b32.xlu0 %v563, 64
        %v2019 = vpop.permute.xlu0 %2018
        %2020 = vrot.lane.b32.xlu0 %v564, 64
        %v2021 = vpop.permute.xlu0 %2020
        %2022 = vrot.lane.b32.xlu0 %v565, 64
        %v2023 = vpop.permute.xlu0 %2022
        %2024 = vrot.lane.b32.xlu0 %v566, 64
        %v2025 = vpop.permute.xlu0 %2024
        %2026 = vrot.lane.b32.xlu0 %v567, 64
        %v2027 = vpop.permute.xlu0 %2026
        %2028 = vrot.lane.b32.xlu0 %v568, 64
        %v2029 = vpop.permute.xlu0 %2028
        %2030 = vrot.lane.b32.xlu0 %v390, 64
        %v2031 = vpop.permute.xlu0 %2030
        %2032 = vrot.lane.b32.xlu0 %v393, 64
        %v2033 = vpop.permute.xlu0 %2032
        %2034 = vrot.lane.b32.xlu0 %v396, 64
        %v2035 = vpop.permute.xlu0 %2034
        %2036 = vrot.lane.b32.xlu0 %v399, 64
        %v2037 = vpop.permute.xlu0 %2036
        %2038 = vrot.lane.b32.xlu0 %v402, 64
        %v2039 = vpop.permute.xlu0 %2038
        %2040 = vrot.lane.b32.xlu0 %v405, 64
        %v2041 = vpop.permute.xlu0 %2040
        %2042 = vrot.lane.b32.xlu0 %v408, 64
        %v2043 = vpop.permute.xlu0 %2042
        %2044 = vrot.lane.b32.xlu0 %v411, 64
        %v2045 = vpop.permute.xlu0 %2044
        %2046 = vrot.lane.b32.xlu0 %v414, 64
        %v2047 = vpop.permute.xlu0 %2046
        %2048 = vrot.lane.b32.xlu0 %v417, 64
        %v2049 = vpop.permute.xlu0 %2048
        %2050 = vrot.lane.b32.xlu0 %v420, 64
        %v2051 = vpop.permute.xlu0 %2050
        %2052 = vrot.lane.b32.xlu0 %v423, 64
        %v2053 = vpop.permute.xlu0 %2052
        %2054 = vrot.lane.b32.xlu0 %v426, 64
        %v2055 = vpop.permute.xlu0 %2054
        %2056 = vrot.lane.b32.xlu0 %v429, 64
        %v2057 = vpop.permute.xlu0 %2056
        %2058 = vrot.lane.b32.xlu0 %v432, 64
        %v2059 = vpop.permute.xlu0 %2058
        %2060 = vrot.lane.b32.xlu0 %v435, 64
        %v2061 = vpop.permute.xlu0 %2060
        %2062 = vrot.lane.b32.xlu0 %v1967, 64
        %v2063 = vpop.permute.xlu0 %2062
        %2064 = vrot.lane.b32.xlu0 %v1969, 64
        %v2065 = vpop.permute.xlu0 %2064
        %2066 = vrot.lane.b32.xlu0 %v1971, 64
        %v2067 = vpop.permute.xlu0 %2066
        %2068 = vrot.lane.b32.xlu0 %v1973, 64
        %v2069 = vpop.permute.xlu0 %2068
        %2070 = vrot.lane.b32.xlu0 %v1975, 64
        %v2071 = vpop.permute.xlu0 %2070
        %2072 = vrot.lane.b32.xlu0 %v1977, 64
        %v2073 = vpop.permute.xlu0 %2072
        %2074 = vrot.lane.b32.xlu0 %v1979, 64
        %v2075 = vpop.permute.xlu0 %2074
        %2076 = vrot.lane.b32.xlu0 %v1981, 64
        %v2077 = vpop.permute.xlu0 %2076
        %2078 = vrot.lane.b32.xlu0 %v1983, 64
        %v2079 = vpop.permute.xlu0 %2078
        %2080 = vrot.lane.b32.xlu0 %v1985, 64
        %v2081 = vpop.permute.xlu0 %2080
        %2082 = vrot.lane.b32.xlu0 %v1987, 64
        %v2083 = vpop.permute.xlu0 %2082
        %2084 = vrot.lane.b32.xlu0 %v1989, 64
        %v2085 = vpop.permute.xlu0 %2084
        %2086 = vrot.lane.b32.xlu0 %v1991, 64
        %v2087 = vpop.permute.xlu0 %2086
        %2088 = vrot.lane.b32.xlu0 %v1993, 64
        %v2089 = vpop.permute.xlu0 %2088
        %2090 = vrot.lane.b32.xlu0 %v1995, 64
        %v2091 = vpop.permute.xlu0 %2090
        %2092 = vrot.lane.b32.xlu0 %v1997, 64
        %v2093 = vpop.permute.xlu0 %2092
        %v2094 = vsel %vm569, %v1999, 0
        %v2096 = vsel %vm569, %v2001, 0
        %v2098 = vsel %vm569, %v2003, 0
        %v2100 = vsel %vm569, %v2005, 0
        %v2102 = vsel %vm569, %v2007, 0
        %v2104 = vsel %vm569, %v2009, 0
        %v2106 = vsel %vm569, %v2011, 0
        %v2108 = vsel %vm569, %v2013, 0
        %v2110 = vsel %vm569, %v2015, 0
        %v2112 = vsel %vm569, %v2017, 0
        %v2114 = vsel %vm569, %v2019, 0
        %v2116 = vsel %vm569, %v2021, 0
        %v2118 = vsel %vm569, %v2023, 0
        %v2120 = vsel %vm569, %v2025, 0
        %v2122 = vsel %vm569, %v2027, 0
        %v2124 = vsel %vm569, %v2029, 0
        %v2126 = vsel %vm569, %v2031, 0
        %v2128 = vsel %vm569, %v2033, 0
        %v2130 = vsel %vm569, %v2035, 0
        %v2132 = vsel %vm569, %v2037, 0
        %v2134 = vsel %vm569, %v2039, 0
        %v2136 = vsel %vm569, %v2041, 0
        %v2138 = vsel %vm569, %v2043, 0
        %v2140 = vsel %vm569, %v2045, 0
        %v2142 = vsel %vm569, %v2047, 0
        %v2144 = vsel %vm569, %v2049, 0
        %v2146 = vsel %vm569, %v2051, 0
        %v2148 = vsel %vm569, %v2053, 0
        %v2150 = vsel %vm569, %v2055, 0
        %v2152 = vsel %vm569, %v2057, 0
        %v2154 = vsel %vm569, %v2059, 0
        %v2156 = vsel %vm569, %v2061, 0
        %v2158 = vsel %vm569, %v2063, 0
        %v2160 = vsel %vm569, %v2065, 0
        %v2162 = vsel %vm569, %v2067, 0
        %v2164 = vsel %vm569, %v2069, 0
        %v2166 = vsel %vm569, %v2071, 0
        %v2168 = vsel %vm569, %v2073, 0
        %v2170 = vsel %vm569, %v2075, 0
        %v2172 = vsel %vm569, %v2077, 0
        %v2174 = vsel %vm569, %v2079, 0
        %v2176 = vsel %vm569, %v2081, 0
        %v2178 = vsel %vm569, %v2083, 0
        %v2180 = vsel %vm569, %v2085, 0
        %v2182 = vsel %vm569, %v2087, 0
        %v2184 = vsel %vm569, %v2089, 0
        %v2186 = vsel %vm569, %v2091, 0
        %v2188 = vsel %vm569, %v2093, 0
        %2190 = vmatpush.xpose.msra.mxu0 %v2156
        %2191 = vmatpush.xpose.msra.mxu0 %v2154
        %2192 = vmatpush.xpose.msra.mxu0 %v2152
        %2193 = vmatpush.xpose.msra.mxu0 %v2150
        %2194 = vmatpush.xpose.msra.mxu0 %v2148
        %2195 = vmatpush.xpose.msra.mxu0 %v2146
        %2196 = vmatpush.xpose.msra.mxu0 %v2144
        %2197 = vmatpush.xpose.msra.mxu0 %v2142
        %2198 = vmatpush.xpose.msra.mxu0 %v2140
        %2199 = vmatpush.xpose.msra.mxu0 %v2138
        %2200 = vmatpush.xpose.msra.mxu0 %v2136
        %2201 = vmatpush.xpose.msra.mxu0 %v2134
        %2202 = vmatpush.xpose.msra.mxu0 %v2132
        %2203 = vmatpush.xpose.msra.mxu0 %v2130
        %2204 = vmatpush.xpose.msra.mxu0 %v2128
        %2205 = vmatpush.xpose.msra.mxu0 %v2126
        %2206 = vmatmul.f32.gmra.mxu0 %v2094
        %v2207 = vpop.f32.mrf.mxu0
        %v2208 = vadd.f32 0.0, %v2207
        %2209 = vmatmul.f32.gmra.mxu0 %v2096
        %v2210 = vpop.f32.mrf.mxu0
        %v2211 = vadd.f32 0.0, %v2210
        %2212 = vmatmul.f32.gmra.mxu0 %v2098
        %v2213 = vpop.f32.mrf.mxu0
        %v2214 = vadd.f32 0.0, %v2213
        %2215 = vmatmul.f32.gmra.mxu0 %v2100
        %v2216 = vpop.f32.mrf.mxu0
        %v2217 = vadd.f32 0.0, %v2216
        %2218 = vmatmul.f32.gmra.mxu0 %v2102
        %v2219 = vpop.f32.mrf.mxu0
        %v2220 = vadd.f32 0.0, %v2219
        %2221 = vmatmul.f32.gmra.mxu0 %v2104
        %v2222 = vpop.f32.mrf.mxu0
        %v2223 = vadd.f32 0.0, %v2222
        %2224 = vmatmul.f32.gmra.mxu0 %v2106
        %v2225 = vpop.f32.mrf.mxu0
        %v2226 = vadd.f32 0.0, %v2225
        %2227 = vmatmul.f32.gmra.mxu0 %v2108
        %v2228 = vpop.f32.mrf.mxu0
        %v2229 = vadd.f32 0.0, %v2228
        %2230 = vmatmul.f32.gmra.mxu0 %v2110
        %v2231 = vpop.f32.mrf.mxu0
        %v2232 = vadd.f32 0.0, %v2231
        %2233 = vmatmul.f32.gmra.mxu0 %v2112
        %v2234 = vpop.f32.mrf.mxu0
        %v2235 = vadd.f32 0.0, %v2234
        %2236 = vmatmul.f32.gmra.mxu0 %v2114
        %v2237 = vpop.f32.mrf.mxu0
        %v2238 = vadd.f32 0.0, %v2237
        %2239 = vmatmul.f32.gmra.mxu0 %v2116
        %v2240 = vpop.f32.mrf.mxu0
        %v2241 = vadd.f32 0.0, %v2240
        %2242 = vmatmul.f32.gmra.mxu0 %v2118
        %v2243 = vpop.f32.mrf.mxu0
        %v2244 = vadd.f32 0.0, %v2243
        %2245 = vmatmul.f32.gmra.mxu0 %v2120
        %v2246 = vpop.f32.mrf.mxu0
        %v2247 = vadd.f32 0.0, %v2246
        %2248 = vmatmul.f32.gmra.mxu0 %v2122
        %v2249 = vpop.f32.mrf.mxu0
        %v2250 = vadd.f32 0.0, %v2249
        %2251 = vmatmul.f32.gmra.mxu0 %v2124
        %v2252 = vpop.f32.mrf.mxu0
        %v2253 = vadd.f32 0.0, %v2252
        %2254 = vdwg.mxu0
        %2255 = vmatpush.xpose.msra.mxu0 %v2188
        %2256 = vmatpush.xpose.msra.mxu0 %v2186
        %2257 = vmatpush.xpose.msra.mxu0 %v2184
        %2258 = vmatpush.xpose.msra.mxu0 %v2182
        %2259 = vmatpush.xpose.msra.mxu0 %v2180
        %2260 = vmatpush.xpose.msra.mxu0 %v2178
        %2261 = vmatpush.xpose.msra.mxu0 %v2176
        %2262 = vmatpush.xpose.msra.mxu0 %v2174
        %2263 = vmatpush.xpose.msra.mxu0 %v2172
        %2264 = vmatpush.xpose.msra.mxu0 %v2170
        %2265 = vmatpush.xpose.msra.mxu0 %v2168
        %2266 = vmatpush.xpose.msra.mxu0 %v2166
        %2267 = vmatpush.xpose.msra.mxu0 %v2164
        %2268 = vmatpush.xpose.msra.mxu0 %v2162
        %2269 = vmatpush.xpose.msra.mxu0 %v2160
        %2270 = vmatpush.xpose.msra.mxu0 %v2158
        %2271 = vmatmul.f32.gmra.mxu0 %v2094
        %v2272 = vpop.f32.mrf.mxu0
        %v2273 = vadd.f32 0.0, %v2272
        %2274 = vmatmul.f32.gmra.mxu0 %v2096
        %v2275 = vpop.f32.mrf.mxu0
        %v2276 = vadd.f32 0.0, %v2275
        %2277 = vmatmul.f32.gmra.mxu0 %v2098
        %v2278 = vpop.f32.mrf.mxu0
        %v2279 = vadd.f32 0.0, %v2278
        %2280 = vmatmul.f32.gmra.mxu0 %v2100
        %v2281 = vpop.f32.mrf.mxu0
        %v2282 = vadd.f32 0.0, %v2281
        %2283 = vmatmul.f32.gmra.mxu0 %v2102
        %v2284 = vpop.f32.mrf.mxu0
        %v2285 = vadd.f32 0.0, %v2284
        %2286 = vmatmul.f32.gmra.mxu0 %v2104
        %v2287 = vpop.f32.mrf.mxu0
        %v2288 = vadd.f32 0.0, %v2287
        %2289 = vmatmul.f32.gmra.mxu0 %v2106
        %v2290 = vpop.f32.mrf.mxu0
        %v2291 = vadd.f32 0.0, %v2290
        %2292 = vmatmul.f32.gmra.mxu0 %v2108
        %v2293 = vpop.f32.mrf.mxu0
        %v2294 = vadd.f32 0.0, %v2293
        %2295 = vmatmul.f32.gmra.mxu0 %v2110
        %v2296 = vpop.f32.mrf.mxu0
        %v2297 = vadd.f32 0.0, %v2296
        %2298 = vmatmul.f32.gmra.mxu0 %v2112
        %v2299 = vpop.f32.mrf.mxu0
        %v2300 = vadd.f32 0.0, %v2299
        %2301 = vmatmul.f32.gmra.mxu0 %v2114
        %v2302 = vpop.f32.mrf.mxu0
        %v2303 = vadd.f32 0.0, %v2302
        %2304 = vmatmul.f32.gmra.mxu0 %v2116
        %v2305 = vpop.f32.mrf.mxu0
        %v2306 = vadd.f32 0.0, %v2305
        %2307 = vmatmul.f32.gmra.mxu0 %v2118
        %v2308 = vpop.f32.mrf.mxu0
        %v2309 = vadd.f32 0.0, %v2308
        %2310 = vmatmul.f32.gmra.mxu0 %v2120
        %v2311 = vpop.f32.mrf.mxu0
        %v2312 = vadd.f32 0.0, %v2311
        %2313 = vmatmul.f32.gmra.mxu0 %v2122
        %v2314 = vpop.f32.mrf.mxu0
        %v2315 = vadd.f32 0.0, %v2314
        %2316 = vmatmul.f32.gmra.mxu0 %v2124
        %v2317 = vpop.f32.mrf.mxu0
        %v2318 = vadd.f32 0.0, %v2317
        %2319 = vdwg.mxu0
        %2321 = vrot.lane.b32.xlu0 %v2273, 256
        %v2322 = vpop.permute.xlu0 %2321
        %s2324 = sor.u32 256, 8
        %2325 = vrot.lane.b32.xlu0 %v2276, %s2324
        %v2326 = vpop.permute.xlu0 %2325
        %s2328 = sor.u32 256, 16
        %2329 = vrot.lane.b32.xlu0 %v2279, %s2328
        %v2330 = vpop.permute.xlu0 %2329
        %s2332 = sor.u32 256, 24
        %2333 = vrot.lane.b32.xlu0 %v2282, %s2332
        %v2334 = vpop.permute.xlu0 %2333
        %s2336 = sor.u32 256, 32
        %2337 = vrot.lane.b32.xlu0 %v2285, %s2336
        %v2338 = vpop.permute.xlu0 %2337
        %s2340 = sor.u32 256, 40
        %2341 = vrot.lane.b32.xlu0 %v2288, %s2340
        %v2342 = vpop.permute.xlu0 %2341
        %s2344 = sor.u32 256, 48
        %2345 = vrot.lane.b32.xlu0 %v2291, %s2344
        %v2346 = vpop.permute.xlu0 %2345
        %s2348 = sor.u32 256, 56
        %2349 = vrot.lane.b32.xlu0 %v2294, %s2348
        %v2350 = vpop.permute.xlu0 %2349
        %s2352 = sor.u32 256, 64
        %2353 = vrot.lane.b32.xlu0 %v2297, %s2352
        %v2354 = vpop.permute.xlu0 %2353
        %s2356 = sor.u32 256, 72
        %2357 = vrot.lane.b32.xlu0 %v2300, %s2356
        %v2358 = vpop.permute.xlu0 %2357
        %s2360 = sor.u32 256, 80
        %2361 = vrot.lane.b32.xlu0 %v2303, %s2360
        %v2362 = vpop.permute.xlu0 %2361
        %s2364 = sor.u32 256, 88
        %2365 = vrot.lane.b32.xlu0 %v2306, %s2364
        %v2366 = vpop.permute.xlu0 %2365
        %s2368 = sor.u32 256, 96
        %2369 = vrot.lane.b32.xlu0 %v2309, %s2368
        %v2370 = vpop.permute.xlu0 %2369
        %s2372 = sor.u32 256, 104
        %2373 = vrot.lane.b32.xlu0 %v2312, %s2372
        %v2374 = vpop.permute.xlu0 %2373
        %s2376 = sor.u32 256, 112
        %2377 = vrot.lane.b32.xlu0 %v2315, %s2376
        %v2378 = vpop.permute.xlu0 %2377
        %s2380 = sor.u32 256, 120
        %2381 = vrot.lane.b32.xlu0 %v2318, %s2380
        %v2382 = vpop.permute.xlu0 %2381
        %v2383 = vadd.f32 %v2208, %v2322
        %v2384 = vadd.f32 %v2211, %v2326
        %v2385 = vadd.f32 %v2214, %v2330
        %v2386 = vadd.f32 %v2217, %v2334
        %v2387 = vadd.f32 %v2220, %v2338
        %v2388 = vadd.f32 %v2223, %v2342
        %v2389 = vadd.f32 %v2226, %v2346
        %v2390 = vadd.f32 %v2229, %v2350
        %v2391 = vadd.f32 %v2232, %v2354
        %v2392 = vadd.f32 %v2235, %v2358
        %v2393 = vadd.f32 %v2238, %v2362
        %v2394 = vadd.f32 %v2241, %v2366
        %v2395 = vadd.f32 %v2244, %v2370
        %v2396 = vadd.f32 %v2247, %v2374
        %v2397 = vadd.f32 %v2250, %v2378
        %v2398 = vadd.f32 %v2253, %v2382
        %v2399 = vsel %vm537, %v2383, -inf
        %v2400 = vsel %vm538, %v2384, -inf
        %v2401 = vsel %vm539, %v2385, -inf
        %v2402 = vsel %vm540, %v2386, -inf
        %v2403 = vsel %vm541, %v2387, -inf
        %v2404 = vsel %vm542, %v2388, -inf
        %v2405 = vsel %vm543, %v2389, -inf
        %v2406 = vsel %vm544, %v2390, -inf
        %v2407 = vsel %vm545, %v2391, -inf
        %v2408 = vsel %vm546, %v2392, -inf
        %v2409 = vsel %vm547, %v2393, -inf
        %v2410 = vsel %vm548, %v2394, -inf
        %v2411 = vsel %vm549, %v2395, -inf
        %v2412 = vsel %vm550, %v2396, -inf
        %v2413 = vsel %vm551, %v2397, -inf
        %v2414 = vsel %vm552, %v2398, -inf
        %2415 = vmax.xlane.f32.xlu0 %v2399
        %v2416 = vpop.xlane.xlu0 %2415
        %2417 = vmax.xlane.f32.xlu0 %v2400
        %v2418 = vpop.xlane.xlu0 %2417
        %2419 = vmax.xlane.f32.xlu0 %v2401
        %v2420 = vpop.xlane.xlu0 %2419
        %2421 = vmax.xlane.f32.xlu0 %v2402
        %v2422 = vpop.xlane.xlu0 %2421
        %2423 = vmax.xlane.f32.xlu0 %v2403
        %v2424 = vpop.xlane.xlu0 %2423
        %2425 = vmax.xlane.f32.xlu0 %v2404
        %v2426 = vpop.xlane.xlu0 %2425
        %2427 = vmax.xlane.f32.xlu0 %v2405
        %v2428 = vpop.xlane.xlu0 %2427
        %2429 = vmax.xlane.f32.xlu0 %v2406
        %v2430 = vpop.xlane.xlu0 %2429
        %2431 = vmax.xlane.f32.xlu0 %v2407
        %v2432 = vpop.xlane.xlu0 %2431
        %2433 = vmax.xlane.f32.xlu0 %v2408
        %v2434 = vpop.xlane.xlu0 %2433
        %2435 = vmax.xlane.f32.xlu0 %v2409
        %v2436 = vpop.xlane.xlu0 %2435
        %2437 = vmax.xlane.f32.xlu0 %v2410
        %v2438 = vpop.xlane.xlu0 %2437
        %2439 = vmax.xlane.f32.xlu0 %v2411
        %v2440 = vpop.xlane.xlu0 %2439
        %2441 = vmax.xlane.f32.xlu0 %v2412
        %v2442 = vpop.xlane.xlu0 %2441
        %2443 = vmax.xlane.f32.xlu0 %v2413
        %v2444 = vpop.xlane.xlu0 %2443
        %2445 = vmax.xlane.f32.xlu0 %v2414
        %v2446 = vpop.xlane.xlu0 %2445
        %v2447 = vsub.f32 %v2399, %v2416
        %v2448 = vsub.f32 %v2400, %v2418
        %v2449 = vsub.f32 %v2401, %v2420
        %v2450 = vsub.f32 %v2402, %v2422
        %v2451 = vsub.f32 %v2403, %v2424
        %v2452 = vsub.f32 %v2404, %v2426
        %v2453 = vsub.f32 %v2405, %v2428
        %v2454 = vsub.f32 %v2406, %v2430
        %v2455 = vsub.f32 %v2407, %v2432
        %v2456 = vsub.f32 %v2408, %v2434
        %v2457 = vsub.f32 %v2409, %v2436
        %v2458 = vsub.f32 %v2410, %v2438
        %v2459 = vsub.f32 %v2411, %v2440
        %v2460 = vsub.f32 %v2412, %v2442
        %v2461 = vsub.f32 %v2413, %v2444
        %v2462 = vsub.f32 %v2414, %v2446
        %v2463 = vmul.f32 %v2447, 1.442695
        %v2464 = vpow.pop %v2463
        %v2465 = vmul.f32 %v2448, 1.442695
        %v2466 = vpow.pop %v2465
        %v2467 = vmul.f32 %v2449, 1.442695
        %v2468 = vpow.pop %v2467
        %v2469 = vmul.f32 %v2450, 1.442695
        %v2470 = vpow.pop %v2469
        %v2471 = vmul.f32 %v2451, 1.442695
        %v2472 = vpow.pop %v2471
        %v2473 = vmul.f32 %v2452, 1.442695
        %v2474 = vpow.pop %v2473
        %v2475 = vmul.f32 %v2453, 1.442695
        %v2476 = vpow.pop %v2475
        %v2477 = vmul.f32 %v2454, 1.442695
        %v2478 = vpow.pop %v2477
        %v2479 = vmul.f32 %v2455, 1.442695
        %v2480 = vpow.pop %v2479
        %v2481 = vmul.f32 %v2456, 1.442695
        %v2482 = vpow.pop %v2481
        %v2483 = vmul.f32 %v2457, 1.442695
        %v2484 = vpow.pop %v2483
        %v2485 = vmul.f32 %v2458, 1.442695
        %v2486 = vpow.pop %v2485
        %v2487 = vmul.f32 %v2459, 1.442695
        %v2488 = vpow.pop %v2487
        %v2489 = vmul.f32 %v2460, 1.442695
        %v2490 = vpow.pop %v2489
        %v2491 = vmul.f32 %v2461, 1.442695
        %v2492 = vpow.pop %v2491
        %v2493 = vmul.f32 %v2462, 1.442695
        %v2494 = vpow.pop %v2493
        %2495 = vadd.xlane.f32.xlu0 %v2464
        %v2496 = vpop.xlane.xlu0 %2495
        %2497 = vadd.xlane.f32.xlu0 %v2466
        %v2498 = vpop.xlane.xlu0 %2497
        %2499 = vadd.xlane.f32.xlu0 %v2468
        %v2500 = vpop.xlane.xlu0 %2499
        %2501 = vadd.xlane.f32.xlu0 %v2470
        %v2502 = vpop.xlane.xlu0 %2501
        %2503 = vadd.xlane.f32.xlu0 %v2472
        %v2504 = vpop.xlane.xlu0 %2503
        %2505 = vadd.xlane.f32.xlu0 %v2474
        %v2506 = vpop.xlane.xlu0 %2505
        %2507 = vadd.xlane.f32.xlu0 %v2476
        %v2508 = vpop.xlane.xlu0 %2507
        %2509 = vadd.xlane.f32.xlu0 %v2478
        %v2510 = vpop.xlane.xlu0 %2509
        %2511 = vadd.xlane.f32.xlu0 %v2480
        %v2512 = vpop.xlane.xlu0 %2511
        %2513 = vadd.xlane.f32.xlu0 %v2482
        %v2514 = vpop.xlane.xlu0 %2513
        %2515 = vadd.xlane.f32.xlu0 %v2484
        %v2516 = vpop.xlane.xlu0 %2515
        %2517 = vadd.xlane.f32.xlu0 %v2486
        %v2518 = vpop.xlane.xlu0 %2517
        %2519 = vadd.xlane.f32.xlu0 %v2488
        %v2520 = vpop.xlane.xlu0 %2519
        %2521 = vadd.xlane.f32.xlu0 %v2490
        %v2522 = vpop.xlane.xlu0 %2521
        %2523 = vadd.xlane.f32.xlu0 %v2492
        %v2524 = vpop.xlane.xlu0 %2523
        %2525 = vadd.xlane.f32.xlu0 %v2494
        %v2526 = vpop.xlane.xlu0 %2525
        %v2527 = vrcp.pop %v2496
        %v2528 = vrcp.pop %v2498
        %v2529 = vrcp.pop %v2500
        %v2530 = vrcp.pop %v2502
        %v2531 = vrcp.pop %v2504
        %v2532 = vrcp.pop %v2506
        %v2533 = vrcp.pop %v2508
        %v2534 = vrcp.pop %v2510
        %v2535 = vrcp.pop %v2512
        %v2536 = vrcp.pop %v2514
        %v2537 = vrcp.pop %v2516
        %v2538 = vrcp.pop %v2518
        %v2539 = vrcp.pop %v2520
        %v2540 = vrcp.pop %v2522
        %v2541 = vrcp.pop %v2524
        %v2542 = vrcp.pop %v2526
        %v2543 = vmul.f32 %v2496, %v2527
        %v2544 = vmul.f32 %v2498, %v2528
        %v2545 = vmul.f32 %v2500, %v2529
        %v2546 = vmul.f32 %v2502, %v2530
        %v2547 = vmul.f32 %v2504, %v2531
        %v2548 = vmul.f32 %v2506, %v2532
        %v2549 = vmul.f32 %v2508, %v2533
        %v2550 = vmul.f32 %v2510, %v2534
        %v2551 = vmul.f32 %v2512, %v2535
        %v2552 = vmul.f32 %v2514, %v2536
        %v2553 = vmul.f32 %v2516, %v2537
        %v2554 = vmul.f32 %v2518, %v2538
        %v2555 = vmul.f32 %v2520, %v2539
        %v2556 = vmul.f32 %v2522, %v2540
        %v2557 = vmul.f32 %v2524, %v2541
        %v2558 = vmul.f32 %v2526, %v2542
        %v2559 = vsub.f32 2.0, %v2543
        %v2560 = vsub.f32 2.0, %v2544
        %v2561 = vsub.f32 2.0, %v2545
        %v2562 = vsub.f32 2.0, %v2546
        %v2563 = vsub.f32 2.0, %v2547
        %v2564 = vsub.f32 2.0, %v2548
        %v2565 = vsub.f32 2.0, %v2549
        %v2566 = vsub.f32 2.0, %v2550
        %v2567 = vsub.f32 2.0, %v2551
        %v2568 = vsub.f32 2.0, %v2552
        %v2569 = vsub.f32 2.0, %v2553
        %v2570 = vsub.f32 2.0, %v2554
        %v2571 = vsub.f32 2.0, %v2555
        %v2572 = vsub.f32 2.0, %v2556
        %v2573 = vsub.f32 2.0, %v2557
        %v2574 = vsub.f32 2.0, %v2558
        %v2575 = vmul.f32 %v2527, %v2559
        %v2576 = vmul.f32 %v2528, %v2560
        %v2577 = vmul.f32 %v2529, %v2561
        %v2578 = vmul.f32 %v2530, %v2562
        %v2579 = vmul.f32 %v2531, %v2563
        %v2580 = vmul.f32 %v2532, %v2564
        %v2581 = vmul.f32 %v2533, %v2565
        %v2582 = vmul.f32 %v2534, %v2566
        %v2583 = vmul.f32 %v2535, %v2567
        %v2584 = vmul.f32 %v2536, %v2568
        %v2585 = vmul.f32 %v2537, %v2569
        %v2586 = vmul.f32 %v2538, %v2570
        %v2587 = vmul.f32 %v2539, %v2571
        %v2588 = vmul.f32 %v2540, %v2572
        %v2589 = vmul.f32 %v2541, %v2573
        %v2590 = vmul.f32 %v2542, %v2574
        %v2591 = vmul.f32 %v2464, %v2575
        %v2592 = vmul.f32 %v2466, %v2576
        %v2593 = vmul.f32 %v2468, %v2577
        %v2594 = vmul.f32 %v2470, %v2578
        %v2595 = vmul.f32 %v2472, %v2579
        %v2596 = vmul.f32 %v2474, %v2580
        %v2597 = vmul.f32 %v2476, %v2581
        %v2598 = vmul.f32 %v2478, %v2582
        %v2599 = vmul.f32 %v2480, %v2583
        %v2600 = vmul.f32 %v2482, %v2584
        %v2601 = vmul.f32 %v2484, %v2585
        %v2602 = vmul.f32 %v2486, %v2586
        %v2603 = vmul.f32 %v2488, %v2587
        %v2604 = vmul.f32 %v2490, %v2588
        %v2605 = vmul.f32 %v2492, %v2589
        %v2606 = vmul.f32 %v2494, %v2590
        %2607 = vrot.lane.b32.xlu0 %v455, 64
        %v2608 = vpop.permute.xlu0 %2607
        %2609 = vrot.lane.b32.xlu0 %v458, 64
        %v2610 = vpop.permute.xlu0 %2609
        %2611 = vrot.lane.b32.xlu0 %v461, 64
        %v2612 = vpop.permute.xlu0 %2611
        %2613 = vrot.lane.b32.xlu0 %v464, 64
        %v2614 = vpop.permute.xlu0 %2613
        %2615 = vrot.lane.b32.xlu0 %v467, 64
        %v2616 = vpop.permute.xlu0 %2615
        %2617 = vrot.lane.b32.xlu0 %v470, 64
        %v2618 = vpop.permute.xlu0 %2617
        %2619 = vrot.lane.b32.xlu0 %v473, 64
        %v2620 = vpop.permute.xlu0 %2619
        %2621 = vrot.lane.b32.xlu0 %v476, 64
        %v2622 = vpop.permute.xlu0 %2621
        %2623 = vrot.lane.b32.xlu0 %v479, 64
        %v2624 = vpop.permute.xlu0 %2623
        %2625 = vrot.lane.b32.xlu0 %v482, 64
        %v2626 = vpop.permute.xlu0 %2625
        %2627 = vrot.lane.b32.xlu0 %v485, 64
        %v2628 = vpop.permute.xlu0 %2627
        %2629 = vrot.lane.b32.xlu0 %v488, 64
        %v2630 = vpop.permute.xlu0 %2629
        %2631 = vrot.lane.b32.xlu0 %v491, 64
        %v2632 = vpop.permute.xlu0 %2631
        %2633 = vrot.lane.b32.xlu0 %v494, 64
        %v2634 = vpop.permute.xlu0 %2633
        %2635 = vrot.lane.b32.xlu0 %v497, 64
        %v2636 = vpop.permute.xlu0 %2635
        %2637 = vrot.lane.b32.xlu0 %v500, 64
        %v2638 = vpop.permute.xlu0 %2637
        %2655 = vmatpush.msra.mxu0 %v2638
        %2656 = vmatpush.msra.mxu0 %v2636
        %2657 = vmatpush.msra.mxu0 %v2634
        %2658 = vmatpush.msra.mxu0 %v2632
        %2659 = vmatpush.msra.mxu0 %v2630
        %2660 = vmatpush.msra.mxu0 %v2628
        %2661 = vmatpush.msra.mxu0 %v2626
        %2662 = vmatpush.msra.mxu0 %v2624
        %2663 = vmatpush.msra.mxu0 %v2622
        %2664 = vmatpush.msra.mxu0 %v2620
        %2665 = vmatpush.msra.mxu0 %v2618
        %2666 = vmatpush.msra.mxu0 %v2616
        %2667 = vmatpush.msra.mxu0 %v2614
        %2668 = vmatpush.msra.mxu0 %v2612
        %2669 = vmatpush.msra.mxu0 %v2610
        %2670 = vmatpush.msra.mxu0 %v2608
        %2671 = vmatmul.f32.gmra.mxu0 %v2591
        %v2672 = vpop.f32.mrf.mxu0
        %v2673 = vadd.f32 0.0, %v2672
        %2674 = vmatmul.f32.gmra.mxu0 %v2592
        %v2675 = vpop.f32.mrf.mxu0
        %v2676 = vadd.f32 0.0, %v2675
        %2677 = vmatmul.f32.gmra.mxu0 %v2593
        %v2678 = vpop.f32.mrf.mxu0
        %v2679 = vadd.f32 0.0, %v2678
        %2680 = vmatmul.f32.gmra.mxu0 %v2594
        %v2681 = vpop.f32.mrf.mxu0
        %v2682 = vadd.f32 0.0, %v2681
        %2683 = vmatmul.f32.gmra.mxu0 %v2595
        %v2684 = vpop.f32.mrf.mxu0
        %v2685 = vadd.f32 0.0, %v2684
        %2686 = vmatmul.f32.gmra.mxu0 %v2596
        %v2687 = vpop.f32.mrf.mxu0
        %v2688 = vadd.f32 0.0, %v2687
        %2689 = vmatmul.f32.gmra.mxu0 %v2597
        %v2690 = vpop.f32.mrf.mxu0
        %v2691 = vadd.f32 0.0, %v2690
        %2692 = vmatmul.f32.gmra.mxu0 %v2598
        %v2693 = vpop.f32.mrf.mxu0
        %v2694 = vadd.f32 0.0, %v2693
        %2695 = vmatmul.f32.gmra.mxu0 %v2599
        %v2696 = vpop.f32.mrf.mxu0
        %v2697 = vadd.f32 0.0, %v2696
        %2698 = vmatmul.f32.gmra.mxu0 %v2600
        %v2699 = vpop.f32.mrf.mxu0
        %v2700 = vadd.f32 0.0, %v2699
        %2701 = vmatmul.f32.gmra.mxu0 %v2601
        %v2702 = vpop.f32.mrf.mxu0
        %v2703 = vadd.f32 0.0, %v2702
        %2704 = vmatmul.f32.gmra.mxu0 %v2602
        %v2705 = vpop.f32.mrf.mxu0
        %v2706 = vadd.f32 0.0, %v2705
        %2707 = vmatmul.f32.gmra.mxu0 %v2603
        %v2708 = vpop.f32.mrf.mxu0
        %v2709 = vadd.f32 0.0, %v2708
        %2710 = vmatmul.f32.gmra.mxu0 %v2604
        %v2711 = vpop.f32.mrf.mxu0
        %v2712 = vadd.f32 0.0, %v2711
        %2713 = vmatmul.f32.gmra.mxu0 %v2605
        %v2714 = vpop.f32.mrf.mxu0
        %v2715 = vadd.f32 0.0, %v2714
        %2716 = vmatmul.f32.gmra.mxu0 %v2606
        %v2717 = vpop.f32.mrf.mxu0
        %v2718 = vadd.f32 0.0, %v2717
        %2719 = vdwg.mxu0
        %2720 = vrot.lane.b32.xlu0 %v502, 96
        %v2721 = vpop.permute.xlu0 %2720
        %2722 = vrot.lane.b32.xlu0 %v503, 96
        %v2723 = vpop.permute.xlu0 %2722
        %2724 = vrot.lane.b32.xlu0 %v504, 96
        %v2725 = vpop.permute.xlu0 %2724
        %2726 = vrot.lane.b32.xlu0 %v505, 96
        %v2727 = vpop.permute.xlu0 %2726
        %2728 = vrot.lane.b32.xlu0 %v506, 96
        %v2729 = vpop.permute.xlu0 %2728
        %2730 = vrot.lane.b32.xlu0 %v507, 96
        %v2731 = vpop.permute.xlu0 %2730
        %2732 = vrot.lane.b32.xlu0 %v508, 96
        %v2733 = vpop.permute.xlu0 %2732
        %2734 = vrot.lane.b32.xlu0 %v509, 96
        %v2735 = vpop.permute.xlu0 %2734
        %2736 = vrot.lane.b32.xlu0 %v510, 96
        %v2737 = vpop.permute.xlu0 %2736
        %2738 = vrot.lane.b32.xlu0 %v511, 96
        %v2739 = vpop.permute.xlu0 %2738
        %2740 = vrot.lane.b32.xlu0 %v512, 96
        %v2741 = vpop.permute.xlu0 %2740
        %2742 = vrot.lane.b32.xlu0 %v513, 96
        %v2743 = vpop.permute.xlu0 %2742
        %2744 = vrot.lane.b32.xlu0 %v514, 96
        %v2745 = vpop.permute.xlu0 %2744
        %2746 = vrot.lane.b32.xlu0 %v515, 96
        %v2747 = vpop.permute.xlu0 %2746
        %2748 = vrot.lane.b32.xlu0 %v516, 96
        %v2749 = vpop.permute.xlu0 %2748
        %2750 = vrot.lane.b32.xlu0 %v517, 96
        %v2751 = vpop.permute.xlu0 %2750
        %2752 = vrot.lane.b32.xlu0 %v553, 32
        %v2753 = vpop.permute.xlu0 %2752
        %2754 = vrot.lane.b32.xlu0 %v554, 32
        %v2755 = vpop.permute.xlu0 %2754
        %2756 = vrot.lane.b32.xlu0 %v555, 32
        %v2757 = vpop.permute.xlu0 %2756
        %2758 = vrot.lane.b32.xlu0 %v556, 32
        %v2759 = vpop.permute.xlu0 %2758
        %2760 = vrot.lane.b32.xlu0 %v557, 32
        %v2761 = vpop.permute.xlu0 %2760
        %2762 = vrot.lane.b32.xlu0 %v558, 32
        %v2763 = vpop.permute.xlu0 %2762
        %2764 = vrot.lane.b32.xlu0 %v559, 32
        %v2765 = vpop.permute.xlu0 %2764
        %2766 = vrot.lane.b32.xlu0 %v560, 32
        %v2767 = vpop.permute.xlu0 %2766
        %2768 = vrot.lane.b32.xlu0 %v561, 32
        %v2769 = vpop.permute.xlu0 %2768
        %2770 = vrot.lane.b32.xlu0 %v562, 32
        %v2771 = vpop.permute.xlu0 %2770
        %2772 = vrot.lane.b32.xlu0 %v563, 32
        %v2773 = vpop.permute.xlu0 %2772
        %2774 = vrot.lane.b32.xlu0 %v564, 32
        %v2775 = vpop.permute.xlu0 %2774
        %2776 = vrot.lane.b32.xlu0 %v565, 32
        %v2777 = vpop.permute.xlu0 %2776
        %2778 = vrot.lane.b32.xlu0 %v566, 32
        %v2779 = vpop.permute.xlu0 %2778
        %2780 = vrot.lane.b32.xlu0 %v567, 32
        %v2781 = vpop.permute.xlu0 %2780
        %2782 = vrot.lane.b32.xlu0 %v568, 32
        %v2783 = vpop.permute.xlu0 %2782
        %2784 = vrot.lane.b32.xlu0 %v390, 32
        %v2785 = vpop.permute.xlu0 %2784
        %2786 = vrot.lane.b32.xlu0 %v393, 32
        %v2787 = vpop.permute.xlu0 %2786
        %2788 = vrot.lane.b32.xlu0 %v396, 32
        %v2789 = vpop.permute.xlu0 %2788
        %2790 = vrot.lane.b32.xlu0 %v399, 32
        %v2791 = vpop.permute.xlu0 %2790
        %2792 = vrot.lane.b32.xlu0 %v402, 32
        %v2793 = vpop.permute.xlu0 %2792
        %2794 = vrot.lane.b32.xlu0 %v405, 32
        %v2795 = vpop.permute.xlu0 %2794
        %2796 = vrot.lane.b32.xlu0 %v408, 32
        %v2797 = vpop.permute.xlu0 %2796
        %2798 = vrot.lane.b32.xlu0 %v411, 32
        %v2799 = vpop.permute.xlu0 %2798
        %2800 = vrot.lane.b32.xlu0 %v414, 32
        %v2801 = vpop.permute.xlu0 %2800
        %2802 = vrot.lane.b32.xlu0 %v417, 32
        %v2803 = vpop.permute.xlu0 %2802
        %2804 = vrot.lane.b32.xlu0 %v420, 32
        %v2805 = vpop.permute.xlu0 %2804
        %2806 = vrot.lane.b32.xlu0 %v423, 32
        %v2807 = vpop.permute.xlu0 %2806
        %2808 = vrot.lane.b32.xlu0 %v426, 32
        %v2809 = vpop.permute.xlu0 %2808
        %2810 = vrot.lane.b32.xlu0 %v429, 32
        %v2811 = vpop.permute.xlu0 %2810
        %2812 = vrot.lane.b32.xlu0 %v432, 32
        %v2813 = vpop.permute.xlu0 %2812
        %2814 = vrot.lane.b32.xlu0 %v435, 32
        %v2815 = vpop.permute.xlu0 %2814
        %2816 = vrot.lane.b32.xlu0 %v2721, 32
        %v2817 = vpop.permute.xlu0 %2816
        %2818 = vrot.lane.b32.xlu0 %v2723, 32
        %v2819 = vpop.permute.xlu0 %2818
        %2820 = vrot.lane.b32.xlu0 %v2725, 32
        %v2821 = vpop.permute.xlu0 %2820
        %2822 = vrot.lane.b32.xlu0 %v2727, 32
        %v2823 = vpop.permute.xlu0 %2822
        %2824 = vrot.lane.b32.xlu0 %v2729, 32
        %v2825 = vpop.permute.xlu0 %2824
        %2826 = vrot.lane.b32.xlu0 %v2731, 32
        %v2827 = vpop.permute.xlu0 %2826
        %2828 = vrot.lane.b32.xlu0 %v2733, 32
        %v2829 = vpop.permute.xlu0 %2828
        %2830 = vrot.lane.b32.xlu0 %v2735, 32
        %v2831 = vpop.permute.xlu0 %2830
        %2832 = vrot.lane.b32.xlu0 %v2737, 32
        %v2833 = vpop.permute.xlu0 %2832
        %2834 = vrot.lane.b32.xlu0 %v2739, 32
        %v2835 = vpop.permute.xlu0 %2834
        %2836 = vrot.lane.b32.xlu0 %v2741, 32
        %v2837 = vpop.permute.xlu0 %2836
        %2838 = vrot.lane.b32.xlu0 %v2743, 32
        %v2839 = vpop.permute.xlu0 %2838
        %2840 = vrot.lane.b32.xlu0 %v2745, 32
        %v2841 = vpop.permute.xlu0 %2840
        %2842 = vrot.lane.b32.xlu0 %v2747, 32
        %v2843 = vpop.permute.xlu0 %2842
        %2844 = vrot.lane.b32.xlu0 %v2749, 32
        %v2845 = vpop.permute.xlu0 %2844
        %2846 = vrot.lane.b32.xlu0 %v2751, 32
        %v2847 = vpop.permute.xlu0 %2846
        %v2848 = vsel %vm569, %v2753, 0
        %v2850 = vsel %vm569, %v2755, 0
        %v2852 = vsel %vm569, %v2757, 0
        %v2854 = vsel %vm569, %v2759, 0
        %v2856 = vsel %vm569, %v2761, 0
        %v2858 = vsel %vm569, %v2763, 0
        %v2860 = vsel %vm569, %v2765, 0
        %v2862 = vsel %vm569, %v2767, 0
        %v2864 = vsel %vm569, %v2769, 0
        %v2866 = vsel %vm569, %v2771, 0
        %v2868 = vsel %vm569, %v2773, 0
        %v2870 = vsel %vm569, %v2775, 0
        %v2872 = vsel %vm569, %v2777, 0
        %v2874 = vsel %vm569, %v2779, 0
        %v2876 = vsel %vm569, %v2781, 0
        %v2878 = vsel %vm569, %v2783, 0
        %v2880 = vsel %vm569, %v2785, 0
        %v2882 = vsel %vm569, %v2787, 0
        %v2884 = vsel %vm569, %v2789, 0
        %v2886 = vsel %vm569, %v2791, 0
        %v2888 = vsel %vm569, %v2793, 0
        %v2890 = vsel %vm569, %v2795, 0
        %v2892 = vsel %vm569, %v2797, 0
        %v2894 = vsel %vm569, %v2799, 0
        %v2896 = vsel %vm569, %v2801, 0
        %v2898 = vsel %vm569, %v2803, 0
        %v2900 = vsel %vm569, %v2805, 0
        %v2902 = vsel %vm569, %v2807, 0
        %v2904 = vsel %vm569, %v2809, 0
        %v2906 = vsel %vm569, %v2811, 0
        %v2908 = vsel %vm569, %v2813, 0
        %v2910 = vsel %vm569, %v2815, 0
        %v2912 = vsel %vm569, %v2817, 0
        %v2914 = vsel %vm569, %v2819, 0
        %v2916 = vsel %vm569, %v2821, 0
        %v2918 = vsel %vm569, %v2823, 0
        %v2920 = vsel %vm569, %v2825, 0
        %v2922 = vsel %vm569, %v2827, 0
        %v2924 = vsel %vm569, %v2829, 0
        %v2926 = vsel %vm569, %v2831, 0
        %v2928 = vsel %vm569, %v2833, 0
        %v2930 = vsel %vm569, %v2835, 0
        %v2932 = vsel %vm569, %v2837, 0
        %v2934 = vsel %vm569, %v2839, 0
        %v2936 = vsel %vm569, %v2841, 0
        %v2938 = vsel %vm569, %v2843, 0
        %v2940 = vsel %vm569, %v2845, 0
        %v2942 = vsel %vm569, %v2847, 0
        %2944 = vmatpush.xpose.msra.mxu0 %v2910
        %2945 = vmatpush.xpose.msra.mxu0 %v2908
        %2946 = vmatpush.xpose.msra.mxu0 %v2906
        %2947 = vmatpush.xpose.msra.mxu0 %v2904
        %2948 = vmatpush.xpose.msra.mxu0 %v2902
        %2949 = vmatpush.xpose.msra.mxu0 %v2900
        %2950 = vmatpush.xpose.msra.mxu0 %v2898
        %2951 = vmatpush.xpose.msra.mxu0 %v2896
        %2952 = vmatpush.xpose.msra.mxu0 %v2894
        %2953 = vmatpush.xpose.msra.mxu0 %v2892
        %2954 = vmatpush.xpose.msra.mxu0 %v2890
        %2955 = vmatpush.xpose.msra.mxu0 %v2888
        %2956 = vmatpush.xpose.msra.mxu0 %v2886
        %2957 = vmatpush.xpose.msra.mxu0 %v2884
        %2958 = vmatpush.xpose.msra.mxu0 %v2882
        %2959 = vmatpush.xpose.msra.mxu0 %v2880
        %2960 = vmatmul.f32.gmra.mxu0 %v2848
        %v2961 = vpop.f32.mrf.mxu0
        %v2962 = vadd.f32 0.0, %v2961
        %2963 = vmatmul.f32.gmra.mxu0 %v2850
        %v2964 = vpop.f32.mrf.mxu0
        %v2965 = vadd.f32 0.0, %v2964
        %2966 = vmatmul.f32.gmra.mxu0 %v2852
        %v2967 = vpop.f32.mrf.mxu0
        %v2968 = vadd.f32 0.0, %v2967
        %2969 = vmatmul.f32.gmra.mxu0 %v2854
        %v2970 = vpop.f32.mrf.mxu0
        %v2971 = vadd.f32 0.0, %v2970
        %2972 = vmatmul.f32.gmra.mxu0 %v2856
        %v2973 = vpop.f32.mrf.mxu0
        %v2974 = vadd.f32 0.0, %v2973
        %2975 = vmatmul.f32.gmra.mxu0 %v2858
        %v2976 = vpop.f32.mrf.mxu0
        %v2977 = vadd.f32 0.0, %v2976
        %2978 = vmatmul.f32.gmra.mxu0 %v2860
        %v2979 = vpop.f32.mrf.mxu0
        %v2980 = vadd.f32 0.0, %v2979
        %2981 = vmatmul.f32.gmra.mxu0 %v2862
        %v2982 = vpop.f32.mrf.mxu0
        %v2983 = vadd.f32 0.0, %v2982
        %2984 = vmatmul.f32.gmra.mxu0 %v2864
        %v2985 = vpop.f32.mrf.mxu0
        %v2986 = vadd.f32 0.0, %v2985
        %2987 = vmatmul.f32.gmra.mxu0 %v2866
        %v2988 = vpop.f32.mrf.mxu0
        %v2989 = vadd.f32 0.0, %v2988
        %2990 = vmatmul.f32.gmra.mxu0 %v2868
        %v2991 = vpop.f32.mrf.mxu0
        %v2992 = vadd.f32 0.0, %v2991
        %2993 = vmatmul.f32.gmra.mxu0 %v2870
        %v2994 = vpop.f32.mrf.mxu0
        %v2995 = vadd.f32 0.0, %v2994
        %2996 = vmatmul.f32.gmra.mxu0 %v2872
        %v2997 = vpop.f32.mrf.mxu0
        %v2998 = vadd.f32 0.0, %v2997
        %2999 = vmatmul.f32.gmra.mxu0 %v2874
        %v3000 = vpop.f32.mrf.mxu0
        %v3001 = vadd.f32 0.0, %v3000
        %3002 = vmatmul.f32.gmra.mxu0 %v2876
        %v3003 = vpop.f32.mrf.mxu0
        %v3004 = vadd.f32 0.0, %v3003
        %3005 = vmatmul.f32.gmra.mxu0 %v2878
        %v3006 = vpop.f32.mrf.mxu0
        %v3007 = vadd.f32 0.0, %v3006
        %3008 = vdwg.mxu0
        %3009 = vmatpush.xpose.msra.mxu0 %v2942
        %3010 = vmatpush.xpose.msra.mxu0 %v2940
        %3011 = vmatpush.xpose.msra.mxu0 %v2938
        %3012 = vmatpush.xpose.msra.mxu0 %v2936
        %3013 = vmatpush.xpose.msra.mxu0 %v2934
        %3014 = vmatpush.xpose.msra.mxu0 %v2932
        %3015 = vmatpush.xpose.msra.mxu0 %v2930
        %3016 = vmatpush.xpose.msra.mxu0 %v2928
        %3017 = vmatpush.xpose.msra.mxu0 %v2926
        %3018 = vmatpush.xpose.msra.mxu0 %v2924
        %3019 = vmatpush.xpose.msra.mxu0 %v2922
        %3020 = vmatpush.xpose.msra.mxu0 %v2920
        %3021 = vmatpush.xpose.msra.mxu0 %v2918
        %3022 = vmatpush.xpose.msra.mxu0 %v2916
        %3023 = vmatpush.xpose.msra.mxu0 %v2914
        %3024 = vmatpush.xpose.msra.mxu0 %v2912
        %3025 = vmatmul.f32.gmra.mxu0 %v2848
        %v3026 = vpop.f32.mrf.mxu0
        %v3027 = vadd.f32 0.0, %v3026
        %3028 = vmatmul.f32.gmra.mxu0 %v2850
        %v3029 = vpop.f32.mrf.mxu0
        %v3030 = vadd.f32 0.0, %v3029
        %3031 = vmatmul.f32.gmra.mxu0 %v2852
        %v3032 = vpop.f32.mrf.mxu0
        %v3033 = vadd.f32 0.0, %v3032
        %3034 = vmatmul.f32.gmra.mxu0 %v2854
        %v3035 = vpop.f32.mrf.mxu0
        %v3036 = vadd.f32 0.0, %v3035
        %3037 = vmatmul.f32.gmra.mxu0 %v2856
        %v3038 = vpop.f32.mrf.mxu0
        %v3039 = vadd.f32 0.0, %v3038
        %3040 = vmatmul.f32.gmra.mxu0 %v2858
        %v3041 = vpop.f32.mrf.mxu0
        %v3042 = vadd.f32 0.0, %v3041
        %3043 = vmatmul.f32.gmra.mxu0 %v2860
        %v3044 = vpop.f32.mrf.mxu0
        %v3045 = vadd.f32 0.0, %v3044
        %3046 = vmatmul.f32.gmra.mxu0 %v2862
        %v3047 = vpop.f32.mrf.mxu0
        %v3048 = vadd.f32 0.0, %v3047
        %3049 = vmatmul.f32.gmra.mxu0 %v2864
        %v3050 = vpop.f32.mrf.mxu0
        %v3051 = vadd.f32 0.0, %v3050
        %3052 = vmatmul.f32.gmra.mxu0 %v2866
        %v3053 = vpop.f32.mrf.mxu0
        %v3054 = vadd.f32 0.0, %v3053
        %3055 = vmatmul.f32.gmra.mxu0 %v2868
        %v3056 = vpop.f32.mrf.mxu0
        %v3057 = vadd.f32 0.0, %v3056
        %3058 = vmatmul.f32.gmra.mxu0 %v2870
        %v3059 = vpop.f32.mrf.mxu0
        %v3060 = vadd.f32 0.0, %v3059
        %3061 = vmatmul.f32.gmra.mxu0 %v2872
        %v3062 = vpop.f32.mrf.mxu0
        %v3063 = vadd.f32 0.0, %v3062
        %3064 = vmatmul.f32.gmra.mxu0 %v2874
        %v3065 = vpop.f32.mrf.mxu0
        %v3066 = vadd.f32 0.0, %v3065
        %3067 = vmatmul.f32.gmra.mxu0 %v2876
        %v3068 = vpop.f32.mrf.mxu0
        %v3069 = vadd.f32 0.0, %v3068
        %3070 = vmatmul.f32.gmra.mxu0 %v2878
        %v3071 = vpop.f32.mrf.mxu0
        %v3072 = vadd.f32 0.0, %v3071
        %3073 = vdwg.mxu0
        %3075 = vrot.lane.b32.xlu0 %v3027, 256
        %v3076 = vpop.permute.xlu0 %3075
        %s3078 = sor.u32 256, 8
        %3079 = vrot.lane.b32.xlu0 %v3030, %s3078
        %v3080 = vpop.permute.xlu0 %3079
        %s3082 = sor.u32 256, 16
        %3083 = vrot.lane.b32.xlu0 %v3033, %s3082
        %v3084 = vpop.permute.xlu0 %3083
        %s3086 = sor.u32 256, 24
        %3087 = vrot.lane.b32.xlu0 %v3036, %s3086
        %v3088 = vpop.permute.xlu0 %3087
        %s3090 = sor.u32 256, 32
        %3091 = vrot.lane.b32.xlu0 %v3039, %s3090
        %v3092 = vpop.permute.xlu0 %3091
        %s3094 = sor.u32 256, 40
        %3095 = vrot.lane.b32.xlu0 %v3042, %s3094
        %v3096 = vpop.permute.xlu0 %3095
        %s3098 = sor.u32 256, 48
        %3099 = vrot.lane.b32.xlu0 %v3045, %s3098
        %v3100 = vpop.permute.xlu0 %3099
        %s3102 = sor.u32 256, 56
        %3103 = vrot.lane.b32.xlu0 %v3048, %s3102
        %v3104 = vpop.permute.xlu0 %3103
        %s3106 = sor.u32 256, 64
        %3107 = vrot.lane.b32.xlu0 %v3051, %s3106
        %v3108 = vpop.permute.xlu0 %3107
        %s3110 = sor.u32 256, 72
        %3111 = vrot.lane.b32.xlu0 %v3054, %s3110
        %v3112 = vpop.permute.xlu0 %3111
        %s3114 = sor.u32 256, 80
        %3115 = vrot.lane.b32.xlu0 %v3057, %s3114
        %v3116 = vpop.permute.xlu0 %3115
        %s3118 = sor.u32 256, 88
        %3119 = vrot.lane.b32.xlu0 %v3060, %s3118
        %v3120 = vpop.permute.xlu0 %3119
        %s3122 = sor.u32 256, 96
        %3123 = vrot.lane.b32.xlu0 %v3063, %s3122
        %v3124 = vpop.permute.xlu0 %3123
        %s3126 = sor.u32 256, 104
        %3127 = vrot.lane.b32.xlu0 %v3066, %s3126
        %v3128 = vpop.permute.xlu0 %3127
        %s3130 = sor.u32 256, 112
        %3131 = vrot.lane.b32.xlu0 %v3069, %s3130
        %v3132 = vpop.permute.xlu0 %3131
        %s3134 = sor.u32 256, 120
        %3135 = vrot.lane.b32.xlu0 %v3072, %s3134
        %v3136 = vpop.permute.xlu0 %3135
        %v3137 = vadd.f32 %v2962, %v3076
        %v3138 = vadd.f32 %v2965, %v3080
        %v3139 = vadd.f32 %v2968, %v3084
        %v3140 = vadd.f32 %v2971, %v3088
        %v3141 = vadd.f32 %v2974, %v3092
        %v3142 = vadd.f32 %v2977, %v3096
        %v3143 = vadd.f32 %v2980, %v3100
        %v3144 = vadd.f32 %v2983, %v3104
        %v3145 = vadd.f32 %v2986, %v3108
        %v3146 = vadd.f32 %v2989, %v3112
        %v3147 = vadd.f32 %v2992, %v3116
        %v3148 = vadd.f32 %v2995, %v3120
        %v3149 = vadd.f32 %v2998, %v3124
        %v3150 = vadd.f32 %v3001, %v3128
        %v3151 = vadd.f32 %v3004, %v3132
        %v3152 = vadd.f32 %v3007, %v3136
        %v3153 = vsel %vm537, %v3137, -inf
        %v3154 = vsel %vm538, %v3138, -inf
        %v3155 = vsel %vm539, %v3139, -inf
        %v3156 = vsel %vm540, %v3140, -inf
        %v3157 = vsel %vm541, %v3141, -inf
        %v3158 = vsel %vm542, %v3142, -inf
        %v3159 = vsel %vm543, %v3143, -inf
        %v3160 = vsel %vm544, %v3144, -inf
        %v3161 = vsel %vm545, %v3145, -inf
        %v3162 = vsel %vm546, %v3146, -inf
        %v3163 = vsel %vm547, %v3147, -inf
        %v3164 = vsel %vm548, %v3148, -inf
        %v3165 = vsel %vm549, %v3149, -inf
        %v3166 = vsel %vm550, %v3150, -inf
        %v3167 = vsel %vm551, %v3151, -inf
        %v3168 = vsel %vm552, %v3152, -inf
        %3169 = vmax.xlane.f32.xlu0 %v3153
        %v3170 = vpop.xlane.xlu0 %3169
        %3171 = vmax.xlane.f32.xlu0 %v3154
        %v3172 = vpop.xlane.xlu0 %3171
        %3173 = vmax.xlane.f32.xlu0 %v3155
        %v3174 = vpop.xlane.xlu0 %3173
        %3175 = vmax.xlane.f32.xlu0 %v3156
        %v3176 = vpop.xlane.xlu0 %3175
        %3177 = vmax.xlane.f32.xlu0 %v3157
        %v3178 = vpop.xlane.xlu0 %3177
        %3179 = vmax.xlane.f32.xlu0 %v3158
        %v3180 = vpop.xlane.xlu0 %3179
        %3181 = vmax.xlane.f32.xlu0 %v3159
        %v3182 = vpop.xlane.xlu0 %3181
        %3183 = vmax.xlane.f32.xlu0 %v3160
        %v3184 = vpop.xlane.xlu0 %3183
        %3185 = vmax.xlane.f32.xlu0 %v3161
        %v3186 = vpop.xlane.xlu0 %3185
        %3187 = vmax.xlane.f32.xlu0 %v3162
        %v3188 = vpop.xlane.xlu0 %3187
        %3189 = vmax.xlane.f32.xlu0 %v3163
        %v3190 = vpop.xlane.xlu0 %3189
        %3191 = vmax.xlane.f32.xlu0 %v3164
        %v3192 = vpop.xlane.xlu0 %3191
        %3193 = vmax.xlane.f32.xlu0 %v3165
        %v3194 = vpop.xlane.xlu0 %3193
        %3195 = vmax.xlane.f32.xlu0 %v3166
        %v3196 = vpop.xlane.xlu0 %3195
        %3197 = vmax.xlane.f32.xlu0 %v3167
        %v3198 = vpop.xlane.xlu0 %3197
        %3199 = vmax.xlane.f32.xlu0 %v3168
        %v3200 = vpop.xlane.xlu0 %3199
        %v3201 = vsub.f32 %v3153, %v3170
        %v3202 = vsub.f32 %v3154, %v3172
        %v3203 = vsub.f32 %v3155, %v3174
        %v3204 = vsub.f32 %v3156, %v3176
        %v3205 = vsub.f32 %v3157, %v3178
        %v3206 = vsub.f32 %v3158, %v3180
        %v3207 = vsub.f32 %v3159, %v3182
        %v3208 = vsub.f32 %v3160, %v3184
        %v3209 = vsub.f32 %v3161, %v3186
        %v3210 = vsub.f32 %v3162, %v3188
        %v3211 = vsub.f32 %v3163, %v3190
        %v3212 = vsub.f32 %v3164, %v3192
        %v3213 = vsub.f32 %v3165, %v3194
        %v3214 = vsub.f32 %v3166, %v3196
        %v3215 = vsub.f32 %v3167, %v3198
        %v3216 = vsub.f32 %v3168, %v3200
        %v3217 = vmul.f32 %v3201, 1.442695
        %v3218 = vpow.pop %v3217
        %v3219 = vmul.f32 %v3202, 1.442695
        %v3220 = vpow.pop %v3219
        %v3221 = vmul.f32 %v3203, 1.442695
        %v3222 = vpow.pop %v3221
        %v3223 = vmul.f32 %v3204, 1.442695
        %v3224 = vpow.pop %v3223
        %v3225 = vmul.f32 %v3205, 1.442695
        %v3226 = vpow.pop %v3225
        %v3227 = vmul.f32 %v3206, 1.442695
        %v3228 = vpow.pop %v3227
        %v3229 = vmul.f32 %v3207, 1.442695
        %v3230 = vpow.pop %v3229
        %v3231 = vmul.f32 %v3208, 1.442695
        %v3232 = vpow.pop %v3231
        %v3233 = vmul.f32 %v3209, 1.442695
        %v3234 = vpow.pop %v3233
        %v3235 = vmul.f32 %v3210, 1.442695
        %v3236 = vpow.pop %v3235
        %v3237 = vmul.f32 %v3211, 1.442695
        %v3238 = vpow.pop %v3237
        %v3239 = vmul.f32 %v3212, 1.442695
        %v3240 = vpow.pop %v3239
        %v3241 = vmul.f32 %v3213, 1.442695
        %v3242 = vpow.pop %v3241
        %v3243 = vmul.f32 %v3214, 1.442695
        %v3244 = vpow.pop %v3243
        %v3245 = vmul.f32 %v3215, 1.442695
        %v3246 = vpow.pop %v3245
        %v3247 = vmul.f32 %v3216, 1.442695
        %v3248 = vpow.pop %v3247
        %3249 = vadd.xlane.f32.xlu0 %v3218
        %v3250 = vpop.xlane.xlu0 %3249
        %3251 = vadd.xlane.f32.xlu0 %v3220
        %v3252 = vpop.xlane.xlu0 %3251
        %3253 = vadd.xlane.f32.xlu0 %v3222
        %v3254 = vpop.xlane.xlu0 %3253
        %3255 = vadd.xlane.f32.xlu0 %v3224
        %v3256 = vpop.xlane.xlu0 %3255
        %3257 = vadd.xlane.f32.xlu0 %v3226
        %v3258 = vpop.xlane.xlu0 %3257
        %3259 = vadd.xlane.f32.xlu0 %v3228
        %v3260 = vpop.xlane.xlu0 %3259
        %3261 = vadd.xlane.f32.xlu0 %v3230
        %v3262 = vpop.xlane.xlu0 %3261
        %3263 = vadd.xlane.f32.xlu0 %v3232
        %v3264 = vpop.xlane.xlu0 %3263
        %3265 = vadd.xlane.f32.xlu0 %v3234
        %v3266 = vpop.xlane.xlu0 %3265
        %3267 = vadd.xlane.f32.xlu0 %v3236
        %v3268 = vpop.xlane.xlu0 %3267
        %3269 = vadd.xlane.f32.xlu0 %v3238
        %v3270 = vpop.xlane.xlu0 %3269
        %3271 = vadd.xlane.f32.xlu0 %v3240
        %v3272 = vpop.xlane.xlu0 %3271
        %3273 = vadd.xlane.f32.xlu0 %v3242
        %v3274 = vpop.xlane.xlu0 %3273
        %3275 = vadd.xlane.f32.xlu0 %v3244
        %v3276 = vpop.xlane.xlu0 %3275
        %3277 = vadd.xlane.f32.xlu0 %v3246
        %v3278 = vpop.xlane.xlu0 %3277
        %3279 = vadd.xlane.f32.xlu0 %v3248
        %v3280 = vpop.xlane.xlu0 %3279
        %v3281 = vrcp.pop %v3250
        %v3282 = vrcp.pop %v3252
        %v3283 = vrcp.pop %v3254
        %v3284 = vrcp.pop %v3256
        %v3285 = vrcp.pop %v3258
        %v3286 = vrcp.pop %v3260
        %v3287 = vrcp.pop %v3262
        %v3288 = vrcp.pop %v3264
        %v3289 = vrcp.pop %v3266
        %v3290 = vrcp.pop %v3268
        %v3291 = vrcp.pop %v3270
        %v3292 = vrcp.pop %v3272
        %v3293 = vrcp.pop %v3274
        %v3294 = vrcp.pop %v3276
        %v3295 = vrcp.pop %v3278
        %v3296 = vrcp.pop %v3280
        %v3297 = vmul.f32 %v3250, %v3281
        %v3298 = vmul.f32 %v3252, %v3282
        %v3299 = vmul.f32 %v3254, %v3283
        %v3300 = vmul.f32 %v3256, %v3284
        %v3301 = vmul.f32 %v3258, %v3285
        %v3302 = vmul.f32 %v3260, %v3286
        %v3303 = vmul.f32 %v3262, %v3287
        %v3304 = vmul.f32 %v3264, %v3288
        %v3305 = vmul.f32 %v3266, %v3289
        %v3306 = vmul.f32 %v3268, %v3290
        %v3307 = vmul.f32 %v3270, %v3291
        %v3308 = vmul.f32 %v3272, %v3292
        %v3309 = vmul.f32 %v3274, %v3293
        %v3310 = vmul.f32 %v3276, %v3294
        %v3311 = vmul.f32 %v3278, %v3295
        %v3312 = vmul.f32 %v3280, %v3296
        %v3313 = vsub.f32 2.0, %v3297
        %v3314 = vsub.f32 2.0, %v3298
        %v3315 = vsub.f32 2.0, %v3299
        %v3316 = vsub.f32 2.0, %v3300
        %v3317 = vsub.f32 2.0, %v3301
        %v3318 = vsub.f32 2.0, %v3302
        %v3319 = vsub.f32 2.0, %v3303
        %v3320 = vsub.f32 2.0, %v3304
        %v3321 = vsub.f32 2.0, %v3305
        %v3322 = vsub.f32 2.0, %v3306
        %v3323 = vsub.f32 2.0, %v3307
        %v3324 = vsub.f32 2.0, %v3308
        %v3325 = vsub.f32 2.0, %v3309
        %v3326 = vsub.f32 2.0, %v3310
        %v3327 = vsub.f32 2.0, %v3311
        %v3328 = vsub.f32 2.0, %v3312
        %v3329 = vmul.f32 %v3281, %v3313
        %v3330 = vmul.f32 %v3282, %v3314
        %v3331 = vmul.f32 %v3283, %v3315
        %v3332 = vmul.f32 %v3284, %v3316
        %v3333 = vmul.f32 %v3285, %v3317
        %v3334 = vmul.f32 %v3286, %v3318
        %v3335 = vmul.f32 %v3287, %v3319
        %v3336 = vmul.f32 %v3288, %v3320
        %v3337 = vmul.f32 %v3289, %v3321
        %v3338 = vmul.f32 %v3290, %v3322
        %v3339 = vmul.f32 %v3291, %v3323
        %v3340 = vmul.f32 %v3292, %v3324
        %v3341 = vmul.f32 %v3293, %v3325
        %v3342 = vmul.f32 %v3294, %v3326
        %v3343 = vmul.f32 %v3295, %v3327
        %v3344 = vmul.f32 %v3296, %v3328
        %v3345 = vmul.f32 %v3218, %v3329
        %v3346 = vmul.f32 %v3220, %v3330
        %v3347 = vmul.f32 %v3222, %v3331
        %v3348 = vmul.f32 %v3224, %v3332
        %v3349 = vmul.f32 %v3226, %v3333
        %v3350 = vmul.f32 %v3228, %v3334
        %v3351 = vmul.f32 %v3230, %v3335
        %v3352 = vmul.f32 %v3232, %v3336
        %v3353 = vmul.f32 %v3234, %v3337
        %v3354 = vmul.f32 %v3236, %v3338
        %v3355 = vmul.f32 %v3238, %v3339
        %v3356 = vmul.f32 %v3240, %v3340
        %v3357 = vmul.f32 %v3242, %v3341
        %v3358 = vmul.f32 %v3244, %v3342
        %v3359 = vmul.f32 %v3246, %v3343
        %v3360 = vmul.f32 %v3248, %v3344
        %3361 = vrot.lane.b32.xlu0 %v455, 32
        %v3362 = vpop.permute.xlu0 %3361
        %3363 = vrot.lane.b32.xlu0 %v458, 32
        %v3364 = vpop.permute.xlu0 %3363
        %3365 = vrot.lane.b32.xlu0 %v461, 32
        %v3366 = vpop.permute.xlu0 %3365
        %3367 = vrot.lane.b32.xlu0 %v464, 32
        %v3368 = vpop.permute.xlu0 %3367
        %3369 = vrot.lane.b32.xlu0 %v467, 32
        %v3370 = vpop.permute.xlu0 %3369
        %3371 = vrot.lane.b32.xlu0 %v470, 32
        %v3372 = vpop.permute.xlu0 %3371
        %3373 = vrot.lane.b32.xlu0 %v473, 32
        %v3374 = vpop.permute.xlu0 %3373
        %3375 = vrot.lane.b32.xlu0 %v476, 32
        %v3376 = vpop.permute.xlu0 %3375
        %3377 = vrot.lane.b32.xlu0 %v479, 32
        %v3378 = vpop.permute.xlu0 %3377
        %3379 = vrot.lane.b32.xlu0 %v482, 32
        %v3380 = vpop.permute.xlu0 %3379
        %3381 = vrot.lane.b32.xlu0 %v485, 32
        %v3382 = vpop.permute.xlu0 %3381
        %3383 = vrot.lane.b32.xlu0 %v488, 32
        %v3384 = vpop.permute.xlu0 %3383
        %3385 = vrot.lane.b32.xlu0 %v491, 32
        %v3386 = vpop.permute.xlu0 %3385
        %3387 = vrot.lane.b32.xlu0 %v494, 32
        %v3388 = vpop.permute.xlu0 %3387
        %3389 = vrot.lane.b32.xlu0 %v497, 32
        %v3390 = vpop.permute.xlu0 %3389
        %3391 = vrot.lane.b32.xlu0 %v500, 32
        %v3392 = vpop.permute.xlu0 %3391
        %3409 = vmatpush.msra.mxu0 %v3392
        %3410 = vmatpush.msra.mxu0 %v3390
        %3411 = vmatpush.msra.mxu0 %v3388
        %3412 = vmatpush.msra.mxu0 %v3386
        %3413 = vmatpush.msra.mxu0 %v3384
        %3414 = vmatpush.msra.mxu0 %v3382
        %3415 = vmatpush.msra.mxu0 %v3380
        %3416 = vmatpush.msra.mxu0 %v3378
        %3417 = vmatpush.msra.mxu0 %v3376
        %3418 = vmatpush.msra.mxu0 %v3374
        %3419 = vmatpush.msra.mxu0 %v3372
        %3420 = vmatpush.msra.mxu0 %v3370
        %3421 = vmatpush.msra.mxu0 %v3368
        %3422 = vmatpush.msra.mxu0 %v3366
        %3423 = vmatpush.msra.mxu0 %v3364
        %3424 = vmatpush.msra.mxu0 %v3362
        %3425 = vmatmul.f32.gmra.mxu0 %v3345
        %v3426 = vpop.f32.mrf.mxu0
        %v3427 = vadd.f32 0.0, %v3426
        %3428 = vmatmul.f32.gmra.mxu0 %v3346
        %v3429 = vpop.f32.mrf.mxu0
        %v3430 = vadd.f32 0.0, %v3429
        %3431 = vmatmul.f32.gmra.mxu0 %v3347
        %v3432 = vpop.f32.mrf.mxu0
        %v3433 = vadd.f32 0.0, %v3432
        %3434 = vmatmul.f32.gmra.mxu0 %v3348
        %v3435 = vpop.f32.mrf.mxu0
        %v3436 = vadd.f32 0.0, %v3435
        %3437 = vmatmul.f32.gmra.mxu0 %v3349
        %v3438 = vpop.f32.mrf.mxu0
        %v3439 = vadd.f32 0.0, %v3438
        %3440 = vmatmul.f32.gmra.mxu0 %v3350
        %v3441 = vpop.f32.mrf.mxu0
        %v3442 = vadd.f32 0.0, %v3441
        %3443 = vmatmul.f32.gmra.mxu0 %v3351
        %v3444 = vpop.f32.mrf.mxu0
        %v3445 = vadd.f32 0.0, %v3444
        %3446 = vmatmul.f32.gmra.mxu0 %v3352
        %v3447 = vpop.f32.mrf.mxu0
        %v3448 = vadd.f32 0.0, %v3447
        %3449 = vmatmul.f32.gmra.mxu0 %v3353
        %v3450 = vpop.f32.mrf.mxu0
        %v3451 = vadd.f32 0.0, %v3450
        %3452 = vmatmul.f32.gmra.mxu0 %v3354
        %v3453 = vpop.f32.mrf.mxu0
        %v3454 = vadd.f32 0.0, %v3453
        %3455 = vmatmul.f32.gmra.mxu0 %v3355
        %v3456 = vpop.f32.mrf.mxu0
        %v3457 = vadd.f32 0.0, %v3456
        %3458 = vmatmul.f32.gmra.mxu0 %v3356
        %v3459 = vpop.f32.mrf.mxu0
        %v3460 = vadd.f32 0.0, %v3459
        %3461 = vmatmul.f32.gmra.mxu0 %v3357
        %v3462 = vpop.f32.mrf.mxu0
        %v3463 = vadd.f32 0.0, %v3462
        %3464 = vmatmul.f32.gmra.mxu0 %v3358
        %v3465 = vpop.f32.mrf.mxu0
        %v3466 = vadd.f32 0.0, %v3465
        %3467 = vmatmul.f32.gmra.mxu0 %v3359
        %v3468 = vpop.f32.mrf.mxu0
        %v3469 = vadd.f32 0.0, %v3468
        %3470 = vmatmul.f32.gmra.mxu0 %v3360
        %v3471 = vpop.f32.mrf.mxu0
        %v3472 = vadd.f32 0.0, %v3471
        %3473 = vdwg.mxu0
        %3490 = vrot.lane.b32.xlu0 %v1919, 32
        %v3491 = vpop.permute.xlu0 %3490
        %3492 = vrot.lane.b32.xlu0 %v1922, 32
        %v3493 = vpop.permute.xlu0 %3492
        %3494 = vrot.lane.b32.xlu0 %v1925, 32
        %v3495 = vpop.permute.xlu0 %3494
        %3496 = vrot.lane.b32.xlu0 %v1928, 32
        %v3497 = vpop.permute.xlu0 %3496
        %3498 = vrot.lane.b32.xlu0 %v1931, 32
        %v3499 = vpop.permute.xlu0 %3498
        %3500 = vrot.lane.b32.xlu0 %v1934, 32
        %v3501 = vpop.permute.xlu0 %3500
        %3502 = vrot.lane.b32.xlu0 %v1937, 32
        %v3503 = vpop.permute.xlu0 %3502
        %3504 = vrot.lane.b32.xlu0 %v1940, 32
        %v3505 = vpop.permute.xlu0 %3504
        %3506 = vrot.lane.b32.xlu0 %v1943, 32
        %v3507 = vpop.permute.xlu0 %3506
        %3508 = vrot.lane.b32.xlu0 %v1946, 32
        %v3509 = vpop.permute.xlu0 %3508
        %3510 = vrot.lane.b32.xlu0 %v1949, 32
        %v3511 = vpop.permute.xlu0 %3510
        %3512 = vrot.lane.b32.xlu0 %v1952, 32
        %v3513 = vpop.permute.xlu0 %3512
        %3514 = vrot.lane.b32.xlu0 %v1955, 32
        %v3515 = vpop.permute.xlu0 %3514
        %3516 = vrot.lane.b32.xlu0 %v1958, 32
        %v3517 = vpop.permute.xlu0 %3516
        %3518 = vrot.lane.b32.xlu0 %v1961, 32
        %v3519 = vpop.permute.xlu0 %3518
        %3520 = vrot.lane.b32.xlu0 %v1964, 32
        %v3521 = vpop.permute.xlu0 %3520
        %3554 = vrot.lane.b32.xlu0 %v2673, 64
        %v3555 = vpop.permute.xlu0 %3554
        %3556 = vrot.lane.b32.xlu0 %v2676, 64
        %v3557 = vpop.permute.xlu0 %3556
        %3558 = vrot.lane.b32.xlu0 %v2679, 64
        %v3559 = vpop.permute.xlu0 %3558
        %3560 = vrot.lane.b32.xlu0 %v2682, 64
        %v3561 = vpop.permute.xlu0 %3560
        %3562 = vrot.lane.b32.xlu0 %v2685, 64
        %v3563 = vpop.permute.xlu0 %3562
        %3564 = vrot.lane.b32.xlu0 %v2688, 64
        %v3565 = vpop.permute.xlu0 %3564
        %3566 = vrot.lane.b32.xlu0 %v2691, 64
        %v3567 = vpop.permute.xlu0 %3566
        %3568 = vrot.lane.b32.xlu0 %v2694, 64
        %v3569 = vpop.permute.xlu0 %3568
        %3570 = vrot.lane.b32.xlu0 %v2697, 64
        %v3571 = vpop.permute.xlu0 %3570
        %3572 = vrot.lane.b32.xlu0 %v2700, 64
        %v3573 = vpop.permute.xlu0 %3572
        %3574 = vrot.lane.b32.xlu0 %v2703, 64
        %v3575 = vpop.permute.xlu0 %3574
        %3576 = vrot.lane.b32.xlu0 %v2706, 64
        %v3577 = vpop.permute.xlu0 %3576
        %3578 = vrot.lane.b32.xlu0 %v2709, 64
        %v3579 = vpop.permute.xlu0 %3578
        %3580 = vrot.lane.b32.xlu0 %v2712, 64
        %v3581 = vpop.permute.xlu0 %3580
        %3582 = vrot.lane.b32.xlu0 %v2715, 64
        %v3583 = vpop.permute.xlu0 %3582
        %3584 = vrot.lane.b32.xlu0 %v2718, 64
        %v3585 = vpop.permute.xlu0 %3584
        %3618 = vrot.lane.b32.xlu0 %v3427, 96
        %v3619 = vpop.permute.xlu0 %3618
        %3620 = vrot.lane.b32.xlu0 %v3430, 96
        %v3621 = vpop.permute.xlu0 %3620
        %3622 = vrot.lane.b32.xlu0 %v3433, 96
        %v3623 = vpop.permute.xlu0 %3622
        %3624 = vrot.lane.b32.xlu0 %v3436, 96
        %v3625 = vpop.permute.xlu0 %3624
        %3626 = vrot.lane.b32.xlu0 %v3439, 96
        %v3627 = vpop.permute.xlu0 %3626
        %3628 = vrot.lane.b32.xlu0 %v3442, 96
        %v3629 = vpop.permute.xlu0 %3628
        %3630 = vrot.lane.b32.xlu0 %v3445, 96
        %v3631 = vpop.permute.xlu0 %3630
        %3632 = vrot.lane.b32.xlu0 %v3448, 96
        %v3633 = vpop.permute.xlu0 %3632
        %3634 = vrot.lane.b32.xlu0 %v3451, 96
        %v3635 = vpop.permute.xlu0 %3634
        %3636 = vrot.lane.b32.xlu0 %v3454, 96
        %v3637 = vpop.permute.xlu0 %3636
        %3638 = vrot.lane.b32.xlu0 %v3457, 96
        %v3639 = vpop.permute.xlu0 %3638
        %3640 = vrot.lane.b32.xlu0 %v3460, 96
        %v3641 = vpop.permute.xlu0 %3640
        %3642 = vrot.lane.b32.xlu0 %v3463, 96
        %v3643 = vpop.permute.xlu0 %3642
        %3644 = vrot.lane.b32.xlu0 %v3466, 96
        %v3645 = vpop.permute.xlu0 %3644
        %3646 = vrot.lane.b32.xlu0 %v3469, 96
        %v3647 = vpop.permute.xlu0 %3646
        %3648 = vrot.lane.b32.xlu0 %v3472, 96
        %v3649 = vpop.permute.xlu0 %3648
        %v3666 = vsel %vm569, %v1149, %v3491
        %v3667 = vsel %vm569, %v1152, %v3493
        %v3668 = vsel %vm569, %v1155, %v3495
        %v3669 = vsel %vm569, %v1158, %v3497
        %v3670 = vsel %vm569, %v1161, %v3499
        %v3671 = vsel %vm569, %v1164, %v3501
        %v3672 = vsel %vm569, %v1167, %v3503
        %v3673 = vsel %vm569, %v1170, %v3505
        %v3674 = vsel %vm569, %v1173, %v3507
        %v3675 = vsel %vm569, %v1176, %v3509
        %v3676 = vsel %vm569, %v1179, %v3511
        %v3677 = vsel %vm569, %v1182, %v3513
        %v3678 = vsel %vm569, %v1185, %v3515
        %v3679 = vsel %vm569, %v1188, %v3517
        %v3680 = vsel %vm569, %v1191, %v3519
        %v3681 = vsel %vm569, %v1194, %v3521
        %vm3682 = vcmask 523264
        %v3683 = vsel %vm3682, %v3666, %v3555
        %v3684 = vsel %vm3682, %v3667, %v3557
        %v3685 = vsel %vm3682, %v3668, %v3559
        %v3686 = vsel %vm3682, %v3669, %v3561
        %v3687 = vsel %vm3682, %v3670, %v3563
        %v3688 = vsel %vm3682, %v3671, %v3565
        %v3689 = vsel %vm3682, %v3672, %v3567
        %v3690 = vsel %vm3682, %v3673, %v3569
        %v3691 = vsel %vm3682, %v3674, %v3571
        %v3692 = vsel %vm3682, %v3675, %v3573
        %v3693 = vsel %vm3682, %v3676, %v3575
        %v3694 = vsel %vm3682, %v3677, %v3577
        %v3695 = vsel %vm3682, %v3678, %v3579
        %v3696 = vsel %vm3682, %v3679, %v3581
        %v3697 = vsel %vm3682, %v3680, %v3583
        %v3698 = vsel %vm3682, %v3681, %v3585
        %vm3699 = vcmask 785408
        %v3700 = vsel %vm3699, %v3683, %v3619
        %v3701 = vsel %vm3699, %v3684, %v3621
        %v3702 = vsel %vm3699, %v3685, %v3623
        %v3703 = vsel %vm3699, %v3686, %v3625
        %v3704 = vsel %vm3699, %v3687, %v3627
        %v3705 = vsel %vm3699, %v3688, %v3629
        %v3706 = vsel %vm3699, %v3689, %v3631
        %v3707 = vsel %vm3699, %v3690, %v3633
        %v3708 = vsel %vm3699, %v3691, %v3635
        %v3709 = vsel %vm3699, %v3692, %v3637
        %v3710 = vsel %vm3699, %v3693, %v3639
        %v3711 = vsel %vm3699, %v3694, %v3641
        %v3712 = vsel %vm3699, %v3695, %v3643
        %v3713 = vsel %vm3699, %v3696, %v3645
        %v3714 = vsel %vm3699, %v3697, %v3647
        %v3715 = vsel %vm3699, %v3698, %v3649
        %3716 = vst [vmem:[%s234] sm:$0xff] %v3700
        %3717 = vst [vmem:[%s234 + $0x8] sm:$0xff] %v3701
        %3718 = vst [vmem:[%s234 + $0x10] sm:$0xff] %v3702
        %3719 = vst [vmem:[%s234 + $0x18] sm:$0xff] %v3703
        %3720 = vst [vmem:[%s234 + $0x20] sm:$0xff] %v3704
        %3721 = vst [vmem:[%s234 + $0x28] sm:$0xff] %v3705
        %3722 = vst [vmem:[%s234 + $0x30] sm:$0xff] %v3706
        %3723 = vst [vmem:[%s234 + $0x38] sm:$0xff] %v3707
        %3724 = vst [vmem:[%s234 + $0x40] sm:$0xff] %v3708
        %3725 = vst [vmem:[%s234 + $0x48] sm:$0xff] %v3709
        %3726 = vst [vmem:[%s234 + $0x50] sm:$0xff] %v3710
        %3727 = vst [vmem:[%s234 + $0x58] sm:$0xff] %v3711
        %3728 = vst [vmem:[%s234 + $0x60] sm:$0xff] %v3712
        %3729 = vst [vmem:[%s234 + $0x68] sm:$0xff] %v3713
        %3730 = vst [vmem:[%s234 + $0x70] sm:$0xff] %v3714
        %3731 = vst [vmem:[%s234 + $0x78] sm:$0xff] %v3715
        %s3732 = sand.u32 %s119, 1
        %s3733 = scalar_lea.sflag [#allocation4], %s3732
        %s3734 = sand.u32 %s119, 1
        %s3735 = smul.addr %s3734, 128
        %s3736 = scalar_lea.vmem [#allocation7], %s3735
        // Predicated region
        $region45: #{tpu_custom_call.1} parent=35 // pred_check
          %p3737 = pneg %p129
        $region46: #{tpu_custom_call.1} parent=35 // pred_check_branch
          %3739 = sbr.rel (%p3737) target = $region48
        $region47: #{tpu_custom_call.1} parent=35 // pred_region
          %3741 = vsyncadd %s3733, 0
          %s3742 = smul.addr %s22, 16
          %s3743 = smul.addr %s3742, 8
          %s3744 = scalar_lea.hbm %s4, %s3743
          %s3745 = sshll.u32 %s3736, 4
          %s3746 = int_to_ptr.vmem [resolvable:$true] %s3745
          %s3747 = sshll.u32 %s3744, 4
          %s3748 = int_to_ptr.hbm [resolvable:$true] %s3747
          %3753 = dma.vmem_to_hbm [thread:$0]  %s3746, 2048, %s3748, %s3733, 128, 128, 8
        $region48: #{tpu_custom_call.1} parent=35 // pred_fallthru
          _
      $region36: #{tpu_custom_call.1} parent=5 // pred_fallthru
        _
      %p3754 = scmp.le.s32.totalorder 2, %s17
      // Predicated region
      $region49: #{tpu_custom_call.1} parent=5 // pred_check
        %p3755 = pneg %p3754
      $region50: #{tpu_custom_call.1} parent=5 // pred_check_branch
        %3757 = sbr.rel (%p3755) target = $region52
      $region51: #{tpu_custom_call.1} parent=5 // pred_region
        %s3758 = ssub.s32 %s17, 2
        // Predicated region
        $region53: #{tpu_custom_call.1} parent=51 // pred_check
          %p3759 = pneg %p135
        $region54: #{tpu_custom_call.1} parent=51 // pred_check_branch
          %3761 = sbr.rel (%p3759) target = $region56
        $region55: #{tpu_custom_call.1} parent=51 // pred_region
          %s3762 = sand.u32 %s120, 1
          %s3763 = scalar_lea.sflag [#allocation4], %s3762
          %s3764 = sand.u32 %s120, 1
          %s3765 = smul.addr %s3764, 128
          %s3766 = scalar_lea.vmem [#allocation7], %s3765
          %3768 = dma.done %s3763, 2048
        $region56: #{tpu_custom_call.1} parent=51 // pred_fallthru
          _
      $region52: #{tpu_custom_call.1} parent=5 // pred_fallthru
        _
    $region6: #{tpu_custom_call.1} parent=1 // loop_footer
      %s21 = sadd.s32 1, %s17
    $region7: #{tpu_custom_call.1} parent=1 // loop_footer_branch
      %16 = sbr.rel target = $region3
    $region8: #{tpu_custom_call.1} parent=1 // loop_exit
      _
    %3769 = vsyncpa [#allocation3], 1
    %s3770 = scalar_lea.sflag [#allocation3], 1
    %3771 = vsyncpa %s3770, 1
    %3772 = vsyncpa [#allocation6], 1
    %3773 = vsyncpa [#allocation4], 1
    %s3774 = scalar_lea.sflag [#allocation4], 1
    %3775 = vsyncpa %s3774, 1

</llo_original>
